<compile_context>
chip_gen: v7x
topology: tpu7x:2x2x1
jax: 0.10.0
libtpu: 0.0.40
codegen_flags: <defaults>
</compile_context>

<pallas_src>
import numpy as np

import jax
import jax.numpy as jnp
from jax.experimental import pallas as pl
from jax.experimental.pallas import tpu as pltpu


LANE = 128
# Actual per-step working set (blocks + scratch, incl. internal lane padding)
# is ~2 MiB; leave generous headroom.  (item 9)
_VMEM_LIMIT = 8 * 1024 * 1024


def _round_up(x, m):
    return (x + m - 1) // m * m


# --------------------------------------------------------------------------
# Fused kernel: conv1+ReLU+pool1 -> conv2+ReLU+pool2 -> fc1/fc2/fc3
# --------------------------------------------------------------------------

def fused_vgg_kernel(slab1_ref, w1_ref, b1_ref, w2_ref, b2_ref,
                     wfc1_ref, bfc1_ref, wfc2_ref, bfc2_ref, wfc3_ref, bfc3_ref,
                     ms_ref, os_ref, cs_ref, logits_ref,
                     pad2_ref, slab2_ref, p2_ref, flat_ref):
    """One batch image per grid step; everything stays VMEM-resident.

    slab1_ref : (H*W, K1p)      bf16 stage-1 im2col, K1 = 9*Cin padded to 128
    w1_ref    : (K1p, C1) bf16  b1_ref: (1, C1) f32
    w2_ref    : (9*C1, C2) f32  b2_ref: (1, C2) f32
    wfc*_ref  : fc weights (in, out) f32 (fc1 rows pre-permuted, fc3 cols padded)
    ms_ref    : (1, H, W, C1)   conv1+ReLU map
    os_ref    : (1, Ho, Wo, C1) pool1 map
    cs_ref    : (1, Ho, Wo, C2) conv2+ReLU map
    logits_ref: (1, 1, Np)      classifier output (padded to 128 lanes)
    """
    _, H, W, C1 = ms_ref.shape
    _, Ho, Wo, C2 = cs_ref.shape
    Hq, Wq = Ho // 2, Wo // 2

    # ---- stage 1: 3x3 conv as one lane-dense im2col dot (bf16 x bf16 -> f32)
    a1 = jnp.dot(slab1_ref[...], w1_ref[...],
                 preferred_element_type=jnp.float32)            # (H*W, C1)
    a1 = jnp.maximum(a1 + b1_ref[...], 0.0)
    ms_ref[...] = a1.reshape(1, H, W, C1)

    # ---- pool1: single tile-friendly reshape, sublane max then leading max
    v5 = a1.reshape(Ho, 2, Wo, 2, C1)
    p1 = jnp.max(jnp.max(v5, axis=3), axis=1)                   # (Ho, Wo, C1)
    os_ref[...] = p1.reshape(1, Ho, Wo, C1)

    # ---- stage 2: in-kernel im2col of the VMEM-resident pool1 -------------
    # zero-padded SAME border via a scratch buffer; 9 shifted windows are
    # written into a (Ho, Wo, 9*C1) slab, then a single MXU dot.
    pad2_ref[...] = jnp.zeros_like(pad2_ref)
    pad2_ref[pl.ds(1, Ho), pl.ds(1, Wo), :] = p1
    for dy in range(3):
        for dx in range(3):
            t = dy * 3 + dx
            slab2_ref[:, :, pl.ds(t * C1, C1)] = (
                pad2_ref[pl.ds(dy, Ho), pl.ds(dx, Wo), :])
    slab2 = slab2_ref[...].reshape(Ho * Wo, 9 * C1)             # (64, 144)
    a2 = jnp.dot(slab2, w2_ref[...],
                 preferred_element_type=jnp.float32)            # (Ho*Wo, C2)
    a2 = jnp.maximum(a2 + b2_ref[...], 0.0)
    cs_ref[...] = a2.reshape(1, Ho, Wo, C2)

    # ---- pool2 (kept in VMEM, feeds the classifier directly) --------------
    u5 = a2.reshape(Hq, 2, Wq, 2, C2)
    p2 = jnp.max(jnp.max(u5, axis=3), axis=1)                   # (Hq, Wq, C2)
    p2_ref[...] = p2.reshape(Hq * Wq, C2)

    # flatten pool2 in (h, w, c) order into a single 512-lane row; fc1's rows
    # were pre-permuted at trace time so this equals PyTorch's NCHW flatten.
    for r in range(Hq * Wq):
        flat_ref[:, pl.ds(r * C2, C2)] = p2_ref[pl.ds(r, 1), :]

    # ---- classifier: Linear+ReLU(+Dropout=id) x2, Linear ------------------
    h = jnp.dot(flat_ref[...], wfc1_ref[...],
                preferred_element_type=jnp.float32)
    h = jnp.maximum(h + bfc1_ref[...], 0.0)
    h = jnp.dot(h, wfc2_ref[...], preferred_element_type=jnp.float32)
    h = jnp.maximum(h + bfc2_ref[...], 0.0)
    y = jnp.dot(h, wfc3_ref[...],
                preferred_element_type=jnp.float32) + bfc3_ref[...]
    logits_ref[...] = y.reshape(1, 1, y.shape[-1])


# --------------------------------------------------------------------------
# Wrapper
# --------------------------------------------------------------------------

def _im2col_3x3(x_nhwc):
    """(B, H, W, C) -> (B, H*W, 9*C) 'SAME' 3x3 patches, (dy, dx, c) order."""
    B, H, W, C = x_nhwc.shape
    xp = jnp.pad(x_nhwc, ((0, 0), (1, 1), (1, 1), (0, 0)))
    cols = [xp[:, dy:dy + H, dx:dx + W, :]
            for dy in range(3) for dx in range(3)]
    return jnp.concatenate(cols, axis=-1).reshape(B, H * W, 9 * C)


def vgg_forward(params, x_nchw):
    B, Cin, H, W = x_nchw.shape
    C1 = params["b_conv1"].shape[0]
    C2 = params["b_conv2"].shape[0]
    hidden = params["b_fc1"].shape[0]
    ncls = params["b_fc3"].shape[0]
    Ho, Wo = H // 2, W // 2
    Hq, Wq = H // 4, W // 4
    K1 = 9 * Cin
    K1p = _round_up(K1, LANE)
    K2 = 9 * C1
    Np = _round_up(ncls, LANE)

    # stage-1 im2col (wrapper-side, on the raw input), K padded to 128, bf16.
    x = jnp.transpose(x_nchw, (0, 2, 3, 1)).astype(jnp.float32)   # NCHW->NHWC
    slab1 = _im2col_3x3(x)
    slab1 = jnp.pad(slab1, ((0, 0), (0, 0), (0, K1p - K1)))
    slab1 = slab1.reshape(B * H * W, K1p).astype(jnp.bfloat16)

    w1 = jnp.pad(params["w_conv1"].reshape(K1, C1),
                 ((0, K1p - K1), (0, 0))).astype(jnp.bfloat16)
    b1 = params["b_conv1"].reshape(1, C1)
    w2 = params["w_conv2"].reshape(K2, C2)
    b2 = params["b_conv2"].reshape(1, C2)

    # Fold PyTorch's NCHW flatten into fc1's rows: kernel flat order is
    # (h, w, c); torch order is (c, h, w).  (item 6; compile-time-cheap)
    perm = np.array([c * (Hq * Wq) + i * Wq + j
                     for i in range(Hq) for j in range(Wq) for c in range(C2)],
                    dtype=np.int32)
    wfc1 = params["w_fc1"][perm, :]
    bfc1 = params["b_fc1"].reshape(1, hidden)
    wfc2 = params["w_fc2"]
    bfc2 = params["b_fc2"].reshape(1, hidden)
    wfc3 = jnp.pad(params["w_fc3"], ((0, 0), (0, Np - ncls)))
    bfc3 = jnp.pad(params["b_fc3"], (0, Np - ncls)).reshape(1, Np)

    ms, os_, cs, logits = pl.pallas_call(
        fused_vgg_kernel,
        out_shape=(jax.ShapeDtypeStruct((B, H, W, C1), jnp.float32),
                   jax.ShapeDtypeStruct((B, Ho, Wo, C1), jnp.float32),
                   jax.ShapeDtypeStruct((B, Ho, Wo, C2), jnp.float32),
                   jax.ShapeDtypeStruct((B, 1, Np), jnp.float32)),
        grid_spec=pltpu.PrefetchScalarGridSpec(
            num_scalar_prefetch=0,
            grid=(B,),
            in_specs=[
                pl.BlockSpec((H * W, K1p), lambda b: (b, 0)),
                pl.BlockSpec((K1p, C1), lambda b: (0, 0)),
                pl.BlockSpec((1, C1), lambda b: (0, 0)),
                pl.BlockSpec((K2, C2), lambda b: (0, 0)),
                pl.BlockSpec((1, C2), lambda b: (0, 0)),
                pl.BlockSpec((Hq * Wq * C2, hidden), lambda b: (0, 0)),
                pl.BlockSpec((1, hidden), lambda b: (0, 0)),
                pl.BlockSpec((hidden, hidden), lambda b: (0, 0)),
                pl.BlockSpec((1, hidden), lambda b: (0, 0)),
                pl.BlockSpec((hidden, Np), lambda b: (0, 0)),
                pl.BlockSpec((1, Np), lambda b: (0, 0)),
            ],
            out_specs=[
                pl.BlockSpec((1, H, W, C1), lambda b: (b, 0, 0, 0)),
                pl.BlockSpec((1, Ho, Wo, C1), lambda b: (b, 0, 0, 0)),
                pl.BlockSpec((1, Ho, Wo, C2), lambda b: (b, 0, 0, 0)),
                pl.BlockSpec((1, 1, Np), lambda b: (b, 0, 0)),
            ],
            scratch_shapes=[
                pltpu.VMEM((Ho + 2, Wo + 2, C1), jnp.float32),   # padded pool1
                pltpu.VMEM((Ho, Wo, K2), jnp.float32),           # stage-2 slab
                pltpu.VMEM((Hq * Wq, C2), jnp.float32),          # pool2
                pltpu.VMEM((1, Hq * Wq * C2), jnp.float32),      # fc input
            ]),
        compiler_params=pltpu.CompilerParams(
            dimension_semantics=("parallel",),   # 2 steps -> both v7x TCs
            vmem_limit_bytes=_VMEM_LIMIT),
    )(slab1, w1, b1, w2, b2, wfc1, bfc1, wfc2, bfc2, wfc3, bfc3)

    logits = logits.reshape(B, Np)[:, :ncls]
    # Intermediate feature maps returned in NCHW to mirror the PyTorch module.
    ms_nchw = jnp.transpose(ms, (0, 3, 1, 2))
    os_nchw = jnp.transpose(os_, (0, 3, 1, 2))
    cs_nchw = jnp.transpose(cs, (0, 3, 1, 2))
    return logits, ms_nchw, os_nchw, cs_nchw


# --------------------------------------------------------------------------
# Parameter construction (mirrors VGG._initialize_weights)
# --------------------------------------------------------------------------

def init_params(key, cin=3, c1=16, c2=32, hidden=128, num_classes=10,
                feat_hw=4):
    ks = jax.random.split(key, 5)
    # Conv2d: normal(0, sqrt(2 / (k*k*out_channels))), bias = 0
    w_conv1 = jax.random.normal(ks[0], (3, 3, cin, c1), jnp.float32) * (2.0 / (9 * c1)) ** 0.5
    b_conv1 = jnp.zeros((c1,), jnp.float32)
    w_conv2 = jax.random.normal(ks[1], (3, 3, c1, c2), jnp.float32) * (2.0 / (9 * c2)) ** 0.5
    b_conv2 = jnp.zeros((c2,), jnp.float32)
    # Linear: normal(0, 0.01), bias = 0.  Stored as (in, out) = torch W.T,
    # with fc1 rows indexed in torch's NCHW-flatten order.
    fin = c2 * feat_hw * feat_hw
    w_fc1 = jax.random.normal(ks[2], (fin, hidden), jnp.float32) * 0.01
    b_fc1 = jnp.zeros((hidden,), jnp.float32)
    w_fc2 = jax.random.normal(ks[3], (hidden, hidden), jnp.float32) * 0.01
    b_fc2 = jnp.zeros((hidden,), jnp.float32)
    w_fc3 = jax.random.normal(ks[4], (hidden, num_classes), jnp.float32) * 0.01
    b_fc3 = jnp.zeros((num_classes,), jnp.float32)
    return dict(w_conv1=w_conv1, b_conv1=b_conv1,
                w_conv2=w_conv2, b_conv2=b_conv2,
                w_fc1=w_fc1, b_fc1=b_fc1,
                w_fc2=w_fc2, b_fc2=b_fc2,
                w_fc3=w_fc3, b_fc3=b_fc3)


# --------------------------------------------------------------------------
# Pure-JAX reference (f32) for a numerical sanity check
# --------------------------------------------------------------------------

def _reference_forward(params, x_nchw):
    x = jnp.transpose(x_nchw, (0, 2, 3, 1))

    def conv(z, w, b):
        y = jax.lax.conv_general_dilated(
            z, w, (1, 1), "SAME",
            dimension_numbers=("NHWC", "HWIO", "NHWC"))
        return jax.nn.relu(y + b)

    def pool(z):
        return jax.lax.reduce_window(z, -jnp.inf, jax.lax.max,
                                     (1, 2, 2, 1), (1, 2, 2, 1), "VALID")

    a1 = conv(x, params["w_conv1"], params["b_conv1"])
    p1 = pool(a1)
    a2 = conv(p1, params["w_conv2"], params["b_conv2"])
    p2 = pool(a2)
    flat = jnp.transpose(p2, (0, 3, 1, 2)).reshape(x.shape[0], -1)  # NCHW flatten
    h = jax.nn.relu(flat @ params["w_fc1"] + params["b_fc1"])
    h = jax.nn.relu(h @ params["w_fc2"] + params["b_fc2"])
    logits = h @ params["w_fc3"] + params["b_fc3"]
    return (logits,
            jnp.transpose(a1, (0, 3, 1, 2)),
            jnp.transpose(p1, (0, 3, 1, 2)),
            jnp.transpose(a2, (0, 3, 1, 2)))


def _rel_err(a, b):
    return float(jnp.linalg.norm(a - b) / (jnp.linalg.norm(b) + 1e-12))


if __name__ == "__main__":
    key = jax.random.PRNGKey(0)
    k_param, k_input = jax.random.split(key)

    B, C, H, W = 2, 3, 16, 16            # small shapes consistent with the module
    x = jax.random.normal(k_input, (B, C, H, W), jnp.float32)
    params = init_params(k_param, cin=C, c1=16, c2=32, hidden=128,
                         num_classes=10, feat_hw=H // 4)

    logits, ms, os_, cs = jax.jit(vgg_forward)(params, x)
    jax.block_until_ready((logits, ms, os_, cs))

    assert logits.shape == (B, 10)
    assert ms.shape == (B, 16, 16, 16)
    assert os_.shape == (B, 16, 8, 8)
    assert cs.shape == (B, 32, 8, 8)

    # Numerical sanity check vs. f32 reference (kernel uses bf16 on stage 1).
    r_logits, r_ms, r_os, r_cs = jax.jit(_reference_forward)(params, x)
    jax.block_until_ready((r_logits, r_ms, r_os, r_cs))
    assert _rel_err(ms, r_ms) < 5e-2
    assert _rel_err(os_, r_os) < 5e-2
    assert _rel_err(cs, r_cs) < 5e-2
    assert _rel_err(logits, r_logits) < 5e-2

    print("KERNEL_OK")
</pallas_src>

<mosaic_0001>
module attributes {stable_mosaic.version = 11 : i64} {
  func.func @fused_vgg_kernel(%arg0: i32, %arg1: memref<256x128xbf16, #tpu.memory_space<vmem>>, %arg2: memref<128x16xbf16, #tpu.memory_space<vmem>>, %arg3: memref<1x16xf32, #tpu.memory_space<vmem>>, %arg4: memref<144x32xf32, #tpu.memory_space<vmem>>, %arg5: memref<1x32xf32, #tpu.memory_space<vmem>>, %arg6: memref<512x128xf32, #tpu.memory_space<vmem>>, %arg7: memref<1x128xf32, #tpu.memory_space<vmem>>, %arg8: memref<128x128xf32, #tpu.memory_space<vmem>>, %arg9: memref<1x128xf32, #tpu.memory_space<vmem>>, %arg10: memref<128x128xf32, #tpu.memory_space<vmem>>, %arg11: memref<1x128xf32, #tpu.memory_space<vmem>>, %arg12: memref<1x16x16x16xf32, #tpu.memory_space<vmem>>, %arg13: memref<1x8x8x16xf32, #tpu.memory_space<vmem>>, %arg14: memref<1x8x8x32xf32, #tpu.memory_space<vmem>>, %arg15: memref<1x1x128xf32, #tpu.memory_space<vmem>>, %arg16: memref<10x10x16xf32, #tpu.memory_space<vmem>>, %arg17: memref<8x8x144xf32, #tpu.memory_space<vmem>>, %arg18: memref<16x32xf32, #tpu.memory_space<vmem>>, %arg19: memref<1x512xf32, #tpu.memory_space<vmem>>) attributes {dimension_semantics = [#tpu.dimension_semantics<parallel>], iteration_bounds = array<i64: 2>, scalar_prefetch = 0 : i64, scratch_operands = 4 : i64, tpu.core_type = #tpu.core_type<tc>, window_params = [{transform_indices = @transform_0, window_bounds = array<i64: 256, 128>}, {pipeline_mode = #tpu.pipeline_mode<synchronous>, transform_indices = @transform_1, window_bounds = array<i64: 128, 16>}, {pipeline_mode = #tpu.pipeline_mode<synchronous>, transform_indices = @transform_2, window_bounds = array<i64: 1, 16>}, {pipeline_mode = #tpu.pipeline_mode<synchronous>, transform_indices = @transform_3, window_bounds = array<i64: 144, 32>}, {pipeline_mode = #tpu.pipeline_mode<synchronous>, transform_indices = @transform_4, window_bounds = array<i64: 1, 32>}, {pipeline_mode = #tpu.pipeline_mode<synchronous>, transform_indices = @transform_5, window_bounds = array<i64: 512, 128>}, {pipeline_mode = #tpu.pipeline_mode<synchronous>, transform_indices = @transform_6, window_bounds = array<i64: 1, 128>}, {pipeline_mode = #tpu.pipeline_mode<synchronous>, transform_indices = @transform_7, window_bounds = array<i64: 128, 128>}, {pipeline_mode = #tpu.pipeline_mode<synchronous>, transform_indices = @transform_8, window_bounds = array<i64: 1, 128>}, {pipeline_mode = #tpu.pipeline_mode<synchronous>, transform_indices = @transform_9, window_bounds = array<i64: 128, 128>}, {pipeline_mode = #tpu.pipeline_mode<synchronous>, transform_indices = @transform_10, window_bounds = array<i64: 1, 128>}, {transform_indices = @transform_11, window_bounds = array<i64: 1, 16, 16, 16>}, {transform_indices = @transform_12, window_bounds = array<i64: 1, 8, 8, 16>}, {transform_indices = @transform_13, window_bounds = array<i64: 1, 8, 8, 32>}, {transform_indices = @transform_14, window_bounds = array<i64: 1, 1, 128>}]} {
    %c0 = arith.constant 0 : index
    %c0_0 = arith.constant 0 : index
    %0 = vector.load %arg1[%c0, %c0_0] : memref<256x128xbf16, #tpu.memory_space<vmem>>, vector<256x128xbf16>
    %c0_1 = arith.constant 0 : index
    %c0_2 = arith.constant 0 : index
    %1 = vector.load %arg2[%c0_1, %c0_2] : memref<128x16xbf16, #tpu.memory_space<vmem>>, vector<128x16xbf16>
    %cst = arith.constant dense<0.000000e+00> : vector<256x16xf32>
    %2 = tpu.matmul %0, %1, %cst {dimension_numbers = #tpu.dot_dimension_numbers<[1], [0], [0], [1], [0, 0, 1, 1], [], []>} : vector<256x128xbf16>, vector<128x16xbf16>, vector<256x16xf32> -> vector<256x16xf32>
    %c0_3 = arith.constant 0 : index
    %c0_4 = arith.constant 0 : index
    %3 = vector.load %arg3[%c0_3, %c0_4] : memref<1x16xf32, #tpu.memory_space<vmem>>, vector<1x16xf32>
    %4 = vector.broadcast %3 : vector<1x16xf32> to vector<256x16xf32>
    %5 = arith.addf %2, %4 : vector<256x16xf32>
    %cst_5 = arith.constant 0.000000e+00 : f32
    %6 = vector.broadcast %cst_5 : f32 to vector<256x16xf32>
    %7 = arith.maximumf %5, %6 : vector<256x16xf32>
    %8 = vector.shape_cast %7 : vector<256x16xf32> to vector<1x16x16x16xf32>
    %c0_6 = arith.constant 0 : index
    %c0_7 = arith.constant 0 : index
    %c0_8 = arith.constant 0 : index
    %c0_9 = arith.constant 0 : index
    %9 = vector.load %arg12[%c0_6, %c0_7, %c0_8, %c0_9] : memref<1x16x16x16xf32, #tpu.memory_space<vmem>>, vector<1x16x16x16xf32>
    tpu.vector_store %arg12[%c0_6, %c0_7, %c0_8, %c0_9], %8 {strides = array<i32>} : memref<1x16x16x16xf32, #tpu.memory_space<vmem>>, vector<1x16x16x16xf32>,
    %10 = vector.shape_cast %7 : vector<256x16xf32> to vector<8x2x8x2x16xf32>
    %cst_10 = arith.constant dense<0xFF800000> : vector<8x2x8x16xf32>
    %11 = vector.multi_reduction <maximumf>, %10, %cst_10 [3] : vector<8x2x8x2x16xf32> to vector<8x2x8x16xf32>
    %cst_11 = arith.constant dense<0xFF800000> : vector<8x8x16xf32>
    %12 = vector.multi_reduction <maximumf>, %11, %cst_11 [1] : vector<8x2x8x16xf32> to vector<8x8x16xf32>
    %13 = vector.shape_cast %12 : vector<8x8x16xf32> to vector<1x8x8x16xf32>
    %c0_12 = arith.constant 0 : index
    %c0_13 = arith.constant 0 : index
    %c0_14 = arith.constant 0 : index
    %c0_15 = arith.constant 0 : index
    %14 = vector.load %arg13[%c0_12, %c0_13, %c0_14, %c0_15] : memref<1x8x8x16xf32, #tpu.memory_space<vmem>>, vector<1x8x8x16xf32>
    tpu.vector_store %arg13[%c0_12, %c0_13, %c0_14, %c0_15], %13 {strides = array<i32>} : memref<1x8x8x16xf32, #tpu.memory_space<vmem>>, vector<1x8x8x16xf32>,
    %cst_16 = arith.constant 0.000000e+00 : f32
    %15 = vector.broadcast %cst_16 : f32 to vector<10x10x16xf32>
    %c0_17 = arith.constant 0 : index
    %c0_18 = arith.constant 0 : index
    %c0_19 = arith.constant 0 : index
    %16 = vector.load %arg16[%c0_17, %c0_18, %c0_19] : memref<10x10x16xf32, #tpu.memory_space<vmem>>, vector<10x10x16xf32>
    tpu.vector_store %arg16[%c0_17, %c0_18, %c0_19], %15 {strides = array<i32>} : memref<10x10x16xf32, #tpu.memory_space<vmem>>, vector<10x10x16xf32>,
    %c1 = arith.constant 1 : index
    %c1_20 = arith.constant 1 : index
    %c0_21 = arith.constant 0 : index
    %17 = vector.load %arg16[%c1, %c1_20, %c0_21] : memref<10x10x16xf32, #tpu.memory_space<vmem>>, vector<8x8x16xf32>
    tpu.vector_store %arg16[%c1, %c1_20, %c0_21], %12 {strides = array<i32>} : memref<10x10x16xf32, #tpu.memory_space<vmem>>, vector<8x8x16xf32>,
    %c0_22 = arith.constant 0 : index
    %c0_23 = arith.constant 0 : index
    %c0_24 = arith.constant 0 : index
    %18 = vector.load %arg16[%c0_22, %c0_23, %c0_24] : memref<10x10x16xf32, #tpu.memory_space<vmem>>, vector<8x8x16xf32>
    %c0_25 = arith.constant 0 : index
    %c0_26 = arith.constant 0 : index
    %c0_27 = arith.constant 0 : index
    %19 = vector.load %arg17[%c0_25, %c0_26, %c0_27] : memref<8x8x144xf32, #tpu.memory_space<vmem>>, vector<8x8x16xf32>
    tpu.vector_store %arg17[%c0_25, %c0_26, %c0_27], %18 {strides = array<i32>} : memref<8x8x144xf32, #tpu.memory_space<vmem>>, vector<8x8x16xf32>,
    %c0_28 = arith.constant 0 : index
    %c1_29 = arith.constant 1 : index
    %c0_30 = arith.constant 0 : index
    %20 = vector.load %arg16[%c0_28, %c1_29, %c0_30] : memref<10x10x16xf32, #tpu.memory_space<vmem>>, vector<8x8x16xf32>
    %c0_31 = arith.constant 0 : index
    %c0_32 = arith.constant 0 : index
    %c16 = arith.constant 16 : index
    %21 = vector.load %arg17[%c0_31, %c0_32, %c16] : memref<8x8x144xf32, #tpu.memory_space<vmem>>, vector<8x8x16xf32>
    tpu.vector_store %arg17[%c0_31, %c0_32, %c16], %20 {strides = array<i32>} : memref<8x8x144xf32, #tpu.memory_space<vmem>>, vector<8x8x16xf32>,
    %c0_33 = arith.constant 0 : index
    %c2 = arith.constant 2 : index
    %c0_34 = arith.constant 0 : index
    %22 = vector.load %arg16[%c0_33, %c2, %c0_34] : memref<10x10x16xf32, #tpu.memory_space<vmem>>, vector<8x8x16xf32>
    %c0_35 = arith.constant 0 : index
    %c0_36 = arith.constant 0 : index
    %c32 = arith.constant 32 : index
    %23 = vector.load %arg17[%c0_35, %c0_36, %c32] : memref<8x8x144xf32, #tpu.memory_space<vmem>>, vector<8x8x16xf32>
    tpu.vector_store %arg17[%c0_35, %c0_36, %c32], %22 {strides = array<i32>} : memref<8x8x144xf32, #tpu.memory_space<vmem>>, vector<8x8x16xf32>,
    %c1_37 = arith.constant 1 : index
    %c0_38 = arith.constant 0 : index
    %c0_39 = arith.constant 0 : index
    %24 = vector.load %arg16[%c1_37, %c0_38, %c0_39] : memref<10x10x16xf32, #tpu.memory_space<vmem>>, vector<8x8x16xf32>
    %c0_40 = arith.constant 0 : index
    %c0_41 = arith.constant 0 : index
    %c48 = arith.constant 48 : index
    %25 = vector.load %arg17[%c0_40, %c0_41, %c48] : memref<8x8x144xf32, #tpu.memory_space<vmem>>, vector<8x8x16xf32>
    tpu.vector_store %arg17[%c0_40, %c0_41, %c48], %24 {strides = array<i32>} : memref<8x8x144xf32, #tpu.memory_space<vmem>>, vector<8x8x16xf32>,
    %c1_42 = arith.constant 1 : index
    %c1_43 = arith.constant 1 : index
    %c0_44 = arith.constant 0 : index
    %26 = vector.load %arg16[%c1_42, %c1_43, %c0_44] : memref<10x10x16xf32, #tpu.memory_space<vmem>>, vector<8x8x16xf32>
    %c0_45 = arith.constant 0 : index
    %c0_46 = arith.constant 0 : index
    %c64 = arith.constant 64 : index
    %27 = vector.load %arg17[%c0_45, %c0_46, %c64] : memref<8x8x144xf32, #tpu.memory_space<vmem>>, vector<8x8x16xf32>
    tpu.vector_store %arg17[%c0_45, %c0_46, %c64], %26 {strides = array<i32>} : memref<8x8x144xf32, #tpu.memory_space<vmem>>, vector<8x8x16xf32>,
    %c1_47 = arith.constant 1 : index
    %c2_48 = arith.constant 2 : index
    %c0_49 = arith.constant 0 : index
    %28 = vector.load %arg16[%c1_47, %c2_48, %c0_49] : memref<10x10x16xf32, #tpu.memory_space<vmem>>, vector<8x8x16xf32>
    %c0_50 = arith.constant 0 : index
    %c0_51 = arith.constant 0 : index
    %c80 = arith.constant 80 : index
    %29 = vector.load %arg17[%c0_50, %c0_51, %c80] : memref<8x8x144xf32, #tpu.memory_space<vmem>>, vector<8x8x16xf32>
    tpu.vector_store %arg17[%c0_50, %c0_51, %c80], %28 {strides = array<i32>} : memref<8x8x144xf32, #tpu.memory_space<vmem>>, vector<8x8x16xf32>,
    %c2_52 = arith.constant 2 : index
    %c0_53 = arith.constant 0 : index
    %c0_54 = arith.constant 0 : index
    %30 = vector.load %arg16[%c2_52, %c0_53, %c0_54] : memref<10x10x16xf32, #tpu.memory_space<vmem>>, vector<8x8x16xf32>
    %c0_55 = arith.constant 0 : index
    %c0_56 = arith.constant 0 : index
    %c96 = arith.constant 96 : index
    %31 = vector.load %arg17[%c0_55, %c0_56, %c96] : memref<8x8x144xf32, #tpu.memory_space<vmem>>, vector<8x8x16xf32>
    tpu.vector_store %arg17[%c0_55, %c0_56, %c96], %30 {strides = array<i32>} : memref<8x8x144xf32, #tpu.memory_space<vmem>>, vector<8x8x16xf32>,
    %c2_57 = arith.constant 2 : index
    %c1_58 = arith.constant 1 : index
    %c0_59 = arith.constant 0 : index
    %32 = vector.load %arg16[%c2_57, %c1_58, %c0_59] : memref<10x10x16xf32, #tpu.memory_space<vmem>>, vector<8x8x16xf32>
    %c0_60 = arith.constant 0 : index
    %c0_61 = arith.constant 0 : index
    %c112 = arith.constant 112 : index
    %33 = vector.load %arg17[%c0_60, %c0_61, %c112] : memref<8x8x144xf32, #tpu.memory_space<vmem>>, vector<8x8x16xf32>
    tpu.vector_store %arg17[%c0_60, %c0_61, %c112], %32 {strides = array<i32>} : memref<8x8x144xf32, #tpu.memory_space<vmem>>, vector<8x8x16xf32>,
    %c2_62 = arith.constant 2 : index
    %c2_63 = arith.constant 2 : index
    %c0_64 = arith.constant 0 : index
    %34 = vector.load %arg16[%c2_62, %c2_63, %c0_64] : memref<10x10x16xf32, #tpu.memory_space<vmem>>, vector<8x8x16xf32>
    %c0_65 = arith.constant 0 : index
    %c0_66 = arith.constant 0 : index
    %c128 = arith.constant 128 : index
    %35 = vector.load %arg17[%c0_65, %c0_66, %c128] : memref<8x8x144xf32, #tpu.memory_space<vmem>>, vector<8x8x16xf32>
    tpu.vector_store %arg17[%c0_65, %c0_66, %c128], %34 {strides = array<i32>} : memref<8x8x144xf32, #tpu.memory_space<vmem>>, vector<8x8x16xf32>,
    %c0_67 = arith.constant 0 : index
    %c0_68 = arith.constant 0 : index
    %c0_69 = arith.constant 0 : index
    %36 = vector.load %arg17[%c0_67, %c0_68, %c0_69] : memref<8x8x144xf32, #tpu.memory_space<vmem>>, vector<8x8x144xf32>
    %37 = vector.shape_cast %36 : vector<8x8x144xf32> to vector<64x144xf32>
    %c0_70 = arith.constant 0 : index
    %c0_71 = arith.constant 0 : index
    %38 = vector.load %arg4[%c0_70, %c0_71] : memref<144x32xf32, #tpu.memory_space<vmem>>, vector<144x32xf32>
    %cst_72 = arith.constant dense<0.000000e+00> : vector<64x32xf32>
    %39 = tpu.matmul %37, %38, %cst_72 {dimension_numbers = #tpu.dot_dimension_numbers<[1], [0], [0], [1], [0, 0, 1, 1], [], []>} : vector<64x144xf32>, vector<144x32xf32>, vector<64x32xf32> -> vector<64x32xf32>
    %c0_73 = arith.constant 0 : index
    %c0_74 = arith.constant 0 : index
    %40 = vector.load %arg5[%c0_73, %c0_74] : memref<1x32xf32, #tpu.memory_space<vmem>>, vector<1x32xf32>
    %41 = vector.broadcast %40 : vector<1x32xf32> to vector<64x32xf32>
    %42 = arith.addf %39, %41 : vector<64x32xf32>
    %cst_75 = arith.constant 0.000000e+00 : f32
    %43 = vector.broadcast %cst_75 : f32 to vector<64x32xf32>
    %44 = arith.maximumf %42, %43 : vector<64x32xf32>
    %45 = vector.shape_cast %44 : vector<64x32xf32> to vector<1x8x8x32xf32>
    %c0_76 = arith.constant 0 : index
    %c0_77 = arith.constant 0 : index
    %c0_78 = arith.constant 0 : index
    %c0_79 = arith.constant 0 : index
    %46 = vector.load %arg14[%c0_76, %c0_77, %c0_78, %c0_79] : memref<1x8x8x32xf32, #tpu.memory_space<vmem>>, vector<1x8x8x32xf32>
    tpu.vector_store %arg14[%c0_76, %c0_77, %c0_78, %c0_79], %45 {strides = array<i32>} : memref<1x8x8x32xf32, #tpu.memory_space<vmem>>, vector<1x8x8x32xf32>,
    %47 = vector.shape_cast %44 : vector<64x32xf32> to vector<4x2x4x2x32xf32>
    %cst_80 = arith.constant dense<0xFF800000> : vector<4x2x4x32xf32>
    %48 = vector.multi_reduction <maximumf>, %47, %cst_80 [3] : vector<4x2x4x2x32xf32> to vector<4x2x4x32xf32>
    %cst_81 = arith.constant dense<0xFF800000> : vector<4x4x32xf32>
    %49 = vector.multi_reduction <maximumf>, %48, %cst_81 [1] : vector<4x2x4x32xf32> to vector<4x4x32xf32>
    %50 = vector.shape_cast %49 : vector<4x4x32xf32> to vector<16x32xf32>
    %c0_82 = arith.constant 0 : index
    %c0_83 = arith.constant 0 : index
    %51 = vector.load %arg18[%c0_82, %c0_83] : memref<16x32xf32, #tpu.memory_space<vmem>>, vector<16x32xf32>
    tpu.vector_store %arg18[%c0_82, %c0_83], %50 {strides = array<i32>} : memref<16x32xf32, #tpu.memory_space<vmem>>, vector<16x32xf32>,
    %c0_84 = arith.constant 0 : index
    %c0_85 = arith.constant 0 : index
    %52 = vector.load %arg18[%c0_84, %c0_85] : memref<16x32xf32, #tpu.memory_space<vmem>>, vector<1x32xf32>
    %c0_86 = arith.constant 0 : index
    %c0_87 = arith.constant 0 : index
    %53 = vector.load %arg19[%c0_86, %c0_87] : memref<1x512xf32, #tpu.memory_space<vmem>>, vector<1x32xf32>
    tpu.vector_store %arg19[%c0_86, %c0_87], %52 {strides = array<i32>} : memref<1x512xf32, #tpu.memory_space<vmem>>, vector<1x32xf32>,
    %c1_88 = arith.constant 1 : index
    %c0_89 = arith.constant 0 : index
    %54 = vector.load %arg18[%c1_88, %c0_89] : memref<16x32xf32, #tpu.memory_space<vmem>>, vector<1x32xf32>
    %c0_90 = arith.constant 0 : index
    %c32_91 = arith.constant 32 : index
    %55 = vector.load %arg19[%c0_90, %c32_91] : memref<1x512xf32, #tpu.memory_space<vmem>>, vector<1x32xf32>
    tpu.vector_store %arg19[%c0_90, %c32_91], %54 {strides = array<i32>} : memref<1x512xf32, #tpu.memory_space<vmem>>, vector<1x32xf32>,
    %c2_92 = arith.constant 2 : index
    %c0_93 = arith.constant 0 : index
    %56 = vector.load %arg18[%c2_92, %c0_93] : memref<16x32xf32, #tpu.memory_space<vmem>>, vector<1x32xf32>
    %c0_94 = arith.constant 0 : index
    %c64_95 = arith.constant 64 : index
    %57 = vector.load %arg19[%c0_94, %c64_95] : memref<1x512xf32, #tpu.memory_space<vmem>>, vector<1x32xf32>
    tpu.vector_store %arg19[%c0_94, %c64_95], %56 {strides = array<i32>} : memref<1x512xf32, #tpu.memory_space<vmem>>, vector<1x32xf32>,
    %c3 = arith.constant 3 : index
    %c0_96 = arith.constant 0 : index
    %58 = vector.load %arg18[%c3, %c0_96] : memref<16x32xf32, #tpu.memory_space<vmem>>, vector<1x32xf32>
    %c0_97 = arith.constant 0 : index
    %c96_98 = arith.constant 96 : index
    %59 = vector.load %arg19[%c0_97, %c96_98] : memref<1x512xf32, #tpu.memory_space<vmem>>, vector<1x32xf32>
    tpu.vector_store %arg19[%c0_97, %c96_98], %58 {strides = array<i32>} : memref<1x512xf32, #tpu.memory_space<vmem>>, vector<1x32xf32>,
    %c4 = arith.constant 4 : index
    %c0_99 = arith.constant 0 : index
    %60 = vector.load %arg18[%c4, %c0_99] : memref<16x32xf32, #tpu.memory_space<vmem>>, vector<1x32xf32>
    %c0_100 = arith.constant 0 : index
    %c128_101 = arith.constant 128 : index
    %61 = vector.load %arg19[%c0_100, %c128_101] : memref<1x512xf32, #tpu.memory_space<vmem>>, vector<1x32xf32>
    tpu.vector_store %arg19[%c0_100, %c128_101], %60 {strides = array<i32>} : memref<1x512xf32, #tpu.memory_space<vmem>>, vector<1x32xf32>,
    %c5 = arith.constant 5 : index
    %c0_102 = arith.constant 0 : index
    %62 = vector.load %arg18[%c5, %c0_102] : memref<16x32xf32, #tpu.memory_space<vmem>>, vector<1x32xf32>
    %c0_103 = arith.constant 0 : index
    %c160 = arith.constant 160 : index
    %63 = vector.load %arg19[%c0_103, %c160] : memref<1x512xf32, #tpu.memory_space<vmem>>, vector<1x32xf32>
    tpu.vector_store %arg19[%c0_103, %c160], %62 {strides = array<i32>} : memref<1x512xf32, #tpu.memory_space<vmem>>, vector<1x32xf32>,
    %c6 = arith.constant 6 : index
    %c0_104 = arith.constant 0 : index
    %64 = vector.load %arg18[%c6, %c0_104] : memref<16x32xf32, #tpu.memory_space<vmem>>, vector<1x32xf32>
    %c0_105 = arith.constant 0 : index
    %c192 = arith.constant 192 : index
    %65 = vector.load %arg19[%c0_105, %c192] : memref<1x512xf32, #tpu.memory_space<vmem>>, vector<1x32xf32>
    tpu.vector_store %arg19[%c0_105, %c192], %64 {strides = array<i32>} : memref<1x512xf32, #tpu.memory_space<vmem>>, vector<1x32xf32>,
    %c7 = arith.constant 7 : index
    %c0_106 = arith.constant 0 : index
    %66 = vector.load %arg18[%c7, %c0_106] : memref<16x32xf32, #tpu.memory_space<vmem>>, vector<1x32xf32>
    %c0_107 = arith.constant 0 : index
    %c224 = arith.constant 224 : index
    %67 = vector.load %arg19[%c0_107, %c224] : memref<1x512xf32, #tpu.memory_space<vmem>>, vector<1x32xf32>
    tpu.vector_store %arg19[%c0_107, %c224], %66 {strides = array<i32>} : memref<1x512xf32, #tpu.memory_space<vmem>>, vector<1x32xf32>,
    %c8 = arith.constant 8 : index
    %c0_108 = arith.constant 0 : index
    %68 = vector.load %arg18[%c8, %c0_108] : memref<16x32xf32, #tpu.memory_space<vmem>>, vector<1x32xf32>
    %c0_109 = arith.constant 0 : index
    %c256 = arith.constant 256 : index
    %69 = vector.load %arg19[%c0_109, %c256] : memref<1x512xf32, #tpu.memory_space<vmem>>, vector<1x32xf32>
    tpu.vector_store %arg19[%c0_109, %c256], %68 {strides = array<i32>} : memref<1x512xf32, #tpu.memory_space<vmem>>, vector<1x32xf32>,
    %c9 = arith.constant 9 : index
    %c0_110 = arith.constant 0 : index
    %70 = vector.load %arg18[%c9, %c0_110] : memref<16x32xf32, #tpu.memory_space<vmem>>, vector<1x32xf32>
    %c0_111 = arith.constant 0 : index
    %c288 = arith.constant 288 : index
    %71 = vector.load %arg19[%c0_111, %c288] : memref<1x512xf32, #tpu.memory_space<vmem>>, vector<1x32xf32>
    tpu.vector_store %arg19[%c0_111, %c288], %70 {strides = array<i32>} : memref<1x512xf32, #tpu.memory_space<vmem>>, vector<1x32xf32>,
    %c10 = arith.constant 10 : index
    %c0_112 = arith.constant 0 : index
    %72 = vector.load %arg18[%c10, %c0_112] : memref<16x32xf32, #tpu.memory_space<vmem>>, vector<1x32xf32>
    %c0_113 = arith.constant 0 : index
    %c320 = arith.constant 320 : index
    %73 = vector.load %arg19[%c0_113, %c320] : memref<1x512xf32, #tpu.memory_space<vmem>>, vector<1x32xf32>
    tpu.vector_store %arg19[%c0_113, %c320], %72 {strides = array<i32>} : memref<1x512xf32, #tpu.memory_space<vmem>>, vector<1x32xf32>,
    %c11 = arith.constant 11 : index
    %c0_114 = arith.constant 0 : index
    %74 = vector.load %arg18[%c11, %c0_114] : memref<16x32xf32, #tpu.memory_space<vmem>>, vector<1x32xf32>
    %c0_115 = arith.constant 0 : index
    %c352 = arith.constant 352 : index
    %75 = vector.load %arg19[%c0_115, %c352] : memref<1x512xf32, #tpu.memory_space<vmem>>, vector<1x32xf32>
    tpu.vector_store %arg19[%c0_115, %c352], %74 {strides = array<i32>} : memref<1x512xf32, #tpu.memory_space<vmem>>, vector<1x32xf32>,
    %c12 = arith.constant 12 : index
    %c0_116 = arith.constant 0 : index
    %76 = vector.load %arg18[%c12, %c0_116] : memref<16x32xf32, #tpu.memory_space<vmem>>, vector<1x32xf32>
    %c0_117 = arith.constant 0 : index
    %c384 = arith.constant 384 : index
    %77 = vector.load %arg19[%c0_117, %c384] : memref<1x512xf32, #tpu.memory_space<vmem>>, vector<1x32xf32>
    tpu.vector_store %arg19[%c0_117, %c384], %76 {strides = array<i32>} : memref<1x512xf32, #tpu.memory_space<vmem>>, vector<1x32xf32>,
    %c13 = arith.constant 13 : index
    %c0_118 = arith.constant 0 : index
    %78 = vector.load %arg18[%c13, %c0_118] : memref<16x32xf32, #tpu.memory_space<vmem>>, vector<1x32xf32>
    %c0_119 = arith.constant 0 : index
    %c416 = arith.constant 416 : index
    %79 = vector.load %arg19[%c0_119, %c416] : memref<1x512xf32, #tpu.memory_space<vmem>>, vector<1x32xf32>
    tpu.vector_store %arg19[%c0_119, %c416], %78 {strides = array<i32>} : memref<1x512xf32, #tpu.memory_space<vmem>>, vector<1x32xf32>,
    %c14 = arith.constant 14 : index
    %c0_120 = arith.constant 0 : index
    %80 = vector.load %arg18[%c14, %c0_120] : memref<16x32xf32, #tpu.memory_space<vmem>>, vector<1x32xf32>
    %c0_121 = arith.constant 0 : index
    %c448 = arith.constant 448 : index
    %81 = vector.load %arg19[%c0_121, %c448] : memref<1x512xf32, #tpu.memory_space<vmem>>, vector<1x32xf32>
    tpu.vector_store %arg19[%c0_121, %c448], %80 {strides = array<i32>} : memref<1x512xf32, #tpu.memory_space<vmem>>, vector<1x32xf32>,
    %c15 = arith.constant 15 : index
    %c0_122 = arith.constant 0 : index
    %82 = vector.load %arg18[%c15, %c0_122] : memref<16x32xf32, #tpu.memory_space<vmem>>, vector<1x32xf32>
    %c0_123 = arith.constant 0 : index
    %c480 = arith.constant 480 : index
    %83 = vector.load %arg19[%c0_123, %c480] : memref<1x512xf32, #tpu.memory_space<vmem>>, vector<1x32xf32>
    tpu.vector_store %arg19[%c0_123, %c480], %82 {strides = array<i32>} : memref<1x512xf32, #tpu.memory_space<vmem>>, vector<1x32xf32>,
    %c0_124 = arith.constant 0 : index
    %c0_125 = arith.constant 0 : index
    %84 = vector.load %arg19[%c0_124, %c0_125] : memref<1x512xf32, #tpu.memory_space<vmem>>, vector<1x512xf32>
    %c0_126 = arith.constant 0 : index
    %c0_127 = arith.constant 0 : index
    %85 = vector.load %arg6[%c0_126, %c0_127] : memref<512x128xf32, #tpu.memory_space<vmem>>, vector<512x128xf32>
    %cst_128 = arith.constant dense<0.000000e+00> : vector<1x128xf32>
    %86 = tpu.matmul %84, %85, %cst_128 {dimension_numbers = #tpu.dot_dimension_numbers<[1], [0], [0], [1], [0, 0, 1, 1], [], []>} : vector<1x512xf32>, vector<512x128xf32>, vector<1x128xf32> -> vector<1x128xf32>
    %c0_129 = arith.constant 0 : index
    %c0_130 = arith.constant 0 : index
    %87 = vector.load %arg7[%c0_129, %c0_130] : memref<1x128xf32, #tpu.memory_space<vmem>>, vector<1x128xf32>
    %88 = arith.addf %86, %87 : vector<1x128xf32>
    %cst_131 = arith.constant 0.000000e+00 : f32
    %89 = vector.broadcast %cst_131 : f32 to vector<1x128xf32>
    %90 = arith.maximumf %88, %89 : vector<1x128xf32>
    %c0_132 = arith.constant 0 : index
    %c0_133 = arith.constant 0 : index
    %91 = vector.load %arg8[%c0_132, %c0_133] : memref<128x128xf32, #tpu.memory_space<vmem>>, vector<128x128xf32>
    %cst_134 = arith.constant dense<0.000000e+00> : vector<1x128xf32>
    %92 = tpu.matmul %90, %91, %cst_134 {dimension_numbers = #tpu.dot_dimension_numbers<[1], [0], [0], [1], [0, 0, 1, 1], [], []>} : vector<1x128xf32>, vector<128x128xf32>, vector<1x128xf32> -> vector<1x128xf32>
    %c0_135 = arith.constant 0 : index
    %c0_136 = arith.constant 0 : index
    %93 = vector.load %arg9[%c0_135, %c0_136] : memref<1x128xf32, #tpu.memory_space<vmem>>, vector<1x128xf32>
    %94 = arith.addf %92, %93 : vector<1x128xf32>
    %cst_137 = arith.constant 0.000000e+00 : f32
    %95 = vector.broadcast %cst_137 : f32 to vector<1x128xf32>
    %96 = arith.maximumf %94, %95 : vector<1x128xf32>
    %c0_138 = arith.constant 0 : index
    %c0_139 = arith.constant 0 : index
    %97 = vector.load %arg10[%c0_138, %c0_139] : memref<128x128xf32, #tpu.memory_space<vmem>>, vector<128x128xf32>
    %cst_140 = arith.constant dense<0.000000e+00> : vector<1x128xf32>
    %98 = tpu.matmul %96, %97, %cst_140 {dimension_numbers = #tpu.dot_dimension_numbers<[1], [0], [0], [1], [0, 0, 1, 1], [], []>} : vector<1x128xf32>, vector<128x128xf32>, vector<1x128xf32> -> vector<1x128xf32>
    %c0_141 = arith.constant 0 : index
    %c0_142 = arith.constant 0 : index
    %99 = vector.load %arg11[%c0_141, %c0_142] : memref<1x128xf32, #tpu.memory_space<vmem>>, vector<1x128xf32>
    %100 = arith.addf %98, %99 : vector<1x128xf32>
    %101 = vector.shape_cast %100 : vector<1x128xf32> to vector<1x1x128xf32>
    %c0_143 = arith.constant 0 : index
    %c0_144 = arith.constant 0 : index
    %c0_145 = arith.constant 0 : index
    %102 = vector.load %arg15[%c0_143, %c0_144, %c0_145] : memref<1x1x128xf32, #tpu.memory_space<vmem>>, vector<1x1x128xf32>
    tpu.vector_store %arg15[%c0_143, %c0_144, %c0_145], %101 {strides = array<i32>} : memref<1x1x128xf32, #tpu.memory_space<vmem>>, vector<1x1x128xf32>,
    return
  }
  func.func @transform_0(%arg0: i32) -> (i32, i32) {
    %c0_i32 = arith.constant 0 : i32
    %c0_i32_0 = arith.constant 0 : i32
    return %arg0, %c0_i32 : i32, i32
  }
  func.func @transform_1(%arg0: i32) -> (i32, i32) {
    %c0_i32 = arith.constant 0 : i32
    %c0_i32_0 = arith.constant 0 : i32
    %c0_i32_1 = arith.constant 0 : i32
    return %c0_i32, %c0_i32_0 : i32, i32
  }
  func.func @transform_2(%arg0: i32) -> (i32, i32) {
    %c0_i32 = arith.constant 0 : i32
    %c0_i32_0 = arith.constant 0 : i32
    %c0_i32_1 = arith.constant 0 : i32
    return %c0_i32, %c0_i32_0 : i32, i32
  }
  func.func @transform_3(%arg0: i32) -> (i32, i32) {
    %c0_i32 = arith.constant 0 : i32
    %c0_i32_0 = arith.constant 0 : i32
    %c0_i32_1 = arith.constant 0 : i32
    return %c0_i32, %c0_i32_0 : i32, i32
  }
  func.func @transform_4(%arg0: i32) -> (i32, i32) {
    %c0_i32 = arith.constant 0 : i32
    %c0_i32_0 = arith.constant 0 : i32
    %c0_i32_1 = arith.constant 0 : i32
    return %c0_i32, %c0_i32_0 : i32, i32
  }
  func.func @transform_5(%arg0: i32) -> (i32, i32) {
    %c0_i32 = arith.constant 0 : i32
    %c0_i32_0 = arith.constant 0 : i32
    %c0_i32_1 = arith.constant 0 : i32
    return %c0_i32, %c0_i32_0 : i32, i32
  }
  func.func @transform_6(%arg0: i32) -> (i32, i32) {
    %c0_i32 = arith.constant 0 : i32
    %c0_i32_0 = arith.constant 0 : i32
    %c0_i32_1 = arith.constant 0 : i32
    return %c0_i32, %c0_i32_0 : i32, i32
  }
  func.func @transform_7(%arg0: i32) -> (i32, i32) {
    %c0_i32 = arith.constant 0 : i32
    %c0_i32_0 = arith.constant 0 : i32
    %c0_i32_1 = arith.constant 0 : i32
    return %c0_i32, %c0_i32_0 : i32, i32
  }
  func.func @transform_8(%arg0: i32) -> (i32, i32) {
    %c0_i32 = arith.constant 0 : i32
    %c0_i32_0 = arith.constant 0 : i32
    %c0_i32_1 = arith.constant 0 : i32
    return %c0_i32, %c0_i32_0 : i32, i32
  }
  func.func @transform_9(%arg0: i32) -> (i32, i32) {
    %c0_i32 = arith.constant 0 : i32
    %c0_i32_0 = arith.constant 0 : i32
    %c0_i32_1 = arith.constant 0 : i32
    return %c0_i32, %c0_i32_0 : i32, i32
  }
  func.func @transform_10(%arg0: i32) -> (i32, i32) {
    %c0_i32 = arith.constant 0 : i32
    %c0_i32_0 = arith.constant 0 : i32
    %c0_i32_1 = arith.constant 0 : i32
    return %c0_i32, %c0_i32_0 : i32, i32
  }
  func.func @transform_11(%arg0: i32) -> (i32, i32, i32, i32) {
    %c0_i32 = arith.constant 0 : i32
    %c0_i32_0 = arith.constant 0 : i32
    %c0_i32_1 = arith.constant 0 : i32
    %c0_i32_2 = arith.constant 0 : i32
    return %arg0, %c0_i32, %c0_i32_0, %c0_i32_1 : i32, i32, i32, i32
  }
  func.func @transform_12(%arg0: i32) -> (i32, i32, i32, i32) {
    %c0_i32 = arith.constant 0 : i32
    %c0_i32_0 = arith.constant 0 : i32
    %c0_i32_1 = arith.constant 0 : i32
    %c0_i32_2 = arith.constant 0 : i32
    return %arg0, %c0_i32, %c0_i32_0, %c0_i32_1 : i32, i32, i32, i32
  }
  func.func @transform_13(%arg0: i32) -> (i32, i32, i32, i32) {
    %c0_i32 = arith.constant 0 : i32
    %c0_i32_0 = arith.constant 0 : i32
    %c0_i32_1 = arith.constant 0 : i32
    %c0_i32_2 = arith.constant 0 : i32
    return %arg0, %c0_i32, %c0_i32_0, %c0_i32_1 : i32, i32, i32, i32
  }
  func.func @transform_14(%arg0: i32) -> (i32, i32, i32) {
    %c0_i32 = arith.constant 0 : i32
    %c0_i32_0 = arith.constant 0 : i32
    %c0_i32_1 = arith.constant 0 : i32
    return %arg0, %c0_i32, %c0_i32_0 : i32, i32, i32
  }
}

</mosaic_0001>

<llo_original>
// kernel: vgg_forward.1
$region0: #{vgg_forward.1}
  #allocation0 [shape = 'u32[]', space=smem, size = 0x4, offset = 0x4, fixed_abs, tag = 'smem constant byte address 0x4 - core index']
  #allocation1 [shape = 'u32[144,128]{1,0:T(1,128)}', space=vmem, size = 0x12000, scoped, tag = 'internal scratch']
  #allocation2 [shape = 'f32[10,10,16]{2,1,0:T(8,128)}', space=vmem, size = 0x14000, scoped, tag = 'scratch operand']
  #allocation3 [shape = 'f32[8,8,144]{2,1,0:T(8,128)}', space=vmem, size = 0x10000, scoped, tag = 'scratch operand']
  #allocation4 [shape = 'f32[16,32]{1,0:T(8,128)}', space=vmem, size = 0x2000, scoped, tag = 'scratch operand']
  #allocation5 [shape = 'f32[1,512]{1,0:T(1,128)}', space=vmem, size = 0x800, scoped, tag = 'scratch operand']
  %s0 = inlined_call_operand.vmem [shape: bf16[512,128], index: 0, kind: input, shape index: {}]
  %s1 = inlined_call_operand.vmem [shape: bf16[128,16], index: 1, kind: input, shape index: {}]
  %s2 = inlined_call_operand.vmem [shape: f32[1,16], index: 2, kind: input, shape index: {}]
  %s3 = inlined_call_operand.vmem [shape: f32[144,32], index: 3, kind: input, shape index: {}]
  %s4 = inlined_call_operand.vmem [shape: f32[1,32], index: 4, kind: input, shape index: {}]
  %s5 = inlined_call_operand.vmem [shape: f32[512,128], index: 5, kind: input, shape index: {}]
  %s6 = inlined_call_operand.vmem [shape: f32[1,128], index: 6, kind: input, shape index: {}]
  %s7 = inlined_call_operand.vmem [shape: f32[128,128], index: 7, kind: input, shape index: {}]
  %s8 = inlined_call_operand.vmem [shape: f32[1,128], index: 8, kind: input, shape index: {}]
  %s9 = inlined_call_operand.vmem [shape: f32[128,128], index: 9, kind: input, shape index: {}]
  %s10 = inlined_call_operand.vmem [shape: f32[1,128], index: 10, kind: input, shape index: {}]
  %s11 = inlined_call_operand.vmem [shape: f32[2,16,16,16], index: 11, kind: output, shape index: {0}]
  %s12 = inlined_call_operand.hbm [shape: f32[2,8,8,16], index: 12, kind: output, shape index: {1}]
  %s13 = inlined_call_operand.hbm [shape: f32[2,8,8,32], index: 13, kind: output, shape index: {2}]
  %s14 = inlined_call_operand.hbm [shape: f32[2,1,128], index: 14, kind: output, shape index: {3}]
  %15 = xla_tuple %s11, %s12, %s13, %s14
  %s16 = sld [smem:[#allocation0]]
  $region101: #{vgg_forward.1} parent=0
    _
  %s18 = ssub.s32 1, %s16
  %s19 = scalar_select 0, %s18, %s16
  $region1: #{vgg_forward.1} parent=0
    #allocation6 [shape = 'u8[65536]{0}', space=vmem, size = 0x10000, scoped, tag = 'output window, operand 1']
    #allocation7 [shape = 's32[2]{0}', space=sflag, size = 0x8, scoped, tag = 'scoped memory for vgg_forward.1']
    #allocation8 [shape = 'u8[65536]{0}', space=vmem, size = 0x10000, scoped, tag = 'output window, operand 2']
    #allocation9 [shape = 's32[2]{0}', space=sflag, size = 0x8, scoped, tag = 'scoped memory for vgg_forward.1']
    #allocation10 [shape = 'u8[1024]{0}', space=vmem, size = 0x400, scoped, tag = 'output window, operand 3']
    %20 = vsyncpa [#allocation7], 0
    %s21 = scalar_lea.sflag [#allocation7], 1
    %22 = vsyncpa %s21, 0
    %23 = vsyncpa [#allocation9], 0
    %s24 = scalar_lea.sflag [#allocation9], 1
    %25 = vsyncpa %s24, 0
    loop: start=0, step=1, limit=4
    $region2: #{vgg_forward.1} parent=1 // loop_pre_header
      _
    $region3: #{vgg_forward.1} parent=1 // loop_header
      %s27 = sphi 0, %s31
      %p28 = scmp.ge.s32.totalorder %s27, 4
      %s37 = sphi 0, %s39
      %s40 = sphi 0, %s37
      %s41 = sphi 0, %s40
      %s57 = sphi 0, %s41
      %s61 = sphi 0, %s61
      %s63 = sphi 0, %s61
      %s64 = sphi 0, %s63
      %s78 = sphi 0, %s64
      %s82 = sphi 0, %s82
      %s84 = sphi 0, %s82
      %s85 = sphi 0, %s84
      %s99 = sphi 0, %s85
      %s103 = sphi 0, %s103
      %s105 = sphi 0, %s103
      %s106 = sphi 0, %s105
      %s120 = sphi 0, %s106
      %s124 = sphi 0, %s124
      %s126 = sphi 0, %s124
      %s127 = sphi 0, %s126
      %s141 = sphi 0, %s127
      %s145 = sphi 0, %s145
      %s147 = sphi 0, %s145
      %s148 = sphi 0, %s147
      %s162 = sphi 0, %s148
      %s166 = sphi 0, %s166
      %s168 = sphi 0, %s166
      %s169 = sphi 0, %s168
      %s183 = sphi 0, %s169
      %s187 = sphi 0, %s187
      %s189 = sphi 0, %s187
      %s190 = sphi 0, %s189
      %s204 = sphi 0, %s190
      %s208 = sphi 0, %s208
      %s210 = sphi 0, %s208
      %s211 = sphi 0, %s210
      %s225 = sphi 0, %s211
      %s229 = sphi 0, %s229
      %s231 = sphi 0, %s229
      %s232 = sphi 0, %s231
      %s246 = sphi 0, %s232
      %s250 = sphi 0, %s250
      %s252 = sphi 0, %s250
      %s253 = sphi 0, %s252
      %s267 = sphi 0, %s253
      %s273 = sphi 0, %s275
      %s276 = sphi 0, %s273
      %s277 = sphi 0, %s276
      %s293 = sphi 0, %s277
      %s299 = sphi 0, %s301
      %s302 = sphi 0, %s299
      %s303 = sphi 0, %s302
      %s319 = sphi 0, %s303
      %s325 = sphi 0, %s327
      %s328 = sphi 0, %s325
      %s329 = sphi 0, %s328
      %s345 = sphi 0, %s329
      %s351 = sphi 0, %s353
      %s354 = sphi 0, %s351
      %s355 = sphi 0, %s354
      %s371 = sphi 0, %s355
    $region4: #{vgg_forward.1} parent=1 // loop_header_branch
      %30 = sbr.rel (%p28) target = $region8
    $region5: #{vgg_forward.1} parent=1 // loop_body
      %s32 = ssub.s32 %s27, 1
      %s33 = ssub.s32 %s27, 2
      %s34 = sadd.s32 %s27, 1
      %s35 = ssub.s32 %s27, %s34
      %p36 = scmp.eq.s32.totalorder %s35, 0
      %s38 = sadd.s32 %s37, 1
      %s39 = scalar_select %p36, %s37, %s38
      %p42 = pneg %p36
      %p43 = scmp.eq.s32.totalorder %s27, 1
      %p44 = por %p42, %p43
      %p45 = scmp.ne.s32.totalorder %s37, %s40
      %p46 = scmp.eq.s32.totalorder %s27, 0
      %p47 = por %p45, %p46
      %p48 = scmp.ne.s32.totalorder %s37, %s40
      %p49 = scmp.eq.s32.totalorder %s32, 1
      %p50 = por %p48, %p49
      %p51 = scmp.ne.s32.totalorder %s40, %s41
      %p52 = scmp.eq.s32.totalorder %s32, 0
      %p53 = por %p51, %p52
      %p54 = scmp.ne.s32.totalorder %s40, %s41
      %p55 = scmp.eq.s32.totalorder %s33, 1
      %p56 = por %p54, %p55
      %p58 = scmp.ne.s32.totalorder %s41, %s57
      %p59 = scmp.eq.s32.totalorder %s33, 0
      %p60 = por %p58, %p59
      %s62 = sadd.s32 %s61, 1
      %p65 = scmp.eq.s32.totalorder %s27, 1
      %p66 = scmp.ne.s32.totalorder %s61, %s63
      %p67 = scmp.eq.s32.totalorder %s27, 0
      %p68 = por %p66, %p67
      %p69 = scmp.ne.s32.totalorder %s61, %s63
      %p70 = scmp.eq.s32.totalorder %s32, 1
      %p71 = por %p69, %p70
      %p72 = scmp.ne.s32.totalorder %s63, %s64
      %p73 = scmp.eq.s32.totalorder %s32, 0
      %p74 = por %p72, %p73
      %p75 = scmp.ne.s32.totalorder %s63, %s64
      %p76 = scmp.eq.s32.totalorder %s33, 1
      %p77 = por %p75, %p76
      %p79 = scmp.ne.s32.totalorder %s64, %s78
      %p80 = scmp.eq.s32.totalorder %s33, 0
      %p81 = por %p79, %p80
      %s83 = sadd.s32 %s82, 1
      %p86 = scmp.eq.s32.totalorder %s27, 1
      %p87 = scmp.ne.s32.totalorder %s82, %s84
      %p88 = scmp.eq.s32.totalorder %s27, 0
      %p89 = por %p87, %p88
      %p90 = scmp.ne.s32.totalorder %s82, %s84
      %p91 = scmp.eq.s32.totalorder %s32, 1
      %p92 = por %p90, %p91
      %p93 = scmp.ne.s32.totalorder %s84, %s85
      %p94 = scmp.eq.s32.totalorder %s32, 0
      %p95 = por %p93, %p94
      %p96 = scmp.ne.s32.totalorder %s84, %s85
      %p97 = scmp.eq.s32.totalorder %s33, 1
      %p98 = por %p96, %p97
      %p100 = scmp.ne.s32.totalorder %s85, %s99
      %p101 = scmp.eq.s32.totalorder %s33, 0
      %p102 = por %p100, %p101
      %s104 = sadd.s32 %s103, 1
      %p107 = scmp.eq.s32.totalorder %s27, 1
      %p108 = scmp.ne.s32.totalorder %s103, %s105
      %p109 = scmp.eq.s32.totalorder %s27, 0
      %p110 = por %p108, %p109
      %p111 = scmp.ne.s32.totalorder %s103, %s105
      %p112 = scmp.eq.s32.totalorder %s32, 1
      %p113 = por %p111, %p112
      %p114 = scmp.ne.s32.totalorder %s105, %s106
      %p115 = scmp.eq.s32.totalorder %s32, 0
      %p116 = por %p114, %p115
      %p117 = scmp.ne.s32.totalorder %s105, %s106
      %p118 = scmp.eq.s32.totalorder %s33, 1
      %p119 = por %p117, %p118
      %p121 = scmp.ne.s32.totalorder %s106, %s120
      %p122 = scmp.eq.s32.totalorder %s33, 0
      %p123 = por %p121, %p122
      %s125 = sadd.s32 %s124, 1
      %p128 = scmp.eq.s32.totalorder %s27, 1
      %p129 = scmp.ne.s32.totalorder %s124, %s126
      %p130 = scmp.eq.s32.totalorder %s27, 0
      %p131 = por %p129, %p130
      %p132 = scmp.ne.s32.totalorder %s124, %s126
      %p133 = scmp.eq.s32.totalorder %s32, 1
      %p134 = por %p132, %p133
      %p135 = scmp.ne.s32.totalorder %s126, %s127
      %p136 = scmp.eq.s32.totalorder %s32, 0
      %p137 = por %p135, %p136
      %p138 = scmp.ne.s32.totalorder %s126, %s127
      %p139 = scmp.eq.s32.totalorder %s33, 1
      %p140 = por %p138, %p139
      %p142 = scmp.ne.s32.totalorder %s127, %s141
      %p143 = scmp.eq.s32.totalorder %s33, 0
      %p144 = por %p142, %p143
      %s146 = sadd.s32 %s145, 1
      %p149 = scmp.eq.s32.totalorder %s27, 1
      %p150 = scmp.ne.s32.totalorder %s145, %s147
      %p151 = scmp.eq.s32.totalorder %s27, 0
      %p152 = por %p150, %p151
      %p153 = scmp.ne.s32.totalorder %s145, %s147
      %p154 = scmp.eq.s32.totalorder %s32, 1
      %p155 = por %p153, %p154
      %p156 = scmp.ne.s32.totalorder %s147, %s148
      %p157 = scmp.eq.s32.totalorder %s32, 0
      %p158 = por %p156, %p157
      %p159 = scmp.ne.s32.totalorder %s147, %s148
      %p160 = scmp.eq.s32.totalorder %s33, 1
      %p161 = por %p159, %p160
      %p163 = scmp.ne.s32.totalorder %s148, %s162
      %p164 = scmp.eq.s32.totalorder %s33, 0
      %p165 = por %p163, %p164
      %s167 = sadd.s32 %s166, 1
      %p170 = scmp.eq.s32.totalorder %s27, 1
      %p171 = scmp.ne.s32.totalorder %s166, %s168
      %p172 = scmp.eq.s32.totalorder %s27, 0
      %p173 = por %p171, %p172
      %p174 = scmp.ne.s32.totalorder %s166, %s168
      %p175 = scmp.eq.s32.totalorder %s32, 1
      %p176 = por %p174, %p175
      %p177 = scmp.ne.s32.totalorder %s168, %s169
      %p178 = scmp.eq.s32.totalorder %s32, 0
      %p179 = por %p177, %p178
      %p180 = scmp.ne.s32.totalorder %s168, %s169
      %p181 = scmp.eq.s32.totalorder %s33, 1
      %p182 = por %p180, %p181
      %p184 = scmp.ne.s32.totalorder %s169, %s183
      %p185 = scmp.eq.s32.totalorder %s33, 0
      %p186 = por %p184, %p185
      %s188 = sadd.s32 %s187, 1
      %p191 = scmp.eq.s32.totalorder %s27, 1
      %p192 = scmp.ne.s32.totalorder %s187, %s189
      %p193 = scmp.eq.s32.totalorder %s27, 0
      %p194 = por %p192, %p193
      %p195 = scmp.ne.s32.totalorder %s187, %s189
      %p196 = scmp.eq.s32.totalorder %s32, 1
      %p197 = por %p195, %p196
      %p198 = scmp.ne.s32.totalorder %s189, %s190
      %p199 = scmp.eq.s32.totalorder %s32, 0
      %p200 = por %p198, %p199
      %p201 = scmp.ne.s32.totalorder %s189, %s190
      %p202 = scmp.eq.s32.totalorder %s33, 1
      %p203 = por %p201, %p202
      %p205 = scmp.ne.s32.totalorder %s190, %s204
      %p206 = scmp.eq.s32.totalorder %s33, 0
      %p207 = por %p205, %p206
      %s209 = sadd.s32 %s208, 1
      %p212 = scmp.eq.s32.totalorder %s27, 1
      %p213 = scmp.ne.s32.totalorder %s208, %s210
      %p214 = scmp.eq.s32.totalorder %s27, 0
      %p215 = por %p213, %p214
      %p216 = scmp.ne.s32.totalorder %s208, %s210
      %p217 = scmp.eq.s32.totalorder %s32, 1
      %p218 = por %p216, %p217
      %p219 = scmp.ne.s32.totalorder %s210, %s211
      %p220 = scmp.eq.s32.totalorder %s32, 0
      %p221 = por %p219, %p220
      %p222 = scmp.ne.s32.totalorder %s210, %s211
      %p223 = scmp.eq.s32.totalorder %s33, 1
      %p224 = por %p222, %p223
      %p226 = scmp.ne.s32.totalorder %s211, %s225
      %p227 = scmp.eq.s32.totalorder %s33, 0
      %p228 = por %p226, %p227
      %s230 = sadd.s32 %s229, 1
      %p233 = scmp.eq.s32.totalorder %s27, 1
      %p234 = scmp.ne.s32.totalorder %s229, %s231
      %p235 = scmp.eq.s32.totalorder %s27, 0
      %p236 = por %p234, %p235
      %p237 = scmp.ne.s32.totalorder %s229, %s231
      %p238 = scmp.eq.s32.totalorder %s32, 1
      %p239 = por %p237, %p238
      %p240 = scmp.ne.s32.totalorder %s231, %s232
      %p241 = scmp.eq.s32.totalorder %s32, 0
      %p242 = por %p240, %p241
      %p243 = scmp.ne.s32.totalorder %s231, %s232
      %p244 = scmp.eq.s32.totalorder %s33, 1
      %p245 = por %p243, %p244
      %p247 = scmp.ne.s32.totalorder %s232, %s246
      %p248 = scmp.eq.s32.totalorder %s33, 0
      %p249 = por %p247, %p248
      %s251 = sadd.s32 %s250, 1
      %p254 = scmp.eq.s32.totalorder %s27, 1
      %p255 = scmp.ne.s32.totalorder %s250, %s252
      %p256 = scmp.eq.s32.totalorder %s27, 0
      %p257 = por %p255, %p256
      %p258 = scmp.ne.s32.totalorder %s250, %s252
      %p259 = scmp.eq.s32.totalorder %s32, 1
      %p260 = por %p258, %p259
      %p261 = scmp.ne.s32.totalorder %s252, %s253
      %p262 = scmp.eq.s32.totalorder %s32, 0
      %p263 = por %p261, %p262
      %p264 = scmp.ne.s32.totalorder %s252, %s253
      %p265 = scmp.eq.s32.totalorder %s33, 1
      %p266 = por %p264, %p265
      %p268 = scmp.ne.s32.totalorder %s253, %s267
      %p269 = scmp.eq.s32.totalorder %s33, 0
      %p270 = por %p268, %p269
      %s271 = ssub.s32 %s27, %s34
      %p272 = scmp.eq.s32.totalorder %s271, 0
      %s274 = sadd.s32 %s273, 1
      %s275 = scalar_select %p272, %s273, %s274
      %p278 = pneg %p272
      %p279 = scmp.eq.s32.totalorder %s27, 1
      %p280 = por %p278, %p279
      %p281 = scmp.ne.s32.totalorder %s273, %s276
      %p282 = scmp.eq.s32.totalorder %s27, 0
      %p283 = por %p281, %p282
      %p284 = scmp.ne.s32.totalorder %s273, %s276
      %p285 = scmp.eq.s32.totalorder %s32, 1
      %p286 = por %p284, %p285
      %p287 = scmp.ne.s32.totalorder %s276, %s277
      %p288 = scmp.eq.s32.totalorder %s32, 0
      %p289 = por %p287, %p288
      %p290 = scmp.ne.s32.totalorder %s276, %s277
      %p291 = scmp.eq.s32.totalorder %s33, 1
      %p292 = por %p290, %p291
      %p294 = scmp.ne.s32.totalorder %s277, %s293
      %p295 = scmp.eq.s32.totalorder %s33, 0
      %p296 = por %p294, %p295
      %s297 = ssub.s32 %s27, %s34
      %p298 = scmp.eq.s32.totalorder %s297, 0
      %s300 = sadd.s32 %s299, 1
      %s301 = scalar_select %p298, %s299, %s300
      %p304 = pneg %p298
      %p305 = scmp.eq.s32.totalorder %s27, 1
      %p306 = por %p304, %p305
      %p307 = scmp.ne.s32.totalorder %s299, %s302
      %p308 = scmp.eq.s32.totalorder %s27, 0
      %p309 = por %p307, %p308
      %p310 = scmp.ne.s32.totalorder %s299, %s302
      %p311 = scmp.eq.s32.totalorder %s32, 1
      %p312 = por %p310, %p311
      %p313 = scmp.ne.s32.totalorder %s302, %s303
      %p314 = scmp.eq.s32.totalorder %s32, 0
      %p315 = por %p313, %p314
      %p316 = scmp.ne.s32.totalorder %s302, %s303
      %p317 = scmp.eq.s32.totalorder %s33, 1
      %p318 = por %p316, %p317
      %p320 = scmp.ne.s32.totalorder %s303, %s319
      %p321 = scmp.eq.s32.totalorder %s33, 0
      %p322 = por %p320, %p321
      %s323 = ssub.s32 %s27, %s34
      %p324 = scmp.eq.s32.totalorder %s323, 0
      %s326 = sadd.s32 %s325, 1
      %s327 = scalar_select %p324, %s325, %s326
      %p330 = pneg %p324
      %p331 = scmp.eq.s32.totalorder %s27, 1
      %p332 = por %p330, %p331
      %p333 = scmp.ne.s32.totalorder %s325, %s328
      %p334 = scmp.eq.s32.totalorder %s27, 0
      %p335 = por %p333, %p334
      %p336 = scmp.ne.s32.totalorder %s325, %s328
      %p337 = scmp.eq.s32.totalorder %s32, 1
      %p338 = por %p336, %p337
      %p339 = scmp.ne.s32.totalorder %s328, %s329
      %p340 = scmp.eq.s32.totalorder %s32, 0
      %p341 = por %p339, %p340
      %p342 = scmp.ne.s32.totalorder %s328, %s329
      %p343 = scmp.eq.s32.totalorder %s33, 1
      %p344 = por %p342, %p343
      %p346 = scmp.ne.s32.totalorder %s329, %s345
      %p347 = scmp.eq.s32.totalorder %s33, 0
      %p348 = por %p346, %p347
      %s349 = ssub.s32 %s27, %s34
      %p350 = scmp.eq.s32.totalorder %s349, 0
      %s352 = sadd.s32 %s351, 1
      %s353 = scalar_select %p350, %s351, %s352
      %p356 = pneg %p350
      %p357 = scmp.eq.s32.totalorder %s27, 1
      %p358 = por %p356, %p357
      %p359 = scmp.ne.s32.totalorder %s351, %s354
      %p360 = scmp.eq.s32.totalorder %s27, 0
      %p361 = por %p359, %p360
      %p362 = scmp.ne.s32.totalorder %s351, %s354
      %p363 = scmp.eq.s32.totalorder %s32, 1
      %p364 = por %p362, %p363
      %p365 = scmp.ne.s32.totalorder %s354, %s355
      %p366 = scmp.eq.s32.totalorder %s32, 0
      %p367 = por %p365, %p366
      %p368 = scmp.ne.s32.totalorder %s354, %s355
      %p369 = scmp.eq.s32.totalorder %s33, 1
      %p370 = por %p368, %p369
      %p372 = scmp.ne.s32.totalorder %s355, %s371
      %p373 = scmp.eq.s32.totalorder %s33, 0
      %p374 = por %p372, %p373
      %p375 = scmp.le.s32.totalorder 1, %s27
      %p376 = scmp.lt.s32.totalorder %s27, 3
      %p377 = pnand %p375, %p376
      %p378 = pneg %p377
      // Predicated region
      $region9: #{vgg_forward.1} parent=5 // pred_check
        _
      $region10: #{vgg_forward.1} parent=5 // pred_check_branch
        %380 = sbr.rel (%p377) target = $region12
      $region11: #{vgg_forward.1} parent=5 // pred_region
        %s381 = ssub.s32 %s27, 1
        // Predicated region
        $region13: #{vgg_forward.1} parent=11 // pred_check
          %p382 = pneg %p74
        $region14: #{vgg_forward.1} parent=11 // pred_check_branch
          %384 = sbr.rel (%p382) target = $region16
        $region15: #{vgg_forward.1} parent=11 // pred_region
          _
        $region16: #{vgg_forward.1} parent=11 // pred_fallthru
          _
        // Predicated region
        $region17: #{vgg_forward.1} parent=11 // pred_check
          %p385 = pneg %p95
        $region18: #{vgg_forward.1} parent=11 // pred_check_branch
          %387 = sbr.rel (%p385) target = $region20
        $region19: #{vgg_forward.1} parent=11 // pred_region
          _
        $region20: #{vgg_forward.1} parent=11 // pred_fallthru
          _
        // Predicated region
        $region21: #{vgg_forward.1} parent=11 // pred_check
          %p388 = pneg %p116
        $region22: #{vgg_forward.1} parent=11 // pred_check_branch
          %390 = sbr.rel (%p388) target = $region24
        $region23: #{vgg_forward.1} parent=11 // pred_region
          _
        $region24: #{vgg_forward.1} parent=11 // pred_fallthru
          _
        // Predicated region
        $region25: #{vgg_forward.1} parent=11 // pred_check
          %p391 = pneg %p137
        $region26: #{vgg_forward.1} parent=11 // pred_check_branch
          %393 = sbr.rel (%p391) target = $region28
        $region27: #{vgg_forward.1} parent=11 // pred_region
          _
        $region28: #{vgg_forward.1} parent=11 // pred_fallthru
          _
        // Predicated region
        $region29: #{vgg_forward.1} parent=11 // pred_check
          %p394 = pneg %p158
        $region30: #{vgg_forward.1} parent=11 // pred_check_branch
          %396 = sbr.rel (%p394) target = $region32
        $region31: #{vgg_forward.1} parent=11 // pred_region
          _
        $region32: #{vgg_forward.1} parent=11 // pred_fallthru
          _
        // Predicated region
        $region33: #{vgg_forward.1} parent=11 // pred_check
          %p397 = pneg %p179
        $region34: #{vgg_forward.1} parent=11 // pred_check_branch
          %399 = sbr.rel (%p397) target = $region36
        $region35: #{vgg_forward.1} parent=11 // pred_region
          _
        $region36: #{vgg_forward.1} parent=11 // pred_fallthru
          _
        // Predicated region
        $region37: #{vgg_forward.1} parent=11 // pred_check
          %p400 = pneg %p200
        $region38: #{vgg_forward.1} parent=11 // pred_check_branch
          %402 = sbr.rel (%p400) target = $region40
        $region39: #{vgg_forward.1} parent=11 // pred_region
          _
        $region40: #{vgg_forward.1} parent=11 // pred_fallthru
          _
        // Predicated region
        $region41: #{vgg_forward.1} parent=11 // pred_check
          %p403 = pneg %p221
        $region42: #{vgg_forward.1} parent=11 // pred_check_branch
          %405 = sbr.rel (%p403) target = $region44
        $region43: #{vgg_forward.1} parent=11 // pred_region
          _
        $region44: #{vgg_forward.1} parent=11 // pred_fallthru
          _
        // Predicated region
        $region45: #{vgg_forward.1} parent=11 // pred_check
          %p406 = pneg %p242
        $region46: #{vgg_forward.1} parent=11 // pred_check_branch
          %408 = sbr.rel (%p406) target = $region48
        $region47: #{vgg_forward.1} parent=11 // pred_region
          _
        $region48: #{vgg_forward.1} parent=11 // pred_fallthru
          _
        // Predicated region
        $region49: #{vgg_forward.1} parent=11 // pred_check
          %p409 = pneg %p263
        $region50: #{vgg_forward.1} parent=11 // pred_check_branch
          %411 = sbr.rel (%p409) target = $region52
        $region51: #{vgg_forward.1} parent=11 // pred_region
          _
        $region52: #{vgg_forward.1} parent=11 // pred_fallthru
          _
      $region12: #{vgg_forward.1} parent=5 // pred_fallthru
        _
      %p412 = scmp.lt.s32.totalorder %s27, 2
      // Predicated region
      $region53: #{vgg_forward.1} parent=5 // pred_check
        %p413 = pneg %p412
      $region54: #{vgg_forward.1} parent=5 // pred_check_branch
        %415 = sbr.rel (%p413) target = $region56
      $region55: #{vgg_forward.1} parent=5 // pred_region
        // Predicated region
        $region57: #{vgg_forward.1} parent=55 // pred_check
          %p416 = pneg %p47
        $region58: #{vgg_forward.1} parent=55 // pred_check_branch
          %418 = sbr.rel (%p416) target = $region60
        $region59: #{vgg_forward.1} parent=55 // pred_region
          %s419 = smul.u32 32, %s27
          %p420 = scmp.lt.s32.totalorder %s419, 63
          %s421 = scalar_select %p420, %s419, 63
          %s422 = smul.addr %s421, 4
          %s423 = scalar_lea.vmem %s0, %s422
          %s424 = smul.u32 32, %s27
        $region60: #{vgg_forward.1} parent=55 // pred_fallthru
          _
      $region56: #{vgg_forward.1} parent=5 // pred_fallthru
        _
      %p425 = scmp.le.s32.totalorder 1, %s27
      %p426 = scmp.lt.s32.totalorder %s27, 3
      %p427 = pnand %p425, %p426
      %p428 = pneg %p427
      // Predicated region
      $region61: #{vgg_forward.1} parent=5 // pred_check
        _
      $region62: #{vgg_forward.1} parent=5 // pred_check_branch
        %430 = sbr.rel (%p427) target = $region64
      $region63: #{vgg_forward.1} parent=5 // pred_region
        %s431 = ssub.s32 %s27, 1
        %s432 = smul.u32 32, %s32
        %p433 = scmp.lt.s32.totalorder %s432, 63
        %s434 = scalar_select %p433, %s432, 63
        %s435 = smul.addr %s434, 4
        %s436 = scalar_lea.vmem %s0, %s435
        %p437 = pneg %p53
        %p438 = pneg %p50
        %p439 = pneg %p74
        %p440 = pneg %p71
        %p441 = pneg %p95
        %p442 = pneg %p92
        %p443 = pneg %p116
        %p444 = pneg %p113
        %p445 = pneg %p137
        %p446 = pneg %p134
        %p447 = pneg %p158
        %p448 = pneg %p155
        %p449 = pneg %p179
        %p450 = pneg %p176
        %p451 = pneg %p200
        %p452 = pneg %p197
        %p453 = pneg %p221
        %p454 = pneg %p218
        %p455 = pneg %p242
        %p456 = pneg %p239
        %p457 = pneg %p263
        %p458 = pneg %p260
        %p459 = pneg %p289
        %p460 = pneg %p286
        %p461 = scmp.lt.s32.totalorder %s32, 1
        %s462 = scalar_select %p461, %s32, 1
        %s463 = smul.addr %s462, 32
        %s464 = smul.addr %s463, 8
        %s465 = scalar_lea.vmem %s11, %s464
        %p466 = pneg %p315
        %p467 = pneg %p312
        %s468 = sand.u32 %s302, 1
        %s469 = scalar_lea.sflag [#allocation7], %s468
        %s470 = sand.u32 %s302, 1
        %s471 = smul.addr %s470, 64
        %s472 = scalar_lea.vmem [#allocation6], %s471
        %p473 = pneg %p341
        %p474 = pneg %p338
        %s475 = sand.u32 %s32, 1
        %s476 = scalar_lea.sflag [#allocation9], %s475
        %s477 = sand.u32 %s328, 1
        %s478 = smul.addr %s477, 64
        %s479 = scalar_lea.vmem [#allocation8], %s478
        %p480 = pneg %p367
        %p481 = pneg %p364
        %s482 = sand.u32 %s32, 1
        %s483 = scalar_lea.sflag [#allocation9], %s482
        %s484 = sand.u32 %s354, 1
        %s485 = scalar_lea.vmem [#allocation10], %s484
        %s486 = smul.u32 32, %s32
        %p487 = scmp.lt.s32.totalorder %s486, 63
        %s488 = scalar_select %p487, %s486, 63
        %s489 = smul.addr %s488, 4
        %s490 = scalar_lea.vmem %s0, %s489
        %s491 = smul.u32 32, %s32
        %p492 = scmp.lt.s32.totalorder %s32, 1
        %s493 = scalar_select %p492, %s32, 1
        %s494 = smul.addr %s493, 32
        %s495 = smul.addr %s494, 8
        %s496 = scalar_lea.vmem %s11, %s495
        %v498 = vld [vmem:[%s490] sm:$0xf]
        %v499 = vld [vmem:[%s490 + $0x4] sm:$0xf]
        %v500 = vld [vmem:[%s490 + $0x8] sm:$0xf]
        %v501 = vld [vmem:[%s490 + $0xc] sm:$0xf]
        %v502 = vld [vmem:[%s490 + $0x10] sm:$0xf]
        %v503 = vld [vmem:[%s490 + $0x14] sm:$0xf]
        %v504 = vld [vmem:[%s490 + $0x18] sm:$0xf]
        %v505 = vld [vmem:[%s490 + $0x1c] sm:$0xf]
        %v506 = vld [vmem:[%s490 + $0x20] sm:$0xf]
        %v507 = vld [vmem:[%s490 + $0x24] sm:$0xf]
        %v508 = vld [vmem:[%s490 + $0x28] sm:$0xf]
        %v509 = vld [vmem:[%s490 + $0x2c] sm:$0xf]
        %v510 = vld [vmem:[%s490 + $0x30] sm:$0xf]
        %v511 = vld [vmem:[%s490 + $0x34] sm:$0xf]
        %v512 = vld [vmem:[%s490 + $0x38] sm:$0xf]
        %v513 = vld [vmem:[%s490 + $0x3c] sm:$0xf]
        %v514 = vld [vmem:[%s490 + $0x40] sm:$0xf]
        %v515 = vld [vmem:[%s490 + $0x44] sm:$0xf]
        %v516 = vld [vmem:[%s490 + $0x48] sm:$0xf]
        %v517 = vld [vmem:[%s490 + $0x4c] sm:$0xf]
        %v518 = vld [vmem:[%s490 + $0x50] sm:$0xf]
        %v519 = vld [vmem:[%s490 + $0x54] sm:$0xf]
        %v520 = vld [vmem:[%s490 + $0x58] sm:$0xf]
        %v521 = vld [vmem:[%s490 + $0x5c] sm:$0xf]
        %v522 = vld [vmem:[%s490 + $0x60] sm:$0xf]
        %v523 = vld [vmem:[%s490 + $0x64] sm:$0xf]
        %v524 = vld [vmem:[%s490 + $0x68] sm:$0xf]
        %v525 = vld [vmem:[%s490 + $0x6c] sm:$0xf]
        %v526 = vld [vmem:[%s490 + $0x70] sm:$0xf]
        %v527 = vld [vmem:[%s490 + $0x74] sm:$0xf]
        %v528 = vld [vmem:[%s490 + $0x78] sm:$0xf]
        %v529 = vld [vmem:[%s490 + $0x7c] sm:$0xf]
        %v530 = vld [vmem:[%s1] sm:$0xf]
        %v531 = vld [vmem:[%s1 + $0x4] sm:$0xf]
        %v532 = vld [vmem:[%s1 + $0x8] sm:$0xf]
        %v533 = vld [vmem:[%s1 + $0xc] sm:$0xf]
        %v534 = vld [vmem:[%s1 + $0x10] sm:$0xf]
        %v535 = vld [vmem:[%s1 + $0x14] sm:$0xf]
        %v536 = vld [vmem:[%s1 + $0x18] sm:$0xf]
        %v537 = vld [vmem:[%s1 + $0x1c] sm:$0xf]
        %v538 = vld [vmem:[%s1 + $0x20] sm:$0xf]
        %v539 = vld [vmem:[%s1 + $0x24] sm:$0xf]
        %v540 = vld [vmem:[%s1 + $0x28] sm:$0xf]
        %v541 = vld [vmem:[%s1 + $0x2c] sm:$0xf]
        %v542 = vld [vmem:[%s1 + $0x30] sm:$0xf]
        %v543 = vld [vmem:[%s1 + $0x34] sm:$0xf]
        %v544 = vld [vmem:[%s1 + $0x38] sm:$0xf]
        %v545 = vld [vmem:[%s1 + $0x3c] sm:$0xf]
        %v546 = vld [vmem:[%s2] sm:$0x1]
        %v548 = vlaneseq
        %v549 = vshrl.u32 %v548, 7
        %v550 = vsub.s32 0, %v549
        %v551 = vrot.slane %v546, %v550
        %v585 = vunpack.c.l.b16 %v498
        %v586 = vunpack.c.l.b16 %v499
        %v587 = vunpack.c.l.b16 %v500
        %v588 = vunpack.c.l.b16 %v501
        %v589 = vunpack.c.l.b16 %v502
        %v590 = vunpack.c.l.b16 %v503
        %v591 = vunpack.c.l.b16 %v504
        %v592 = vunpack.c.l.b16 %v505
        %v593 = vunpack.c.l.b16 %v506
        %v594 = vunpack.c.l.b16 %v507
        %v595 = vunpack.c.l.b16 %v508
        %v596 = vunpack.c.l.b16 %v509
        %v597 = vunpack.c.l.b16 %v510
        %v598 = vunpack.c.l.b16 %v511
        %v599 = vunpack.c.l.b16 %v512
        %v600 = vunpack.c.l.b16 %v513
        %v601 = vunpack.c.l.b16 %v514
        %v602 = vunpack.c.l.b16 %v515
        %v603 = vunpack.c.l.b16 %v516
        %v604 = vunpack.c.l.b16 %v517
        %v605 = vunpack.c.l.b16 %v518
        %v606 = vunpack.c.l.b16 %v519
        %v607 = vunpack.c.l.b16 %v520
        %v608 = vunpack.c.l.b16 %v521
        %v609 = vunpack.c.l.b16 %v522
        %v610 = vunpack.c.l.b16 %v523
        %v611 = vunpack.c.l.b16 %v524
        %v612 = vunpack.c.l.b16 %v525
        %v613 = vunpack.c.l.b16 %v526
        %v614 = vunpack.c.l.b16 %v527
        %v615 = vunpack.c.l.b16 %v528
        %v616 = vunpack.c.l.b16 %v529
        %v617 = vpack.c.b16 %v586, %v585
        %v618 = vpack.c.b16 %v588, %v587
        %v619 = vpack.c.b16 %v590, %v589
        %v620 = vpack.c.b16 %v592, %v591
        %v621 = vpack.c.b16 %v594, %v593
        %v622 = vpack.c.b16 %v596, %v595
        %v623 = vpack.c.b16 %v598, %v597
        %v624 = vpack.c.b16 %v600, %v599
        %v625 = vpack.c.b16 %v602, %v601
        %v626 = vpack.c.b16 %v604, %v603
        %v627 = vpack.c.b16 %v606, %v605
        %v628 = vpack.c.b16 %v608, %v607
        %v629 = vpack.c.b16 %v610, %v609
        %v630 = vpack.c.b16 %v612, %v611
        %v631 = vpack.c.b16 %v614, %v613
        %v632 = vpack.c.b16 %v616, %v615
        %v665 = vunpack.c.l.b16 %v530
        %v666 = vunpack.c.l.b16 %v531
        %v667 = vunpack.c.l.b16 %v532
        %v668 = vunpack.c.l.b16 %v533
        %v669 = vunpack.c.l.b16 %v534
        %v670 = vunpack.c.l.b16 %v535
        %v671 = vunpack.c.l.b16 %v536
        %v672 = vunpack.c.l.b16 %v537
        %v673 = vunpack.c.l.b16 %v538
        %v674 = vunpack.c.l.b16 %v539
        %v675 = vunpack.c.l.b16 %v540
        %v676 = vunpack.c.l.b16 %v541
        %v677 = vunpack.c.l.b16 %v542
        %v678 = vunpack.c.l.b16 %v543
        %v679 = vunpack.c.l.b16 %v544
        %v680 = vunpack.c.l.b16 %v545
        %v681 = vpack.c.b16 %v666, %v665
        %v682 = vpack.c.b16 %v668, %v667
        %v683 = vpack.c.b16 %v670, %v669
        %v684 = vpack.c.b16 %v672, %v671
        %v685 = vpack.c.b16 %v674, %v673
        %v686 = vpack.c.b16 %v676, %v675
        %v687 = vpack.c.b16 %v678, %v677
        %v688 = vpack.c.b16 %v680, %v679
        %697 = vmatprep.subr.bf16.mxu0 0
        %698 = vmatpush1.bf16.msra.mxu0 %v681
        %699 = vmatprep.subr.bf16.mxu0 0
        %700 = vmatpush1.bf16.msra.mxu0 %v682
        %701 = vmatprep.subr.bf16.mxu0 0
        %702 = vmatpush1.bf16.msra.mxu0 %v683
        %703 = vmatprep.subr.bf16.mxu0 0
        %704 = vmatpush1.bf16.msra.mxu0 %v684
        %705 = vmatprep.subr.bf16.mxu0 0
        %706 = vmatpush1.bf16.msra.mxu0 %v685
        %707 = vmatprep.subr.bf16.mxu0 0
        %708 = vmatpush1.bf16.msra.mxu0 %v686
        %709 = vmatprep.subr.bf16.mxu0 0
        %710 = vmatpush1.bf16.msra.mxu0 %v687
        %711 = vmatprep.subr.bf16.mxu0 0
        %712 = vmatpush1.bf16.msra.mxu0 %v688
        %713 = vmatprep.subr.bf16.mxu0 0
        %714 = vmatpush1.bf16.msra.mxu0 0
        %715 = vmatprep.subr.bf16.mxu0 0
        %716 = vmatpush1.bf16.msra.mxu0 0
        %717 = vmatprep.subr.bf16.mxu0 0
        %718 = vmatpush1.bf16.msra.mxu0 0
        %719 = vmatprep.subr.bf16.mxu0 0
        %720 = vmatpush1.bf16.msra.mxu0 0
        %721 = vmatprep.subr.bf16.mxu0 0
        %722 = vmatpush1.bf16.msra.mxu0 0
        %723 = vmatprep.subr.bf16.mxu0 0
        %724 = vmatpush1.bf16.msra.mxu0 0
        %725 = vmatprep.subr.bf16.mxu0 0
        %726 = vmatpush1.bf16.msra.mxu0 0
        %727 = vmatprep.subr.bf16.mxu0 0
        %728 = vmatpush1.bf16.msra.mxu0 0
        %729 = vmatprep.mubr.bf16.mxu0 0
        %730 = vmatmul.mubr.bf16.gmra.mrb[0].mxu0 %v617
        %v731 = vpop.f32.mrb[0].mxu0
        %v732 = vadd.f32 %v551, %v731
        %v733 = vpop.f32.mrb[0].mxu0
        %v734 = vpop.f32.mrb[0].mxu0
        %v735 = vadd.f32 %v551, %v734
        %v736 = vpop.f32.mrb[0].mxu0
        %737 = vmatprep.mubr.bf16.mxu0 0
        %738 = vmatmul.mubr.bf16.gmra.mrb[0].mxu0 %v618
        %v739 = vpop.f32.mrb[0].mxu0
        %v740 = vadd.f32 %v551, %v739
        %v741 = vpop.f32.mrb[0].mxu0
        %v742 = vpop.f32.mrb[0].mxu0
        %v743 = vadd.f32 %v551, %v742
        %v744 = vpop.f32.mrb[0].mxu0
        %745 = vmatprep.mubr.bf16.mxu0 0
        %746 = vmatmul.mubr.bf16.gmra.mrb[0].mxu0 %v619
        %v747 = vpop.f32.mrb[0].mxu0
        %v748 = vadd.f32 %v551, %v747
        %v749 = vpop.f32.mrb[0].mxu0
        %v750 = vpop.f32.mrb[0].mxu0
        %v751 = vadd.f32 %v551, %v750
        %v752 = vpop.f32.mrb[0].mxu0
        %753 = vmatprep.mubr.bf16.mxu0 0
        %754 = vmatmul.mubr.bf16.gmra.mrb[0].mxu0 %v620
        %v755 = vpop.f32.mrb[0].mxu0
        %v756 = vadd.f32 %v551, %v755
        %v757 = vpop.f32.mrb[0].mxu0
        %v758 = vpop.f32.mrb[0].mxu0
        %v759 = vadd.f32 %v551, %v758
        %v760 = vpop.f32.mrb[0].mxu0
        %761 = vmatprep.mubr.bf16.mxu0 0
        %762 = vmatmul.mubr.bf16.gmra.mrb[0].mxu0 %v621
        %v763 = vpop.f32.mrb[0].mxu0
        %v764 = vadd.f32 %v551, %v763
        %v765 = vpop.f32.mrb[0].mxu0
        %v766 = vpop.f32.mrb[0].mxu0
        %v767 = vadd.f32 %v551, %v766
        %v768 = vpop.f32.mrb[0].mxu0
        %769 = vmatprep.mubr.bf16.mxu0 0
        %770 = vmatmul.mubr.bf16.gmra.mrb[0].mxu0 %v622
        %v771 = vpop.f32.mrb[0].mxu0
        %v772 = vadd.f32 %v551, %v771
        %v773 = vpop.f32.mrb[0].mxu0
        %v774 = vpop.f32.mrb[0].mxu0
        %v775 = vadd.f32 %v551, %v774
        %v776 = vpop.f32.mrb[0].mxu0
        %777 = vmatprep.mubr.bf16.mxu0 0
        %778 = vmatmul.mubr.bf16.gmra.mrb[0].mxu0 %v623
        %v779 = vpop.f32.mrb[0].mxu0
        %v780 = vadd.f32 %v551, %v779
        %v781 = vpop.f32.mrb[0].mxu0
        %v782 = vpop.f32.mrb[0].mxu0
        %v783 = vadd.f32 %v551, %v782
        %v784 = vpop.f32.mrb[0].mxu0
        %785 = vmatprep.mubr.bf16.mxu0 0
        %786 = vmatmul.mubr.bf16.gmra.mrb[0].mxu0 %v624
        %v787 = vpop.f32.mrb[0].mxu0
        %v788 = vadd.f32 %v551, %v787
        %v789 = vpop.f32.mrb[0].mxu0
        %v790 = vpop.f32.mrb[0].mxu0
        %v791 = vadd.f32 %v551, %v790
        %v792 = vpop.f32.mrb[0].mxu0
        %793 = vmatprep.mubr.bf16.mxu0 0
        %794 = vmatmul.mubr.bf16.gmra.mrb[0].mxu0 %v625
        %v795 = vpop.f32.mrb[0].mxu0
        %v796 = vadd.f32 %v551, %v795
        %v797 = vpop.f32.mrb[0].mxu0
        %v798 = vpop.f32.mrb[0].mxu0
        %v799 = vadd.f32 %v551, %v798
        %v800 = vpop.f32.mrb[0].mxu0
        %801 = vmatprep.mubr.bf16.mxu0 0
        %802 = vmatmul.mubr.bf16.gmra.mrb[0].mxu0 %v626
        %v803 = vpop.f32.mrb[0].mxu0
        %v804 = vadd.f32 %v551, %v803
        %v805 = vpop.f32.mrb[0].mxu0
        %v806 = vpop.f32.mrb[0].mxu0
        %v807 = vadd.f32 %v551, %v806
        %v808 = vpop.f32.mrb[0].mxu0
        %809 = vmatprep.mubr.bf16.mxu0 0
        %810 = vmatmul.mubr.bf16.gmra.mrb[0].mxu0 %v627
        %v811 = vpop.f32.mrb[0].mxu0
        %v812 = vadd.f32 %v551, %v811
        %v813 = vpop.f32.mrb[0].mxu0
        %v814 = vpop.f32.mrb[0].mxu0
        %v815 = vadd.f32 %v551, %v814
        %v816 = vpop.f32.mrb[0].mxu0
        %817 = vmatprep.mubr.bf16.mxu0 0
        %818 = vmatmul.mubr.bf16.gmra.mrb[0].mxu0 %v628
        %v819 = vpop.f32.mrb[0].mxu0
        %v820 = vadd.f32 %v551, %v819
        %v821 = vpop.f32.mrb[0].mxu0
        %v822 = vpop.f32.mrb[0].mxu0
        %v823 = vadd.f32 %v551, %v822
        %v824 = vpop.f32.mrb[0].mxu0
        %825 = vmatprep.mubr.bf16.mxu0 0
        %826 = vmatmul.mubr.bf16.gmra.mrb[0].mxu0 %v629
        %v827 = vpop.f32.mrb[0].mxu0
        %v828 = vadd.f32 %v551, %v827
        %v829 = vpop.f32.mrb[0].mxu0
        %v830 = vpop.f32.mrb[0].mxu0
        %v831 = vadd.f32 %v551, %v830
        %v832 = vpop.f32.mrb[0].mxu0
        %833 = vmatprep.mubr.bf16.mxu0 0
        %834 = vmatmul.mubr.bf16.gmra.mrb[0].mxu0 %v630
        %v835 = vpop.f32.mrb[0].mxu0
        %v836 = vadd.f32 %v551, %v835
        %v837 = vpop.f32.mrb[0].mxu0
        %v838 = vpop.f32.mrb[0].mxu0
        %v839 = vadd.f32 %v551, %v838
        %v840 = vpop.f32.mrb[0].mxu0
        %841 = vmatprep.mubr.bf16.mxu0 0
        %842 = vmatmul.mubr.bf16.gmra.mrb[0].mxu0 %v631
        %v843 = vpop.f32.mrb[0].mxu0
        %v844 = vadd.f32 %v551, %v843
        %v845 = vpop.f32.mrb[0].mxu0
        %v846 = vpop.f32.mrb[0].mxu0
        %v847 = vadd.f32 %v551, %v846
        %v848 = vpop.f32.mrb[0].mxu0
        %849 = vmatprep.mubr.bf16.mxu0 0
        %850 = vmatmul.mubr.bf16.gmra.mrb[0].mxu0 %v632
        %v851 = vpop.f32.mrb[0].mxu0
        %v852 = vadd.f32 %v551, %v851
        %v853 = vpop.f32.mrb[0].mxu0
        %v854 = vpop.f32.mrb[0].mxu0
        %v855 = vadd.f32 %v551, %v854
        %v856 = vpop.f32.mrb[0].mxu0
        %857 = vdwg.mxu0
        %v858 = vmax.f32 %v732, 0.0
        %v859 = vmax.f32 %v735, 0.0
        %v860 = vmax.f32 %v740, 0.0
        %v861 = vmax.f32 %v743, 0.0
        %v862 = vmax.f32 %v748, 0.0
        %v863 = vmax.f32 %v751, 0.0
        %v864 = vmax.f32 %v756, 0.0
        %v865 = vmax.f32 %v759, 0.0
        %v866 = vmax.f32 %v764, 0.0
        %v867 = vmax.f32 %v767, 0.0
        %v868 = vmax.f32 %v772, 0.0
        %v869 = vmax.f32 %v775, 0.0
        %v870 = vmax.f32 %v780, 0.0
        %v871 = vmax.f32 %v783, 0.0
        %v872 = vmax.f32 %v788, 0.0
        %v873 = vmax.f32 %v791, 0.0
        %v874 = vmax.f32 %v796, 0.0
        %v875 = vmax.f32 %v799, 0.0
        %v876 = vmax.f32 %v804, 0.0
        %v877 = vmax.f32 %v807, 0.0
        %v878 = vmax.f32 %v812, 0.0
        %v879 = vmax.f32 %v815, 0.0
        %v880 = vmax.f32 %v820, 0.0
        %v881 = vmax.f32 %v823, 0.0
        %v882 = vmax.f32 %v828, 0.0
        %v883 = vmax.f32 %v831, 0.0
        %v884 = vmax.f32 %v836, 0.0
        %v885 = vmax.f32 %v839, 0.0
        %v886 = vmax.f32 %v844, 0.0
        %v887 = vmax.f32 %v847, 0.0
        %v888 = vmax.f32 %v852, 0.0
        %v889 = vmax.f32 %v855, 0.0
        %vm890 = vcmask 130048
        %891 = vst.msk [vmem:[%s496] sm:$0xff] %vm890, %v858
        %892 = vst.msk [vmem:[%s496 + $0x8] sm:$0xff] %vm890, %v859
        %893 = vst.msk [vmem:[%s496 + $0x10] sm:$0xff] %vm890, %v860
        %894 = vst.msk [vmem:[%s496 + $0x18] sm:$0xff] %vm890, %v861
        %895 = vst.msk [vmem:[%s496 + $0x20] sm:$0xff] %vm890, %v862
        %896 = vst.msk [vmem:[%s496 + $0x28] sm:$0xff] %vm890, %v863
        %897 = vst.msk [vmem:[%s496 + $0x30] sm:$0xff] %vm890, %v864
        %898 = vst.msk [vmem:[%s496 + $0x38] sm:$0xff] %vm890, %v865
        %899 = vst.msk [vmem:[%s496 + $0x40] sm:$0xff] %vm890, %v866
        %900 = vst.msk [vmem:[%s496 + $0x48] sm:$0xff] %vm890, %v867
        %901 = vst.msk [vmem:[%s496 + $0x50] sm:$0xff] %vm890, %v868
        %902 = vst.msk [vmem:[%s496 + $0x58] sm:$0xff] %vm890, %v869
        %903 = vst.msk [vmem:[%s496 + $0x60] sm:$0xff] %vm890, %v870
        %904 = vst.msk [vmem:[%s496 + $0x68] sm:$0xff] %vm890, %v871
        %905 = vst.msk [vmem:[%s496 + $0x70] sm:$0xff] %vm890, %v872
        %906 = vst.msk [vmem:[%s496 + $0x78] sm:$0xff] %vm890, %v873
        %907 = vst.msk [vmem:[%s496 + $0x80] sm:$0xff] %vm890, %v874
        %908 = vst.msk [vmem:[%s496 + $0x88] sm:$0xff] %vm890, %v875
        %909 = vst.msk [vmem:[%s496 + $0x90] sm:$0xff] %vm890, %v876
        %910 = vst.msk [vmem:[%s496 + $0x98] sm:$0xff] %vm890, %v877
        %911 = vst.msk [vmem:[%s496 + $0xa0] sm:$0xff] %vm890, %v878
        %912 = vst.msk [vmem:[%s496 + $0xa8] sm:$0xff] %vm890, %v879
        %913 = vst.msk [vmem:[%s496 + $0xb0] sm:$0xff] %vm890, %v880
        %914 = vst.msk [vmem:[%s496 + $0xb8] sm:$0xff] %vm890, %v881
        %915 = vst.msk [vmem:[%s496 + $0xc0] sm:$0xff] %vm890, %v882
        %916 = vst.msk [vmem:[%s496 + $0xc8] sm:$0xff] %vm890, %v883
        %917 = vst.msk [vmem:[%s496 + $0xd0] sm:$0xff] %vm890, %v884
        %918 = vst.msk [vmem:[%s496 + $0xd8] sm:$0xff] %vm890, %v885
        %919 = vst.msk [vmem:[%s496 + $0xe0] sm:$0xff] %vm890, %v886
        %920 = vst.msk [vmem:[%s496 + $0xe8] sm:$0xff] %vm890, %v887
        %921 = vst.msk [vmem:[%s496 + $0xf0] sm:$0xff] %vm890, %v888
        %922 = vst.msk [vmem:[%s496 + $0xf8] sm:$0xff] %vm890, %v889
        %v955 = vcombine.high %v858, %v858
        %v957 = vunpack.c.l.s4 1983009808
        %v958 = vunpack.c.0.s8 %v957
        %v959 = vlaneseq
        %v960 = vshrl.u32 %v959, 7
        %v961 = vsub.s32 %v958, %v960
        %v962 = vrot.slane %v858, %v961
        %v964 = vunpack.c.l.s4 1983009808
        %v965 = vunpack.c.0.s8 %v964
        %v966 = vlaneseq
        %v967 = vshrl.u32 %v966, 7
        %v968 = vsub.s32 %v965, %v967
        %v969 = vrot.slane %v955, %v968
        %v970 = vcombine.high %v962, %v962
        %v971 = vcombine.high %v969, %v969
        %v972 = vcombine.high %v859, %v859
        %v974 = vunpack.c.l.s4 1983009808
        %v975 = vunpack.c.0.s8 %v974
        %v976 = vlaneseq
        %v977 = vshrl.u32 %v976, 7
        %v978 = vsub.s32 %v975, %v977
        %v979 = vrot.slane %v859, %v978
        %v981 = vunpack.c.l.s4 1983009808
        %v982 = vunpack.c.0.s8 %v981
        %v983 = vlaneseq
        %v984 = vshrl.u32 %v983, 7
        %v985 = vsub.s32 %v982, %v984
        %v986 = vrot.slane %v972, %v985
        %v987 = vcombine.high %v979, %v979
        %v988 = vcombine.high %v986, %v986
        %v989 = vcombine.high %v860, %v860
        %v991 = vunpack.c.l.s4 1983009808
        %v992 = vunpack.c.0.s8 %v991
        %v993 = vlaneseq
        %v994 = vshrl.u32 %v993, 7
        %v995 = vsub.s32 %v992, %v994
        %v996 = vrot.slane %v860, %v995
        %v998 = vunpack.c.l.s4 1983009808
        %v999 = vunpack.c.0.s8 %v998
        %v1000 = vlaneseq
        %v1001 = vshrl.u32 %v1000, 7
        %v1002 = vsub.s32 %v999, %v1001
        %v1003 = vrot.slane %v989, %v1002
        %v1004 = vcombine.high %v996, %v996
        %v1005 = vcombine.high %v1003, %v1003
        %v1006 = vcombine.high %v861, %v861
        %v1008 = vunpack.c.l.s4 1983009808
        %v1009 = vunpack.c.0.s8 %v1008
        %v1010 = vlaneseq
        %v1011 = vshrl.u32 %v1010, 7
        %v1012 = vsub.s32 %v1009, %v1011
        %v1013 = vrot.slane %v861, %v1012
        %v1015 = vunpack.c.l.s4 1983009808
        %v1016 = vunpack.c.0.s8 %v1015
        %v1017 = vlaneseq
        %v1018 = vshrl.u32 %v1017, 7
        %v1019 = vsub.s32 %v1016, %v1018
        %v1020 = vrot.slane %v1006, %v1019
        %v1021 = vcombine.high %v1013, %v1013
        %v1022 = vcombine.high %v1020, %v1020
        %v1023 = vcombine.high %v862, %v862
        %v1025 = vunpack.c.l.s4 1983009808
        %v1026 = vunpack.c.0.s8 %v1025
        %v1027 = vlaneseq
        %v1028 = vshrl.u32 %v1027, 7
        %v1029 = vsub.s32 %v1026, %v1028
        %v1030 = vrot.slane %v862, %v1029
        %v1032 = vunpack.c.l.s4 1983009808
        %v1033 = vunpack.c.0.s8 %v1032
        %v1034 = vlaneseq
        %v1035 = vshrl.u32 %v1034, 7
        %v1036 = vsub.s32 %v1033, %v1035
        %v1037 = vrot.slane %v1023, %v1036
        %v1038 = vcombine.high %v1030, %v1030
        %v1039 = vcombine.high %v1037, %v1037
        %v1040 = vcombine.high %v863, %v863
        %v1042 = vunpack.c.l.s4 1983009808
        %v1043 = vunpack.c.0.s8 %v1042
        %v1044 = vlaneseq
        %v1045 = vshrl.u32 %v1044, 7
        %v1046 = vsub.s32 %v1043, %v1045
        %v1047 = vrot.slane %v863, %v1046
        %v1049 = vunpack.c.l.s4 1983009808
        %v1050 = vunpack.c.0.s8 %v1049
        %v1051 = vlaneseq
        %v1052 = vshrl.u32 %v1051, 7
        %v1053 = vsub.s32 %v1050, %v1052
        %v1054 = vrot.slane %v1040, %v1053
        %v1055 = vcombine.high %v1047, %v1047
        %v1056 = vcombine.high %v1054, %v1054
        %v1057 = vcombine.high %v864, %v864
        %v1059 = vunpack.c.l.s4 1983009808
        %v1060 = vunpack.c.0.s8 %v1059
        %v1061 = vlaneseq
        %v1062 = vshrl.u32 %v1061, 7
        %v1063 = vsub.s32 %v1060, %v1062
        %v1064 = vrot.slane %v864, %v1063
        %v1066 = vunpack.c.l.s4 1983009808
        %v1067 = vunpack.c.0.s8 %v1066
        %v1068 = vlaneseq
        %v1069 = vshrl.u32 %v1068, 7
        %v1070 = vsub.s32 %v1067, %v1069
        %v1071 = vrot.slane %v1057, %v1070
        %v1072 = vcombine.high %v1064, %v1064
        %v1073 = vcombine.high %v1071, %v1071
        %v1074 = vcombine.high %v865, %v865
        %v1076 = vunpack.c.l.s4 1983009808
        %v1077 = vunpack.c.0.s8 %v1076
        %v1078 = vlaneseq
        %v1079 = vshrl.u32 %v1078, 7
        %v1080 = vsub.s32 %v1077, %v1079
        %v1081 = vrot.slane %v865, %v1080
        %v1083 = vunpack.c.l.s4 1983009808
        %v1084 = vunpack.c.0.s8 %v1083
        %v1085 = vlaneseq
        %v1086 = vshrl.u32 %v1085, 7
        %v1087 = vsub.s32 %v1084, %v1086
        %v1088 = vrot.slane %v1074, %v1087
        %v1089 = vcombine.high %v1081, %v1081
        %v1090 = vcombine.high %v1088, %v1088
        %v1091 = vcombine.high %v866, %v866
        %v1093 = vunpack.c.l.s4 1983009808
        %v1094 = vunpack.c.0.s8 %v1093
        %v1095 = vlaneseq
        %v1096 = vshrl.u32 %v1095, 7
        %v1097 = vsub.s32 %v1094, %v1096
        %v1098 = vrot.slane %v866, %v1097
        %v1100 = vunpack.c.l.s4 1983009808
        %v1101 = vunpack.c.0.s8 %v1100
        %v1102 = vlaneseq
        %v1103 = vshrl.u32 %v1102, 7
        %v1104 = vsub.s32 %v1101, %v1103
        %v1105 = vrot.slane %v1091, %v1104
        %v1106 = vcombine.high %v1098, %v1098
        %v1107 = vcombine.high %v1105, %v1105
        %v1108 = vcombine.high %v867, %v867
        %v1110 = vunpack.c.l.s4 1983009808
        %v1111 = vunpack.c.0.s8 %v1110
        %v1112 = vlaneseq
        %v1113 = vshrl.u32 %v1112, 7
        %v1114 = vsub.s32 %v1111, %v1113
        %v1115 = vrot.slane %v867, %v1114
        %v1117 = vunpack.c.l.s4 1983009808
        %v1118 = vunpack.c.0.s8 %v1117
        %v1119 = vlaneseq
        %v1120 = vshrl.u32 %v1119, 7
        %v1121 = vsub.s32 %v1118, %v1120
        %v1122 = vrot.slane %v1108, %v1121
        %v1123 = vcombine.high %v1115, %v1115
        %v1124 = vcombine.high %v1122, %v1122
        %v1125 = vcombine.high %v868, %v868
        %v1127 = vunpack.c.l.s4 1983009808
        %v1128 = vunpack.c.0.s8 %v1127
        %v1129 = vlaneseq
        %v1130 = vshrl.u32 %v1129, 7
        %v1131 = vsub.s32 %v1128, %v1130
        %v1132 = vrot.slane %v868, %v1131
        %v1134 = vunpack.c.l.s4 1983009808
        %v1135 = vunpack.c.0.s8 %v1134
        %v1136 = vlaneseq
        %v1137 = vshrl.u32 %v1136, 7
        %v1138 = vsub.s32 %v1135, %v1137
        %v1139 = vrot.slane %v1125, %v1138
        %v1140 = vcombine.high %v1132, %v1132
        %v1141 = vcombine.high %v1139, %v1139
        %v1142 = vcombine.high %v869, %v869
        %v1144 = vunpack.c.l.s4 1983009808
        %v1145 = vunpack.c.0.s8 %v1144
        %v1146 = vlaneseq
        %v1147 = vshrl.u32 %v1146, 7
        %v1148 = vsub.s32 %v1145, %v1147
        %v1149 = vrot.slane %v869, %v1148
        %v1151 = vunpack.c.l.s4 1983009808
        %v1152 = vunpack.c.0.s8 %v1151
        %v1153 = vlaneseq
        %v1154 = vshrl.u32 %v1153, 7
        %v1155 = vsub.s32 %v1152, %v1154
        %v1156 = vrot.slane %v1142, %v1155
        %v1157 = vcombine.high %v1149, %v1149
        %v1158 = vcombine.high %v1156, %v1156
        %v1159 = vcombine.high %v870, %v870
        %v1161 = vunpack.c.l.s4 1983009808
        %v1162 = vunpack.c.0.s8 %v1161
        %v1163 = vlaneseq
        %v1164 = vshrl.u32 %v1163, 7
        %v1165 = vsub.s32 %v1162, %v1164
        %v1166 = vrot.slane %v870, %v1165
        %v1168 = vunpack.c.l.s4 1983009808
        %v1169 = vunpack.c.0.s8 %v1168
        %v1170 = vlaneseq
        %v1171 = vshrl.u32 %v1170, 7
        %v1172 = vsub.s32 %v1169, %v1171
        %v1173 = vrot.slane %v1159, %v1172
        %v1174 = vcombine.high %v1166, %v1166
        %v1175 = vcombine.high %v1173, %v1173
        %v1176 = vcombine.high %v871, %v871
        %v1178 = vunpack.c.l.s4 1983009808
        %v1179 = vunpack.c.0.s8 %v1178
        %v1180 = vlaneseq
        %v1181 = vshrl.u32 %v1180, 7
        %v1182 = vsub.s32 %v1179, %v1181
        %v1183 = vrot.slane %v871, %v1182
        %v1185 = vunpack.c.l.s4 1983009808
        %v1186 = vunpack.c.0.s8 %v1185
        %v1187 = vlaneseq
        %v1188 = vshrl.u32 %v1187, 7
        %v1189 = vsub.s32 %v1186, %v1188
        %v1190 = vrot.slane %v1176, %v1189
        %v1191 = vcombine.high %v1183, %v1183
        %v1192 = vcombine.high %v1190, %v1190
        %v1193 = vcombine.high %v872, %v872
        %v1195 = vunpack.c.l.s4 1983009808
        %v1196 = vunpack.c.0.s8 %v1195
        %v1197 = vlaneseq
        %v1198 = vshrl.u32 %v1197, 7
        %v1199 = vsub.s32 %v1196, %v1198
        %v1200 = vrot.slane %v872, %v1199
        %v1202 = vunpack.c.l.s4 1983009808
        %v1203 = vunpack.c.0.s8 %v1202
        %v1204 = vlaneseq
        %v1205 = vshrl.u32 %v1204, 7
        %v1206 = vsub.s32 %v1203, %v1205
        %v1207 = vrot.slane %v1193, %v1206
        %v1208 = vcombine.high %v1200, %v1200
        %v1209 = vcombine.high %v1207, %v1207
        %v1210 = vcombine.high %v873, %v873
        %v1212 = vunpack.c.l.s4 1983009808
        %v1213 = vunpack.c.0.s8 %v1212
        %v1214 = vlaneseq
        %v1215 = vshrl.u32 %v1214, 7
        %v1216 = vsub.s32 %v1213, %v1215
        %v1217 = vrot.slane %v873, %v1216
        %v1219 = vunpack.c.l.s4 1983009808
        %v1220 = vunpack.c.0.s8 %v1219
        %v1221 = vlaneseq
        %v1222 = vshrl.u32 %v1221, 7
        %v1223 = vsub.s32 %v1220, %v1222
        %v1224 = vrot.slane %v1210, %v1223
        %v1225 = vcombine.high %v1217, %v1217
        %v1226 = vcombine.high %v1224, %v1224
        %v1227 = vcombine.high %v874, %v874
        %v1229 = vunpack.c.l.s4 1983009808
        %v1230 = vunpack.c.0.s8 %v1229
        %v1231 = vlaneseq
        %v1232 = vshrl.u32 %v1231, 7
        %v1233 = vsub.s32 %v1230, %v1232
        %v1234 = vrot.slane %v874, %v1233
        %v1236 = vunpack.c.l.s4 1983009808
        %v1237 = vunpack.c.0.s8 %v1236
        %v1238 = vlaneseq
        %v1239 = vshrl.u32 %v1238, 7
        %v1240 = vsub.s32 %v1237, %v1239
        %v1241 = vrot.slane %v1227, %v1240
        %v1242 = vcombine.high %v1234, %v1234
        %v1243 = vcombine.high %v1241, %v1241
        %v1244 = vcombine.high %v875, %v875
        %v1246 = vunpack.c.l.s4 1983009808
        %v1247 = vunpack.c.0.s8 %v1246
        %v1248 = vlaneseq
        %v1249 = vshrl.u32 %v1248, 7
        %v1250 = vsub.s32 %v1247, %v1249
        %v1251 = vrot.slane %v875, %v1250
        %v1253 = vunpack.c.l.s4 1983009808
        %v1254 = vunpack.c.0.s8 %v1253
        %v1255 = vlaneseq
        %v1256 = vshrl.u32 %v1255, 7
        %v1257 = vsub.s32 %v1254, %v1256
        %v1258 = vrot.slane %v1244, %v1257
        %v1259 = vcombine.high %v1251, %v1251
        %v1260 = vcombine.high %v1258, %v1258
        %v1261 = vcombine.high %v876, %v876
        %v1263 = vunpack.c.l.s4 1983009808
        %v1264 = vunpack.c.0.s8 %v1263
        %v1265 = vlaneseq
        %v1266 = vshrl.u32 %v1265, 7
        %v1267 = vsub.s32 %v1264, %v1266
        %v1268 = vrot.slane %v876, %v1267
        %v1270 = vunpack.c.l.s4 1983009808
        %v1271 = vunpack.c.0.s8 %v1270
        %v1272 = vlaneseq
        %v1273 = vshrl.u32 %v1272, 7
        %v1274 = vsub.s32 %v1271, %v1273
        %v1275 = vrot.slane %v1261, %v1274
        %v1276 = vcombine.high %v1268, %v1268
        %v1277 = vcombine.high %v1275, %v1275
        %v1278 = vcombine.high %v877, %v877
        %v1280 = vunpack.c.l.s4 1983009808
        %v1281 = vunpack.c.0.s8 %v1280
        %v1282 = vlaneseq
        %v1283 = vshrl.u32 %v1282, 7
        %v1284 = vsub.s32 %v1281, %v1283
        %v1285 = vrot.slane %v877, %v1284
        %v1287 = vunpack.c.l.s4 1983009808
        %v1288 = vunpack.c.0.s8 %v1287
        %v1289 = vlaneseq
        %v1290 = vshrl.u32 %v1289, 7
        %v1291 = vsub.s32 %v1288, %v1290
        %v1292 = vrot.slane %v1278, %v1291
        %v1293 = vcombine.high %v1285, %v1285
        %v1294 = vcombine.high %v1292, %v1292
        %v1295 = vcombine.high %v878, %v878
        %v1297 = vunpack.c.l.s4 1983009808
        %v1298 = vunpack.c.0.s8 %v1297
        %v1299 = vlaneseq
        %v1300 = vshrl.u32 %v1299, 7
        %v1301 = vsub.s32 %v1298, %v1300
        %v1302 = vrot.slane %v878, %v1301
        %v1304 = vunpack.c.l.s4 1983009808
        %v1305 = vunpack.c.0.s8 %v1304
        %v1306 = vlaneseq
        %v1307 = vshrl.u32 %v1306, 7
        %v1308 = vsub.s32 %v1305, %v1307
        %v1309 = vrot.slane %v1295, %v1308
        %v1310 = vcombine.high %v1302, %v1302
        %v1311 = vcombine.high %v1309, %v1309
        %v1312 = vcombine.high %v879, %v879
        %v1314 = vunpack.c.l.s4 1983009808
        %v1315 = vunpack.c.0.s8 %v1314
        %v1316 = vlaneseq
        %v1317 = vshrl.u32 %v1316, 7
        %v1318 = vsub.s32 %v1315, %v1317
        %v1319 = vrot.slane %v879, %v1318
        %v1321 = vunpack.c.l.s4 1983009808
        %v1322 = vunpack.c.0.s8 %v1321
        %v1323 = vlaneseq
        %v1324 = vshrl.u32 %v1323, 7
        %v1325 = vsub.s32 %v1322, %v1324
        %v1326 = vrot.slane %v1312, %v1325
        %v1327 = vcombine.high %v1319, %v1319
        %v1328 = vcombine.high %v1326, %v1326
        %v1329 = vcombine.high %v880, %v880
        %v1331 = vunpack.c.l.s4 1983009808
        %v1332 = vunpack.c.0.s8 %v1331
        %v1333 = vlaneseq
        %v1334 = vshrl.u32 %v1333, 7
        %v1335 = vsub.s32 %v1332, %v1334
        %v1336 = vrot.slane %v880, %v1335
        %v1338 = vunpack.c.l.s4 1983009808
        %v1339 = vunpack.c.0.s8 %v1338
        %v1340 = vlaneseq
        %v1341 = vshrl.u32 %v1340, 7
        %v1342 = vsub.s32 %v1339, %v1341
        %v1343 = vrot.slane %v1329, %v1342
        %v1344 = vcombine.high %v1336, %v1336
        %v1345 = vcombine.high %v1343, %v1343
        %v1346 = vcombine.high %v881, %v881
        %v1348 = vunpack.c.l.s4 1983009808
        %v1349 = vunpack.c.0.s8 %v1348
        %v1350 = vlaneseq
        %v1351 = vshrl.u32 %v1350, 7
        %v1352 = vsub.s32 %v1349, %v1351
        %v1353 = vrot.slane %v881, %v1352
        %v1355 = vunpack.c.l.s4 1983009808
        %v1356 = vunpack.c.0.s8 %v1355
        %v1357 = vlaneseq
        %v1358 = vshrl.u32 %v1357, 7
        %v1359 = vsub.s32 %v1356, %v1358
        %v1360 = vrot.slane %v1346, %v1359
        %v1361 = vcombine.high %v1353, %v1353
        %v1362 = vcombine.high %v1360, %v1360
        %v1363 = vcombine.high %v882, %v882
        %v1365 = vunpack.c.l.s4 1983009808
        %v1366 = vunpack.c.0.s8 %v1365
        %v1367 = vlaneseq
        %v1368 = vshrl.u32 %v1367, 7
        %v1369 = vsub.s32 %v1366, %v1368
        %v1370 = vrot.slane %v882, %v1369
        %v1372 = vunpack.c.l.s4 1983009808
        %v1373 = vunpack.c.0.s8 %v1372
        %v1374 = vlaneseq
        %v1375 = vshrl.u32 %v1374, 7
        %v1376 = vsub.s32 %v1373, %v1375
        %v1377 = vrot.slane %v1363, %v1376
        %v1378 = vcombine.high %v1370, %v1370
        %v1379 = vcombine.high %v1377, %v1377
        %v1380 = vcombine.high %v883, %v883
        %v1382 = vunpack.c.l.s4 1983009808
        %v1383 = vunpack.c.0.s8 %v1382
        %v1384 = vlaneseq
        %v1385 = vshrl.u32 %v1384, 7
        %v1386 = vsub.s32 %v1383, %v1385
        %v1387 = vrot.slane %v883, %v1386
        %v1389 = vunpack.c.l.s4 1983009808
        %v1390 = vunpack.c.0.s8 %v1389
        %v1391 = vlaneseq
        %v1392 = vshrl.u32 %v1391, 7
        %v1393 = vsub.s32 %v1390, %v1392
        %v1394 = vrot.slane %v1380, %v1393
        %v1395 = vcombine.high %v1387, %v1387
        %v1396 = vcombine.high %v1394, %v1394
        %v1397 = vcombine.high %v884, %v884
        %v1399 = vunpack.c.l.s4 1983009808
        %v1400 = vunpack.c.0.s8 %v1399
        %v1401 = vlaneseq
        %v1402 = vshrl.u32 %v1401, 7
        %v1403 = vsub.s32 %v1400, %v1402
        %v1404 = vrot.slane %v884, %v1403
        %v1406 = vunpack.c.l.s4 1983009808
        %v1407 = vunpack.c.0.s8 %v1406
        %v1408 = vlaneseq
        %v1409 = vshrl.u32 %v1408, 7
        %v1410 = vsub.s32 %v1407, %v1409
        %v1411 = vrot.slane %v1397, %v1410
        %v1412 = vcombine.high %v1404, %v1404
        %v1413 = vcombine.high %v1411, %v1411
        %v1414 = vcombine.high %v885, %v885
        %v1416 = vunpack.c.l.s4 1983009808
        %v1417 = vunpack.c.0.s8 %v1416
        %v1418 = vlaneseq
        %v1419 = vshrl.u32 %v1418, 7
        %v1420 = vsub.s32 %v1417, %v1419
        %v1421 = vrot.slane %v885, %v1420
        %v1423 = vunpack.c.l.s4 1983009808
        %v1424 = vunpack.c.0.s8 %v1423
        %v1425 = vlaneseq
        %v1426 = vshrl.u32 %v1425, 7
        %v1427 = vsub.s32 %v1424, %v1426
        %v1428 = vrot.slane %v1414, %v1427
        %v1429 = vcombine.high %v1421, %v1421
        %v1430 = vcombine.high %v1428, %v1428
        %v1431 = vcombine.high %v886, %v886
        %v1433 = vunpack.c.l.s4 1983009808
        %v1434 = vunpack.c.0.s8 %v1433
        %v1435 = vlaneseq
        %v1436 = vshrl.u32 %v1435, 7
        %v1437 = vsub.s32 %v1434, %v1436
        %v1438 = vrot.slane %v886, %v1437
        %v1440 = vunpack.c.l.s4 1983009808
        %v1441 = vunpack.c.0.s8 %v1440
        %v1442 = vlaneseq
        %v1443 = vshrl.u32 %v1442, 7
        %v1444 = vsub.s32 %v1441, %v1443
        %v1445 = vrot.slane %v1431, %v1444
        %v1446 = vcombine.high %v1438, %v1438
        %v1447 = vcombine.high %v1445, %v1445
        %v1448 = vcombine.high %v887, %v887
        %v1450 = vunpack.c.l.s4 1983009808
        %v1451 = vunpack.c.0.s8 %v1450
        %v1452 = vlaneseq
        %v1453 = vshrl.u32 %v1452, 7
        %v1454 = vsub.s32 %v1451, %v1453
        %v1455 = vrot.slane %v887, %v1454
        %v1457 = vunpack.c.l.s4 1983009808
        %v1458 = vunpack.c.0.s8 %v1457
        %v1459 = vlaneseq
        %v1460 = vshrl.u32 %v1459, 7
        %v1461 = vsub.s32 %v1458, %v1460
        %v1462 = vrot.slane %v1448, %v1461
        %v1463 = vcombine.high %v1455, %v1455
        %v1464 = vcombine.high %v1462, %v1462
        %v1465 = vcombine.high %v888, %v888
        %v1467 = vunpack.c.l.s4 1983009808
        %v1468 = vunpack.c.0.s8 %v1467
        %v1469 = vlaneseq
        %v1470 = vshrl.u32 %v1469, 7
        %v1471 = vsub.s32 %v1468, %v1470
        %v1472 = vrot.slane %v888, %v1471
        %v1474 = vunpack.c.l.s4 1983009808
        %v1475 = vunpack.c.0.s8 %v1474
        %v1476 = vlaneseq
        %v1477 = vshrl.u32 %v1476, 7
        %v1478 = vsub.s32 %v1475, %v1477
        %v1479 = vrot.slane %v1465, %v1478
        %v1480 = vcombine.high %v1472, %v1472
        %v1481 = vcombine.high %v1479, %v1479
        %v1482 = vcombine.high %v889, %v889
        %v1484 = vunpack.c.l.s4 1983009808
        %v1485 = vunpack.c.0.s8 %v1484
        %v1486 = vlaneseq
        %v1487 = vshrl.u32 %v1486, 7
        %v1488 = vsub.s32 %v1485, %v1487
        %v1489 = vrot.slane %v889, %v1488
        %v1491 = vunpack.c.l.s4 1983009808
        %v1492 = vunpack.c.0.s8 %v1491
        %v1493 = vlaneseq
        %v1494 = vshrl.u32 %v1493, 7
        %v1495 = vsub.s32 %v1492, %v1494
        %v1496 = vrot.slane %v1482, %v1495
        %v1497 = vcombine.high %v1489, %v1489
        %v1498 = vcombine.high %v1496, %v1496
        %vm1627 = vcmask 123904
        %v1628 = vsel %vm1627, %v962, -inf
        %v1629 = vrot.slane %v1628, 4
        %v1630 = vmax.f32 %v1628, %v1629
        %v1631 = vrot.slane %v1630, 2
        %v1632 = vmax.f32 %v1630, %v1631
        %v1633 = vrot.slane %v1632, 1
        %v1634 = vmax.f32 %v1632, %v1633
        %v1635 = vsel %vm1627, %v970, -inf
        %v1636 = vrot.slane %v1635, 4
        %v1637 = vmax.f32 %v1635, %v1636
        %v1638 = vrot.slane %v1637, 2
        %v1639 = vmax.f32 %v1637, %v1638
        %v1640 = vrot.slane %v1639, 1
        %v1641 = vmax.f32 %v1639, %v1640
        %v1642 = vsel %vm1627, %v969, -inf
        %v1643 = vrot.slane %v1642, 4
        %v1644 = vmax.f32 %v1642, %v1643
        %v1645 = vrot.slane %v1644, 2
        %v1646 = vmax.f32 %v1644, %v1645
        %v1647 = vrot.slane %v1646, 1
        %v1648 = vmax.f32 %v1646, %v1647
        %v1649 = vsel %vm1627, %v971, -inf
        %v1650 = vrot.slane %v1649, 4
        %v1651 = vmax.f32 %v1649, %v1650
        %v1652 = vrot.slane %v1651, 2
        %v1653 = vmax.f32 %v1651, %v1652
        %v1654 = vrot.slane %v1653, 1
        %v1655 = vmax.f32 %v1653, %v1654
        %v1656 = vsel %vm1627, %v979, -inf
        %v1657 = vrot.slane %v1656, 4
        %v1658 = vmax.f32 %v1656, %v1657
        %v1659 = vrot.slane %v1658, 2
        %v1660 = vmax.f32 %v1658, %v1659
        %v1661 = vrot.slane %v1660, 1
        %v1662 = vmax.f32 %v1660, %v1661
        %v1663 = vsel %vm1627, %v987, -inf
        %v1664 = vrot.slane %v1663, 4
        %v1665 = vmax.f32 %v1663, %v1664
        %v1666 = vrot.slane %v1665, 2
        %v1667 = vmax.f32 %v1665, %v1666
        %v1668 = vrot.slane %v1667, 1
        %v1669 = vmax.f32 %v1667, %v1668
        %v1670 = vsel %vm1627, %v986, -inf
        %v1671 = vrot.slane %v1670, 4
        %v1672 = vmax.f32 %v1670, %v1671
        %v1673 = vrot.slane %v1672, 2
        %v1674 = vmax.f32 %v1672, %v1673
        %v1675 = vrot.slane %v1674, 1
        %v1676 = vmax.f32 %v1674, %v1675
        %v1677 = vsel %vm1627, %v988, -inf
        %v1678 = vrot.slane %v1677, 4
        %v1679 = vmax.f32 %v1677, %v1678
        %v1680 = vrot.slane %v1679, 2
        %v1681 = vmax.f32 %v1679, %v1680
        %v1682 = vrot.slane %v1681, 1
        %v1683 = vmax.f32 %v1681, %v1682
        %v1684 = vsel %vm1627, %v996, -inf
        %v1685 = vrot.slane %v1684, 4
        %v1686 = vmax.f32 %v1684, %v1685
        %v1687 = vrot.slane %v1686, 2
        %v1688 = vmax.f32 %v1686, %v1687
        %v1689 = vrot.slane %v1688, 1
        %v1690 = vmax.f32 %v1688, %v1689
        %v1691 = vsel %vm1627, %v1004, -inf
        %v1692 = vrot.slane %v1691, 4
        %v1693 = vmax.f32 %v1691, %v1692
        %v1694 = vrot.slane %v1693, 2
        %v1695 = vmax.f32 %v1693, %v1694
        %v1696 = vrot.slane %v1695, 1
        %v1697 = vmax.f32 %v1695, %v1696
        %v1698 = vsel %vm1627, %v1003, -inf
        %v1699 = vrot.slane %v1698, 4
        %v1700 = vmax.f32 %v1698, %v1699
        %v1701 = vrot.slane %v1700, 2
        %v1702 = vmax.f32 %v1700, %v1701
        %v1703 = vrot.slane %v1702, 1
        %v1704 = vmax.f32 %v1702, %v1703
        %v1705 = vsel %vm1627, %v1005, -inf
        %v1706 = vrot.slane %v1705, 4
        %v1707 = vmax.f32 %v1705, %v1706
        %v1708 = vrot.slane %v1707, 2
        %v1709 = vmax.f32 %v1707, %v1708
        %v1710 = vrot.slane %v1709, 1
        %v1711 = vmax.f32 %v1709, %v1710
        %v1712 = vsel %vm1627, %v1013, -inf
        %v1713 = vrot.slane %v1712, 4
        %v1714 = vmax.f32 %v1712, %v1713
        %v1715 = vrot.slane %v1714, 2
        %v1716 = vmax.f32 %v1714, %v1715
        %v1717 = vrot.slane %v1716, 1
        %v1718 = vmax.f32 %v1716, %v1717
        %v1719 = vsel %vm1627, %v1021, -inf
        %v1720 = vrot.slane %v1719, 4
        %v1721 = vmax.f32 %v1719, %v1720
        %v1722 = vrot.slane %v1721, 2
        %v1723 = vmax.f32 %v1721, %v1722
        %v1724 = vrot.slane %v1723, 1
        %v1725 = vmax.f32 %v1723, %v1724
        %v1726 = vsel %vm1627, %v1020, -inf
        %v1727 = vrot.slane %v1726, 4
        %v1728 = vmax.f32 %v1726, %v1727
        %v1729 = vrot.slane %v1728, 2
        %v1730 = vmax.f32 %v1728, %v1729
        %v1731 = vrot.slane %v1730, 1
        %v1732 = vmax.f32 %v1730, %v1731
        %v1733 = vsel %vm1627, %v1022, -inf
        %v1734 = vrot.slane %v1733, 4
        %v1735 = vmax.f32 %v1733, %v1734
        %v1736 = vrot.slane %v1735, 2
        %v1737 = vmax.f32 %v1735, %v1736
        %v1738 = vrot.slane %v1737, 1
        %v1739 = vmax.f32 %v1737, %v1738
        %v1740 = vsel %vm1627, %v1030, -inf
        %v1741 = vrot.slane %v1740, 4
        %v1742 = vmax.f32 %v1740, %v1741
        %v1743 = vrot.slane %v1742, 2
        %v1744 = vmax.f32 %v1742, %v1743
        %v1745 = vrot.slane %v1744, 1
        %v1746 = vmax.f32 %v1744, %v1745
        %v1747 = vsel %vm1627, %v1038, -inf
        %v1748 = vrot.slane %v1747, 4
        %v1749 = vmax.f32 %v1747, %v1748
        %v1750 = vrot.slane %v1749, 2
        %v1751 = vmax.f32 %v1749, %v1750
        %v1752 = vrot.slane %v1751, 1
        %v1753 = vmax.f32 %v1751, %v1752
        %v1754 = vsel %vm1627, %v1037, -inf
        %v1755 = vrot.slane %v1754, 4
        %v1756 = vmax.f32 %v1754, %v1755
        %v1757 = vrot.slane %v1756, 2
        %v1758 = vmax.f32 %v1756, %v1757
        %v1759 = vrot.slane %v1758, 1
        %v1760 = vmax.f32 %v1758, %v1759
        %v1761 = vsel %vm1627, %v1039, -inf
        %v1762 = vrot.slane %v1761, 4
        %v1763 = vmax.f32 %v1761, %v1762
        %v1764 = vrot.slane %v1763, 2
        %v1765 = vmax.f32 %v1763, %v1764
        %v1766 = vrot.slane %v1765, 1
        %v1767 = vmax.f32 %v1765, %v1766
        %v1768 = vsel %vm1627, %v1047, -inf
        %v1769 = vrot.slane %v1768, 4
        %v1770 = vmax.f32 %v1768, %v1769
        %v1771 = vrot.slane %v1770, 2
        %v1772 = vmax.f32 %v1770, %v1771
        %v1773 = vrot.slane %v1772, 1
        %v1774 = vmax.f32 %v1772, %v1773
        %v1775 = vsel %vm1627, %v1055, -inf
        %v1776 = vrot.slane %v1775, 4
        %v1777 = vmax.f32 %v1775, %v1776
        %v1778 = vrot.slane %v1777, 2
        %v1779 = vmax.f32 %v1777, %v1778
        %v1780 = vrot.slane %v1779, 1
        %v1781 = vmax.f32 %v1779, %v1780
        %v1782 = vsel %vm1627, %v1054, -inf
        %v1783 = vrot.slane %v1782, 4
        %v1784 = vmax.f32 %v1782, %v1783
        %v1785 = vrot.slane %v1784, 2
        %v1786 = vmax.f32 %v1784, %v1785
        %v1787 = vrot.slane %v1786, 1
        %v1788 = vmax.f32 %v1786, %v1787
        %v1789 = vsel %vm1627, %v1056, -inf
        %v1790 = vrot.slane %v1789, 4
        %v1791 = vmax.f32 %v1789, %v1790
        %v1792 = vrot.slane %v1791, 2
        %v1793 = vmax.f32 %v1791, %v1792
        %v1794 = vrot.slane %v1793, 1
        %v1795 = vmax.f32 %v1793, %v1794
        %v1796 = vsel %vm1627, %v1064, -inf
        %v1797 = vrot.slane %v1796, 4
        %v1798 = vmax.f32 %v1796, %v1797
        %v1799 = vrot.slane %v1798, 2
        %v1800 = vmax.f32 %v1798, %v1799
        %v1801 = vrot.slane %v1800, 1
        %v1802 = vmax.f32 %v1800, %v1801
        %v1803 = vsel %vm1627, %v1072, -inf
        %v1804 = vrot.slane %v1803, 4
        %v1805 = vmax.f32 %v1803, %v1804
        %v1806 = vrot.slane %v1805, 2
        %v1807 = vmax.f32 %v1805, %v1806
        %v1808 = vrot.slane %v1807, 1
        %v1809 = vmax.f32 %v1807, %v1808
        %v1810 = vsel %vm1627, %v1071, -inf
        %v1811 = vrot.slane %v1810, 4
        %v1812 = vmax.f32 %v1810, %v1811
        %v1813 = vrot.slane %v1812, 2
        %v1814 = vmax.f32 %v1812, %v1813
        %v1815 = vrot.slane %v1814, 1
        %v1816 = vmax.f32 %v1814, %v1815
        %v1817 = vsel %vm1627, %v1073, -inf
        %v1818 = vrot.slane %v1817, 4
        %v1819 = vmax.f32 %v1817, %v1818
        %v1820 = vrot.slane %v1819, 2
        %v1821 = vmax.f32 %v1819, %v1820
        %v1822 = vrot.slane %v1821, 1
        %v1823 = vmax.f32 %v1821, %v1822
        %v1824 = vsel %vm1627, %v1081, -inf
        %v1825 = vrot.slane %v1824, 4
        %v1826 = vmax.f32 %v1824, %v1825
        %v1827 = vrot.slane %v1826, 2
        %v1828 = vmax.f32 %v1826, %v1827
        %v1829 = vrot.slane %v1828, 1
        %v1830 = vmax.f32 %v1828, %v1829
        %v1831 = vsel %vm1627, %v1089, -inf
        %v1832 = vrot.slane %v1831, 4
        %v1833 = vmax.f32 %v1831, %v1832
        %v1834 = vrot.slane %v1833, 2
        %v1835 = vmax.f32 %v1833, %v1834
        %v1836 = vrot.slane %v1835, 1
        %v1837 = vmax.f32 %v1835, %v1836
        %v1838 = vsel %vm1627, %v1088, -inf
        %v1839 = vrot.slane %v1838, 4
        %v1840 = vmax.f32 %v1838, %v1839
        %v1841 = vrot.slane %v1840, 2
        %v1842 = vmax.f32 %v1840, %v1841
        %v1843 = vrot.slane %v1842, 1
        %v1844 = vmax.f32 %v1842, %v1843
        %v1845 = vsel %vm1627, %v1090, -inf
        %v1846 = vrot.slane %v1845, 4
        %v1847 = vmax.f32 %v1845, %v1846
        %v1848 = vrot.slane %v1847, 2
        %v1849 = vmax.f32 %v1847, %v1848
        %v1850 = vrot.slane %v1849, 1
        %v1851 = vmax.f32 %v1849, %v1850
        %v1852 = vsel %vm1627, %v1098, -inf
        %v1853 = vrot.slane %v1852, 4
        %v1854 = vmax.f32 %v1852, %v1853
        %v1855 = vrot.slane %v1854, 2
        %v1856 = vmax.f32 %v1854, %v1855
        %v1857 = vrot.slane %v1856, 1
        %v1858 = vmax.f32 %v1856, %v1857
        %v1859 = vsel %vm1627, %v1106, -inf
        %v1860 = vrot.slane %v1859, 4
        %v1861 = vmax.f32 %v1859, %v1860
        %v1862 = vrot.slane %v1861, 2
        %v1863 = vmax.f32 %v1861, %v1862
        %v1864 = vrot.slane %v1863, 1
        %v1865 = vmax.f32 %v1863, %v1864
        %v1866 = vsel %vm1627, %v1105, -inf
        %v1867 = vrot.slane %v1866, 4
        %v1868 = vmax.f32 %v1866, %v1867
        %v1869 = vrot.slane %v1868, 2
        %v1870 = vmax.f32 %v1868, %v1869
        %v1871 = vrot.slane %v1870, 1
        %v1872 = vmax.f32 %v1870, %v1871
        %v1873 = vsel %vm1627, %v1107, -inf
        %v1874 = vrot.slane %v1873, 4
        %v1875 = vmax.f32 %v1873, %v1874
        %v1876 = vrot.slane %v1875, 2
        %v1877 = vmax.f32 %v1875, %v1876
        %v1878 = vrot.slane %v1877, 1
        %v1879 = vmax.f32 %v1877, %v1878
        %v1880 = vsel %vm1627, %v1115, -inf
        %v1881 = vrot.slane %v1880, 4
        %v1882 = vmax.f32 %v1880, %v1881
        %v1883 = vrot.slane %v1882, 2
        %v1884 = vmax.f32 %v1882, %v1883
        %v1885 = vrot.slane %v1884, 1
        %v1886 = vmax.f32 %v1884, %v1885
        %v1887 = vsel %vm1627, %v1123, -inf
        %v1888 = vrot.slane %v1887, 4
        %v1889 = vmax.f32 %v1887, %v1888
        %v1890 = vrot.slane %v1889, 2
        %v1891 = vmax.f32 %v1889, %v1890
        %v1892 = vrot.slane %v1891, 1
        %v1893 = vmax.f32 %v1891, %v1892
        %v1894 = vsel %vm1627, %v1122, -inf
        %v1895 = vrot.slane %v1894, 4
        %v1896 = vmax.f32 %v1894, %v1895
        %v1897 = vrot.slane %v1896, 2
        %v1898 = vmax.f32 %v1896, %v1897
        %v1899 = vrot.slane %v1898, 1
        %v1900 = vmax.f32 %v1898, %v1899
        %v1901 = vsel %vm1627, %v1124, -inf
        %v1902 = vrot.slane %v1901, 4
        %v1903 = vmax.f32 %v1901, %v1902
        %v1904 = vrot.slane %v1903, 2
        %v1905 = vmax.f32 %v1903, %v1904
        %v1906 = vrot.slane %v1905, 1
        %v1907 = vmax.f32 %v1905, %v1906
        %v1908 = vsel %vm1627, %v1132, -inf
        %v1909 = vrot.slane %v1908, 4
        %v1910 = vmax.f32 %v1908, %v1909
        %v1911 = vrot.slane %v1910, 2
        %v1912 = vmax.f32 %v1910, %v1911
        %v1913 = vrot.slane %v1912, 1
        %v1914 = vmax.f32 %v1912, %v1913
        %v1915 = vsel %vm1627, %v1140, -inf
        %v1916 = vrot.slane %v1915, 4
        %v1917 = vmax.f32 %v1915, %v1916
        %v1918 = vrot.slane %v1917, 2
        %v1919 = vmax.f32 %v1917, %v1918
        %v1920 = vrot.slane %v1919, 1
        %v1921 = vmax.f32 %v1919, %v1920
        %v1922 = vsel %vm1627, %v1139, -inf
        %v1923 = vrot.slane %v1922, 4
        %v1924 = vmax.f32 %v1922, %v1923
        %v1925 = vrot.slane %v1924, 2
        %v1926 = vmax.f32 %v1924, %v1925
        %v1927 = vrot.slane %v1926, 1
        %v1928 = vmax.f32 %v1926, %v1927
        %v1929 = vsel %vm1627, %v1141, -inf
        %v1930 = vrot.slane %v1929, 4
        %v1931 = vmax.f32 %v1929, %v1930
        %v1932 = vrot.slane %v1931, 2
        %v1933 = vmax.f32 %v1931, %v1932
        %v1934 = vrot.slane %v1933, 1
        %v1935 = vmax.f32 %v1933, %v1934
        %v1936 = vsel %vm1627, %v1149, -inf
        %v1937 = vrot.slane %v1936, 4
        %v1938 = vmax.f32 %v1936, %v1937
        %v1939 = vrot.slane %v1938, 2
        %v1940 = vmax.f32 %v1938, %v1939
        %v1941 = vrot.slane %v1940, 1
        %v1942 = vmax.f32 %v1940, %v1941
        %v1943 = vsel %vm1627, %v1157, -inf
        %v1944 = vrot.slane %v1943, 4
        %v1945 = vmax.f32 %v1943, %v1944
        %v1946 = vrot.slane %v1945, 2
        %v1947 = vmax.f32 %v1945, %v1946
        %v1948 = vrot.slane %v1947, 1
        %v1949 = vmax.f32 %v1947, %v1948
        %v1950 = vsel %vm1627, %v1156, -inf
        %v1951 = vrot.slane %v1950, 4
        %v1952 = vmax.f32 %v1950, %v1951
        %v1953 = vrot.slane %v1952, 2
        %v1954 = vmax.f32 %v1952, %v1953
        %v1955 = vrot.slane %v1954, 1
        %v1956 = vmax.f32 %v1954, %v1955
        %v1957 = vsel %vm1627, %v1158, -inf
        %v1958 = vrot.slane %v1957, 4
        %v1959 = vmax.f32 %v1957, %v1958
        %v1960 = vrot.slane %v1959, 2
        %v1961 = vmax.f32 %v1959, %v1960
        %v1962 = vrot.slane %v1961, 1
        %v1963 = vmax.f32 %v1961, %v1962
        %v1964 = vsel %vm1627, %v1166, -inf
        %v1965 = vrot.slane %v1964, 4
        %v1966 = vmax.f32 %v1964, %v1965
        %v1967 = vrot.slane %v1966, 2
        %v1968 = vmax.f32 %v1966, %v1967
        %v1969 = vrot.slane %v1968, 1
        %v1970 = vmax.f32 %v1968, %v1969
        %v1971 = vsel %vm1627, %v1174, -inf
        %v1972 = vrot.slane %v1971, 4
        %v1973 = vmax.f32 %v1971, %v1972
        %v1974 = vrot.slane %v1973, 2
        %v1975 = vmax.f32 %v1973, %v1974
        %v1976 = vrot.slane %v1975, 1
        %v1977 = vmax.f32 %v1975, %v1976
        %v1978 = vsel %vm1627, %v1173, -inf
        %v1979 = vrot.slane %v1978, 4
        %v1980 = vmax.f32 %v1978, %v1979
        %v1981 = vrot.slane %v1980, 2
        %v1982 = vmax.f32 %v1980, %v1981
        %v1983 = vrot.slane %v1982, 1
        %v1984 = vmax.f32 %v1982, %v1983
        %v1985 = vsel %vm1627, %v1175, -inf
        %v1986 = vrot.slane %v1985, 4
        %v1987 = vmax.f32 %v1985, %v1986
        %v1988 = vrot.slane %v1987, 2
        %v1989 = vmax.f32 %v1987, %v1988
        %v1990 = vrot.slane %v1989, 1
        %v1991 = vmax.f32 %v1989, %v1990
        %v1992 = vsel %vm1627, %v1183, -inf
        %v1993 = vrot.slane %v1992, 4
        %v1994 = vmax.f32 %v1992, %v1993
        %v1995 = vrot.slane %v1994, 2
        %v1996 = vmax.f32 %v1994, %v1995
        %v1997 = vrot.slane %v1996, 1
        %v1998 = vmax.f32 %v1996, %v1997
        %v1999 = vsel %vm1627, %v1191, -inf
        %v2000 = vrot.slane %v1999, 4
        %v2001 = vmax.f32 %v1999, %v2000
        %v2002 = vrot.slane %v2001, 2
        %v2003 = vmax.f32 %v2001, %v2002
        %v2004 = vrot.slane %v2003, 1
        %v2005 = vmax.f32 %v2003, %v2004
        %v2006 = vsel %vm1627, %v1190, -inf
        %v2007 = vrot.slane %v2006, 4
        %v2008 = vmax.f32 %v2006, %v2007
        %v2009 = vrot.slane %v2008, 2
        %v2010 = vmax.f32 %v2008, %v2009
        %v2011 = vrot.slane %v2010, 1
        %v2012 = vmax.f32 %v2010, %v2011
        %v2013 = vsel %vm1627, %v1192, -inf
        %v2014 = vrot.slane %v2013, 4
        %v2015 = vmax.f32 %v2013, %v2014
        %v2016 = vrot.slane %v2015, 2
        %v2017 = vmax.f32 %v2015, %v2016
        %v2018 = vrot.slane %v2017, 1
        %v2019 = vmax.f32 %v2017, %v2018
        %v2020 = vsel %vm1627, %v1200, -inf
        %v2021 = vrot.slane %v2020, 4
        %v2022 = vmax.f32 %v2020, %v2021
        %v2023 = vrot.slane %v2022, 2
        %v2024 = vmax.f32 %v2022, %v2023
        %v2025 = vrot.slane %v2024, 1
        %v2026 = vmax.f32 %v2024, %v2025
        %v2027 = vsel %vm1627, %v1208, -inf
        %v2028 = vrot.slane %v2027, 4
        %v2029 = vmax.f32 %v2027, %v2028
        %v2030 = vrot.slane %v2029, 2
        %v2031 = vmax.f32 %v2029, %v2030
        %v2032 = vrot.slane %v2031, 1
        %v2033 = vmax.f32 %v2031, %v2032
        %v2034 = vsel %vm1627, %v1207, -inf
        %v2035 = vrot.slane %v2034, 4
        %v2036 = vmax.f32 %v2034, %v2035
        %v2037 = vrot.slane %v2036, 2
        %v2038 = vmax.f32 %v2036, %v2037
        %v2039 = vrot.slane %v2038, 1
        %v2040 = vmax.f32 %v2038, %v2039
        %v2041 = vsel %vm1627, %v1209, -inf
        %v2042 = vrot.slane %v2041, 4
        %v2043 = vmax.f32 %v2041, %v2042
        %v2044 = vrot.slane %v2043, 2
        %v2045 = vmax.f32 %v2043, %v2044
        %v2046 = vrot.slane %v2045, 1
        %v2047 = vmax.f32 %v2045, %v2046
        %v2048 = vsel %vm1627, %v1217, -inf
        %v2049 = vrot.slane %v2048, 4
        %v2050 = vmax.f32 %v2048, %v2049
        %v2051 = vrot.slane %v2050, 2
        %v2052 = vmax.f32 %v2050, %v2051
        %v2053 = vrot.slane %v2052, 1
        %v2054 = vmax.f32 %v2052, %v2053
        %v2055 = vsel %vm1627, %v1225, -inf
        %v2056 = vrot.slane %v2055, 4
        %v2057 = vmax.f32 %v2055, %v2056
        %v2058 = vrot.slane %v2057, 2
        %v2059 = vmax.f32 %v2057, %v2058
        %v2060 = vrot.slane %v2059, 1
        %v2061 = vmax.f32 %v2059, %v2060
        %v2062 = vsel %vm1627, %v1224, -inf
        %v2063 = vrot.slane %v2062, 4
        %v2064 = vmax.f32 %v2062, %v2063
        %v2065 = vrot.slane %v2064, 2
        %v2066 = vmax.f32 %v2064, %v2065
        %v2067 = vrot.slane %v2066, 1
        %v2068 = vmax.f32 %v2066, %v2067
        %v2069 = vsel %vm1627, %v1226, -inf
        %v2070 = vrot.slane %v2069, 4
        %v2071 = vmax.f32 %v2069, %v2070
        %v2072 = vrot.slane %v2071, 2
        %v2073 = vmax.f32 %v2071, %v2072
        %v2074 = vrot.slane %v2073, 1
        %v2075 = vmax.f32 %v2073, %v2074
        %v2076 = vsel %vm1627, %v1234, -inf
        %v2077 = vrot.slane %v2076, 4
        %v2078 = vmax.f32 %v2076, %v2077
        %v2079 = vrot.slane %v2078, 2
        %v2080 = vmax.f32 %v2078, %v2079
        %v2081 = vrot.slane %v2080, 1
        %v2082 = vmax.f32 %v2080, %v2081
        %v2083 = vsel %vm1627, %v1242, -inf
        %v2084 = vrot.slane %v2083, 4
        %v2085 = vmax.f32 %v2083, %v2084
        %v2086 = vrot.slane %v2085, 2
        %v2087 = vmax.f32 %v2085, %v2086
        %v2088 = vrot.slane %v2087, 1
        %v2089 = vmax.f32 %v2087, %v2088
        %v2090 = vsel %vm1627, %v1241, -inf
        %v2091 = vrot.slane %v2090, 4
        %v2092 = vmax.f32 %v2090, %v2091
        %v2093 = vrot.slane %v2092, 2
        %v2094 = vmax.f32 %v2092, %v2093
        %v2095 = vrot.slane %v2094, 1
        %v2096 = vmax.f32 %v2094, %v2095
        %v2097 = vsel %vm1627, %v1243, -inf
        %v2098 = vrot.slane %v2097, 4
        %v2099 = vmax.f32 %v2097, %v2098
        %v2100 = vrot.slane %v2099, 2
        %v2101 = vmax.f32 %v2099, %v2100
        %v2102 = vrot.slane %v2101, 1
        %v2103 = vmax.f32 %v2101, %v2102
        %v2104 = vsel %vm1627, %v1251, -inf
        %v2105 = vrot.slane %v2104, 4
        %v2106 = vmax.f32 %v2104, %v2105
        %v2107 = vrot.slane %v2106, 2
        %v2108 = vmax.f32 %v2106, %v2107
        %v2109 = vrot.slane %v2108, 1
        %v2110 = vmax.f32 %v2108, %v2109
        %v2111 = vsel %vm1627, %v1259, -inf
        %v2112 = vrot.slane %v2111, 4
        %v2113 = vmax.f32 %v2111, %v2112
        %v2114 = vrot.slane %v2113, 2
        %v2115 = vmax.f32 %v2113, %v2114
        %v2116 = vrot.slane %v2115, 1
        %v2117 = vmax.f32 %v2115, %v2116
        %v2118 = vsel %vm1627, %v1258, -inf
        %v2119 = vrot.slane %v2118, 4
        %v2120 = vmax.f32 %v2118, %v2119
        %v2121 = vrot.slane %v2120, 2
        %v2122 = vmax.f32 %v2120, %v2121
        %v2123 = vrot.slane %v2122, 1
        %v2124 = vmax.f32 %v2122, %v2123
        %v2125 = vsel %vm1627, %v1260, -inf
        %v2126 = vrot.slane %v2125, 4
        %v2127 = vmax.f32 %v2125, %v2126
        %v2128 = vrot.slane %v2127, 2
        %v2129 = vmax.f32 %v2127, %v2128
        %v2130 = vrot.slane %v2129, 1
        %v2131 = vmax.f32 %v2129, %v2130
        %v2132 = vsel %vm1627, %v1268, -inf
        %v2133 = vrot.slane %v2132, 4
        %v2134 = vmax.f32 %v2132, %v2133
        %v2135 = vrot.slane %v2134, 2
        %v2136 = vmax.f32 %v2134, %v2135
        %v2137 = vrot.slane %v2136, 1
        %v2138 = vmax.f32 %v2136, %v2137
        %v2139 = vsel %vm1627, %v1276, -inf
        %v2140 = vrot.slane %v2139, 4
        %v2141 = vmax.f32 %v2139, %v2140
        %v2142 = vrot.slane %v2141, 2
        %v2143 = vmax.f32 %v2141, %v2142
        %v2144 = vrot.slane %v2143, 1
        %v2145 = vmax.f32 %v2143, %v2144
        %v2146 = vsel %vm1627, %v1275, -inf
        %v2147 = vrot.slane %v2146, 4
        %v2148 = vmax.f32 %v2146, %v2147
        %v2149 = vrot.slane %v2148, 2
        %v2150 = vmax.f32 %v2148, %v2149
        %v2151 = vrot.slane %v2150, 1
        %v2152 = vmax.f32 %v2150, %v2151
        %v2153 = vsel %vm1627, %v1277, -inf
        %v2154 = vrot.slane %v2153, 4
        %v2155 = vmax.f32 %v2153, %v2154
        %v2156 = vrot.slane %v2155, 2
        %v2157 = vmax.f32 %v2155, %v2156
        %v2158 = vrot.slane %v2157, 1
        %v2159 = vmax.f32 %v2157, %v2158
        %v2160 = vsel %vm1627, %v1285, -inf
        %v2161 = vrot.slane %v2160, 4
        %v2162 = vmax.f32 %v2160, %v2161
        %v2163 = vrot.slane %v2162, 2
        %v2164 = vmax.f32 %v2162, %v2163
        %v2165 = vrot.slane %v2164, 1
        %v2166 = vmax.f32 %v2164, %v2165
        %v2167 = vsel %vm1627, %v1293, -inf
        %v2168 = vrot.slane %v2167, 4
        %v2169 = vmax.f32 %v2167, %v2168
        %v2170 = vrot.slane %v2169, 2
        %v2171 = vmax.f32 %v2169, %v2170
        %v2172 = vrot.slane %v2171, 1
        %v2173 = vmax.f32 %v2171, %v2172
        %v2174 = vsel %vm1627, %v1292, -inf
        %v2175 = vrot.slane %v2174, 4
        %v2176 = vmax.f32 %v2174, %v2175
        %v2177 = vrot.slane %v2176, 2
        %v2178 = vmax.f32 %v2176, %v2177
        %v2179 = vrot.slane %v2178, 1
        %v2180 = vmax.f32 %v2178, %v2179
        %v2181 = vsel %vm1627, %v1294, -inf
        %v2182 = vrot.slane %v2181, 4
        %v2183 = vmax.f32 %v2181, %v2182
        %v2184 = vrot.slane %v2183, 2
        %v2185 = vmax.f32 %v2183, %v2184
        %v2186 = vrot.slane %v2185, 1
        %v2187 = vmax.f32 %v2185, %v2186
        %v2188 = vsel %vm1627, %v1302, -inf
        %v2189 = vrot.slane %v2188, 4
        %v2190 = vmax.f32 %v2188, %v2189
        %v2191 = vrot.slane %v2190, 2
        %v2192 = vmax.f32 %v2190, %v2191
        %v2193 = vrot.slane %v2192, 1
        %v2194 = vmax.f32 %v2192, %v2193
        %v2195 = vsel %vm1627, %v1310, -inf
        %v2196 = vrot.slane %v2195, 4
        %v2197 = vmax.f32 %v2195, %v2196
        %v2198 = vrot.slane %v2197, 2
        %v2199 = vmax.f32 %v2197, %v2198
        %v2200 = vrot.slane %v2199, 1
        %v2201 = vmax.f32 %v2199, %v2200
        %v2202 = vsel %vm1627, %v1309, -inf
        %v2203 = vrot.slane %v2202, 4
        %v2204 = vmax.f32 %v2202, %v2203
        %v2205 = vrot.slane %v2204, 2
        %v2206 = vmax.f32 %v2204, %v2205
        %v2207 = vrot.slane %v2206, 1
        %v2208 = vmax.f32 %v2206, %v2207
        %v2209 = vsel %vm1627, %v1311, -inf
        %v2210 = vrot.slane %v2209, 4
        %v2211 = vmax.f32 %v2209, %v2210
        %v2212 = vrot.slane %v2211, 2
        %v2213 = vmax.f32 %v2211, %v2212
        %v2214 = vrot.slane %v2213, 1
        %v2215 = vmax.f32 %v2213, %v2214
        %v2216 = vsel %vm1627, %v1319, -inf
        %v2217 = vrot.slane %v2216, 4
        %v2218 = vmax.f32 %v2216, %v2217
        %v2219 = vrot.slane %v2218, 2
        %v2220 = vmax.f32 %v2218, %v2219
        %v2221 = vrot.slane %v2220, 1
        %v2222 = vmax.f32 %v2220, %v2221
        %v2223 = vsel %vm1627, %v1327, -inf
        %v2224 = vrot.slane %v2223, 4
        %v2225 = vmax.f32 %v2223, %v2224
        %v2226 = vrot.slane %v2225, 2
        %v2227 = vmax.f32 %v2225, %v2226
        %v2228 = vrot.slane %v2227, 1
        %v2229 = vmax.f32 %v2227, %v2228
        %v2230 = vsel %vm1627, %v1326, -inf
        %v2231 = vrot.slane %v2230, 4
        %v2232 = vmax.f32 %v2230, %v2231
        %v2233 = vrot.slane %v2232, 2
        %v2234 = vmax.f32 %v2232, %v2233
        %v2235 = vrot.slane %v2234, 1
        %v2236 = vmax.f32 %v2234, %v2235
        %v2237 = vsel %vm1627, %v1328, -inf
        %v2238 = vrot.slane %v2237, 4
        %v2239 = vmax.f32 %v2237, %v2238
        %v2240 = vrot.slane %v2239, 2
        %v2241 = vmax.f32 %v2239, %v2240
        %v2242 = vrot.slane %v2241, 1
        %v2243 = vmax.f32 %v2241, %v2242
        %v2244 = vsel %vm1627, %v1336, -inf
        %v2245 = vrot.slane %v2244, 4
        %v2246 = vmax.f32 %v2244, %v2245
        %v2247 = vrot.slane %v2246, 2
        %v2248 = vmax.f32 %v2246, %v2247
        %v2249 = vrot.slane %v2248, 1
        %v2250 = vmax.f32 %v2248, %v2249
        %v2251 = vsel %vm1627, %v1344, -inf
        %v2252 = vrot.slane %v2251, 4
        %v2253 = vmax.f32 %v2251, %v2252
        %v2254 = vrot.slane %v2253, 2
        %v2255 = vmax.f32 %v2253, %v2254
        %v2256 = vrot.slane %v2255, 1
        %v2257 = vmax.f32 %v2255, %v2256
        %v2258 = vsel %vm1627, %v1343, -inf
        %v2259 = vrot.slane %v2258, 4
        %v2260 = vmax.f32 %v2258, %v2259
        %v2261 = vrot.slane %v2260, 2
        %v2262 = vmax.f32 %v2260, %v2261
        %v2263 = vrot.slane %v2262, 1
        %v2264 = vmax.f32 %v2262, %v2263
        %v2265 = vsel %vm1627, %v1345, -inf
        %v2266 = vrot.slane %v2265, 4
        %v2267 = vmax.f32 %v2265, %v2266
        %v2268 = vrot.slane %v2267, 2
        %v2269 = vmax.f32 %v2267, %v2268
        %v2270 = vrot.slane %v2269, 1
        %v2271 = vmax.f32 %v2269, %v2270
        %v2272 = vsel %vm1627, %v1353, -inf
        %v2273 = vrot.slane %v2272, 4
        %v2274 = vmax.f32 %v2272, %v2273
        %v2275 = vrot.slane %v2274, 2
        %v2276 = vmax.f32 %v2274, %v2275
        %v2277 = vrot.slane %v2276, 1
        %v2278 = vmax.f32 %v2276, %v2277
        %v2279 = vsel %vm1627, %v1361, -inf
        %v2280 = vrot.slane %v2279, 4
        %v2281 = vmax.f32 %v2279, %v2280
        %v2282 = vrot.slane %v2281, 2
        %v2283 = vmax.f32 %v2281, %v2282
        %v2284 = vrot.slane %v2283, 1
        %v2285 = vmax.f32 %v2283, %v2284
        %v2286 = vsel %vm1627, %v1360, -inf
        %v2287 = vrot.slane %v2286, 4
        %v2288 = vmax.f32 %v2286, %v2287
        %v2289 = vrot.slane %v2288, 2
        %v2290 = vmax.f32 %v2288, %v2289
        %v2291 = vrot.slane %v2290, 1
        %v2292 = vmax.f32 %v2290, %v2291
        %v2293 = vsel %vm1627, %v1362, -inf
        %v2294 = vrot.slane %v2293, 4
        %v2295 = vmax.f32 %v2293, %v2294
        %v2296 = vrot.slane %v2295, 2
        %v2297 = vmax.f32 %v2295, %v2296
        %v2298 = vrot.slane %v2297, 1
        %v2299 = vmax.f32 %v2297, %v2298
        %v2300 = vsel %vm1627, %v1370, -inf
        %v2301 = vrot.slane %v2300, 4
        %v2302 = vmax.f32 %v2300, %v2301
        %v2303 = vrot.slane %v2302, 2
        %v2304 = vmax.f32 %v2302, %v2303
        %v2305 = vrot.slane %v2304, 1
        %v2306 = vmax.f32 %v2304, %v2305
        %v2307 = vsel %vm1627, %v1378, -inf
        %v2308 = vrot.slane %v2307, 4
        %v2309 = vmax.f32 %v2307, %v2308
        %v2310 = vrot.slane %v2309, 2
        %v2311 = vmax.f32 %v2309, %v2310
        %v2312 = vrot.slane %v2311, 1
        %v2313 = vmax.f32 %v2311, %v2312
        %v2314 = vsel %vm1627, %v1377, -inf
        %v2315 = vrot.slane %v2314, 4
        %v2316 = vmax.f32 %v2314, %v2315
        %v2317 = vrot.slane %v2316, 2
        %v2318 = vmax.f32 %v2316, %v2317
        %v2319 = vrot.slane %v2318, 1
        %v2320 = vmax.f32 %v2318, %v2319
        %v2321 = vsel %vm1627, %v1379, -inf
        %v2322 = vrot.slane %v2321, 4
        %v2323 = vmax.f32 %v2321, %v2322
        %v2324 = vrot.slane %v2323, 2
        %v2325 = vmax.f32 %v2323, %v2324
        %v2326 = vrot.slane %v2325, 1
        %v2327 = vmax.f32 %v2325, %v2326
        %v2328 = vsel %vm1627, %v1387, -inf
        %v2329 = vrot.slane %v2328, 4
        %v2330 = vmax.f32 %v2328, %v2329
        %v2331 = vrot.slane %v2330, 2
        %v2332 = vmax.f32 %v2330, %v2331
        %v2333 = vrot.slane %v2332, 1
        %v2334 = vmax.f32 %v2332, %v2333
        %v2335 = vsel %vm1627, %v1395, -inf
        %v2336 = vrot.slane %v2335, 4
        %v2337 = vmax.f32 %v2335, %v2336
        %v2338 = vrot.slane %v2337, 2
        %v2339 = vmax.f32 %v2337, %v2338
        %v2340 = vrot.slane %v2339, 1
        %v2341 = vmax.f32 %v2339, %v2340
        %v2342 = vsel %vm1627, %v1394, -inf
        %v2343 = vrot.slane %v2342, 4
        %v2344 = vmax.f32 %v2342, %v2343
        %v2345 = vrot.slane %v2344, 2
        %v2346 = vmax.f32 %v2344, %v2345
        %v2347 = vrot.slane %v2346, 1
        %v2348 = vmax.f32 %v2346, %v2347
        %v2349 = vsel %vm1627, %v1396, -inf
        %v2350 = vrot.slane %v2349, 4
        %v2351 = vmax.f32 %v2349, %v2350
        %v2352 = vrot.slane %v2351, 2
        %v2353 = vmax.f32 %v2351, %v2352
        %v2354 = vrot.slane %v2353, 1
        %v2355 = vmax.f32 %v2353, %v2354
        %v2356 = vsel %vm1627, %v1404, -inf
        %v2357 = vrot.slane %v2356, 4
        %v2358 = vmax.f32 %v2356, %v2357
        %v2359 = vrot.slane %v2358, 2
        %v2360 = vmax.f32 %v2358, %v2359
        %v2361 = vrot.slane %v2360, 1
        %v2362 = vmax.f32 %v2360, %v2361
        %v2363 = vsel %vm1627, %v1412, -inf
        %v2364 = vrot.slane %v2363, 4
        %v2365 = vmax.f32 %v2363, %v2364
        %v2366 = vrot.slane %v2365, 2
        %v2367 = vmax.f32 %v2365, %v2366
        %v2368 = vrot.slane %v2367, 1
        %v2369 = vmax.f32 %v2367, %v2368
        %v2370 = vsel %vm1627, %v1411, -inf
        %v2371 = vrot.slane %v2370, 4
        %v2372 = vmax.f32 %v2370, %v2371
        %v2373 = vrot.slane %v2372, 2
        %v2374 = vmax.f32 %v2372, %v2373
        %v2375 = vrot.slane %v2374, 1
        %v2376 = vmax.f32 %v2374, %v2375
        %v2377 = vsel %vm1627, %v1413, -inf
        %v2378 = vrot.slane %v2377, 4
        %v2379 = vmax.f32 %v2377, %v2378
        %v2380 = vrot.slane %v2379, 2
        %v2381 = vmax.f32 %v2379, %v2380
        %v2382 = vrot.slane %v2381, 1
        %v2383 = vmax.f32 %v2381, %v2382
        %v2384 = vsel %vm1627, %v1421, -inf
        %v2385 = vrot.slane %v2384, 4
        %v2386 = vmax.f32 %v2384, %v2385
        %v2387 = vrot.slane %v2386, 2
        %v2388 = vmax.f32 %v2386, %v2387
        %v2389 = vrot.slane %v2388, 1
        %v2390 = vmax.f32 %v2388, %v2389
        %v2391 = vsel %vm1627, %v1429, -inf
        %v2392 = vrot.slane %v2391, 4
        %v2393 = vmax.f32 %v2391, %v2392
        %v2394 = vrot.slane %v2393, 2
        %v2395 = vmax.f32 %v2393, %v2394
        %v2396 = vrot.slane %v2395, 1
        %v2397 = vmax.f32 %v2395, %v2396
        %v2398 = vsel %vm1627, %v1428, -inf
        %v2399 = vrot.slane %v2398, 4
        %v2400 = vmax.f32 %v2398, %v2399
        %v2401 = vrot.slane %v2400, 2
        %v2402 = vmax.f32 %v2400, %v2401
        %v2403 = vrot.slane %v2402, 1
        %v2404 = vmax.f32 %v2402, %v2403
        %v2405 = vsel %vm1627, %v1430, -inf
        %v2406 = vrot.slane %v2405, 4
        %v2407 = vmax.f32 %v2405, %v2406
        %v2408 = vrot.slane %v2407, 2
        %v2409 = vmax.f32 %v2407, %v2408
        %v2410 = vrot.slane %v2409, 1
        %v2411 = vmax.f32 %v2409, %v2410
        %v2412 = vsel %vm1627, %v1438, -inf
        %v2413 = vrot.slane %v2412, 4
        %v2414 = vmax.f32 %v2412, %v2413
        %v2415 = vrot.slane %v2414, 2
        %v2416 = vmax.f32 %v2414, %v2415
        %v2417 = vrot.slane %v2416, 1
        %v2418 = vmax.f32 %v2416, %v2417
        %v2419 = vsel %vm1627, %v1446, -inf
        %v2420 = vrot.slane %v2419, 4
        %v2421 = vmax.f32 %v2419, %v2420
        %v2422 = vrot.slane %v2421, 2
        %v2423 = vmax.f32 %v2421, %v2422
        %v2424 = vrot.slane %v2423, 1
        %v2425 = vmax.f32 %v2423, %v2424
        %v2426 = vsel %vm1627, %v1445, -inf
        %v2427 = vrot.slane %v2426, 4
        %v2428 = vmax.f32 %v2426, %v2427
        %v2429 = vrot.slane %v2428, 2
        %v2430 = vmax.f32 %v2428, %v2429
        %v2431 = vrot.slane %v2430, 1
        %v2432 = vmax.f32 %v2430, %v2431
        %v2433 = vsel %vm1627, %v1447, -inf
        %v2434 = vrot.slane %v2433, 4
        %v2435 = vmax.f32 %v2433, %v2434
        %v2436 = vrot.slane %v2435, 2
        %v2437 = vmax.f32 %v2435, %v2436
        %v2438 = vrot.slane %v2437, 1
        %v2439 = vmax.f32 %v2437, %v2438
        %v2440 = vsel %vm1627, %v1455, -inf
        %v2441 = vrot.slane %v2440, 4
        %v2442 = vmax.f32 %v2440, %v2441
        %v2443 = vrot.slane %v2442, 2
        %v2444 = vmax.f32 %v2442, %v2443
        %v2445 = vrot.slane %v2444, 1
        %v2446 = vmax.f32 %v2444, %v2445
        %v2447 = vsel %vm1627, %v1463, -inf
        %v2448 = vrot.slane %v2447, 4
        %v2449 = vmax.f32 %v2447, %v2448
        %v2450 = vrot.slane %v2449, 2
        %v2451 = vmax.f32 %v2449, %v2450
        %v2452 = vrot.slane %v2451, 1
        %v2453 = vmax.f32 %v2451, %v2452
        %v2454 = vsel %vm1627, %v1462, -inf
        %v2455 = vrot.slane %v2454, 4
        %v2456 = vmax.f32 %v2454, %v2455
        %v2457 = vrot.slane %v2456, 2
        %v2458 = vmax.f32 %v2456, %v2457
        %v2459 = vrot.slane %v2458, 1
        %v2460 = vmax.f32 %v2458, %v2459
        %v2461 = vsel %vm1627, %v1464, -inf
        %v2462 = vrot.slane %v2461, 4
        %v2463 = vmax.f32 %v2461, %v2462
        %v2464 = vrot.slane %v2463, 2
        %v2465 = vmax.f32 %v2463, %v2464
        %v2466 = vrot.slane %v2465, 1
        %v2467 = vmax.f32 %v2465, %v2466
        %v2468 = vsel %vm1627, %v1472, -inf
        %v2469 = vrot.slane %v2468, 4
        %v2470 = vmax.f32 %v2468, %v2469
        %v2471 = vrot.slane %v2470, 2
        %v2472 = vmax.f32 %v2470, %v2471
        %v2473 = vrot.slane %v2472, 1
        %v2474 = vmax.f32 %v2472, %v2473
        %v2475 = vsel %vm1627, %v1480, -inf
        %v2476 = vrot.slane %v2475, 4
        %v2477 = vmax.f32 %v2475, %v2476
        %v2478 = vrot.slane %v2477, 2
        %v2479 = vmax.f32 %v2477, %v2478
        %v2480 = vrot.slane %v2479, 1
        %v2481 = vmax.f32 %v2479, %v2480
        %v2482 = vsel %vm1627, %v1479, -inf
        %v2483 = vrot.slane %v2482, 4
        %v2484 = vmax.f32 %v2482, %v2483
        %v2485 = vrot.slane %v2484, 2
        %v2486 = vmax.f32 %v2484, %v2485
        %v2487 = vrot.slane %v2486, 1
        %v2488 = vmax.f32 %v2486, %v2487
        %v2489 = vsel %vm1627, %v1481, -inf
        %v2490 = vrot.slane %v2489, 4
        %v2491 = vmax.f32 %v2489, %v2490
        %v2492 = vrot.slane %v2491, 2
        %v2493 = vmax.f32 %v2491, %v2492
        %v2494 = vrot.slane %v2493, 1
        %v2495 = vmax.f32 %v2493, %v2494
        %v2496 = vsel %vm1627, %v1489, -inf
        %v2497 = vrot.slane %v2496, 4
        %v2498 = vmax.f32 %v2496, %v2497
        %v2499 = vrot.slane %v2498, 2
        %v2500 = vmax.f32 %v2498, %v2499
        %v2501 = vrot.slane %v2500, 1
        %v2502 = vmax.f32 %v2500, %v2501
        %v2503 = vsel %vm1627, %v1497, -inf
        %v2504 = vrot.slane %v2503, 4
        %v2505 = vmax.f32 %v2503, %v2504
        %v2506 = vrot.slane %v2505, 2
        %v2507 = vmax.f32 %v2505, %v2506
        %v2508 = vrot.slane %v2507, 1
        %v2509 = vmax.f32 %v2507, %v2508
        %v2510 = vsel %vm1627, %v1496, -inf
        %v2511 = vrot.slane %v2510, 4
        %v2512 = vmax.f32 %v2510, %v2511
        %v2513 = vrot.slane %v2512, 2
        %v2514 = vmax.f32 %v2512, %v2513
        %v2515 = vrot.slane %v2514, 1
        %v2516 = vmax.f32 %v2514, %v2515
        %v2517 = vsel %vm1627, %v1498, -inf
        %v2518 = vrot.slane %v2517, 4
        %v2519 = vmax.f32 %v2517, %v2518
        %v2520 = vrot.slane %v2519, 2
        %v2521 = vmax.f32 %v2519, %v2520
        %v2522 = vrot.slane %v2521, 1
        %v2523 = vmax.f32 %v2521, %v2522
        %v2524 = vsel %vm890, %v1634, -inf
        %v2525 = vsel %vm890, %v1690, -inf
        %v2526 = vmax.f32 %v2524, %v2525
        %v2527 = vsel %vm890, %v1641, -inf
        %v2528 = vsel %vm890, %v1697, -inf
        %v2529 = vmax.f32 %v2527, %v2528
        %v2530 = vsel %vm890, %v1648, -inf
        %v2531 = vsel %vm890, %v1704, -inf
        %v2532 = vmax.f32 %v2530, %v2531
        %v2533 = vsel %vm890, %v1655, -inf
        %v2534 = vsel %vm890, %v1711, -inf
        %v2535 = vmax.f32 %v2533, %v2534
        %v2536 = vsel %vm890, %v1662, -inf
        %v2537 = vsel %vm890, %v1718, -inf
        %v2538 = vmax.f32 %v2536, %v2537
        %v2539 = vsel %vm890, %v1669, -inf
        %v2540 = vsel %vm890, %v1725, -inf
        %v2541 = vmax.f32 %v2539, %v2540
        %v2542 = vsel %vm890, %v1676, -inf
        %v2543 = vsel %vm890, %v1732, -inf
        %v2544 = vmax.f32 %v2542, %v2543
        %v2545 = vsel %vm890, %v1683, -inf
        %v2546 = vsel %vm890, %v1739, -inf
        %v2547 = vmax.f32 %v2545, %v2546
        %v2548 = vsel %vm890, %v1746, -inf
        %v2549 = vsel %vm890, %v1802, -inf
        %v2550 = vmax.f32 %v2548, %v2549
        %v2551 = vsel %vm890, %v1753, -inf
        %v2552 = vsel %vm890, %v1809, -inf
        %v2553 = vmax.f32 %v2551, %v2552
        %v2554 = vsel %vm890, %v1760, -inf
        %v2555 = vsel %vm890, %v1816, -inf
        %v2556 = vmax.f32 %v2554, %v2555
        %v2557 = vsel %vm890, %v1767, -inf
        %v2558 = vsel %vm890, %v1823, -inf
        %v2559 = vmax.f32 %v2557, %v2558
        %v2560 = vsel %vm890, %v1774, -inf
        %v2561 = vsel %vm890, %v1830, -inf
        %v2562 = vmax.f32 %v2560, %v2561
        %v2563 = vsel %vm890, %v1781, -inf
        %v2564 = vsel %vm890, %v1837, -inf
        %v2565 = vmax.f32 %v2563, %v2564
        %v2566 = vsel %vm890, %v1788, -inf
        %v2567 = vsel %vm890, %v1844, -inf
        %v2568 = vmax.f32 %v2566, %v2567
        %v2569 = vsel %vm890, %v1795, -inf
        %v2570 = vsel %vm890, %v1851, -inf
        %v2571 = vmax.f32 %v2569, %v2570
        %v2572 = vsel %vm890, %v1858, -inf
        %v2573 = vsel %vm890, %v1914, -inf
        %v2574 = vmax.f32 %v2572, %v2573
        %v2575 = vsel %vm890, %v1865, -inf
        %v2576 = vsel %vm890, %v1921, -inf
        %v2577 = vmax.f32 %v2575, %v2576
        %v2578 = vsel %vm890, %v1872, -inf
        %v2579 = vsel %vm890, %v1928, -inf
        %v2580 = vmax.f32 %v2578, %v2579
        %v2581 = vsel %vm890, %v1879, -inf
        %v2582 = vsel %vm890, %v1935, -inf
        %v2583 = vmax.f32 %v2581, %v2582
        %v2584 = vsel %vm890, %v1886, -inf
        %v2585 = vsel %vm890, %v1942, -inf
        %v2586 = vmax.f32 %v2584, %v2585
        %v2587 = vsel %vm890, %v1893, -inf
        %v2588 = vsel %vm890, %v1949, -inf
        %v2589 = vmax.f32 %v2587, %v2588
        %v2590 = vsel %vm890, %v1900, -inf
        %v2591 = vsel %vm890, %v1956, -inf
        %v2592 = vmax.f32 %v2590, %v2591
        %v2593 = vsel %vm890, %v1907, -inf
        %v2594 = vsel %vm890, %v1963, -inf
        %v2595 = vmax.f32 %v2593, %v2594
        %v2596 = vsel %vm890, %v1970, -inf
        %v2597 = vsel %vm890, %v2026, -inf
        %v2598 = vmax.f32 %v2596, %v2597
        %v2599 = vsel %vm890, %v1977, -inf
        %v2600 = vsel %vm890, %v2033, -inf
        %v2601 = vmax.f32 %v2599, %v2600
        %v2602 = vsel %vm890, %v1984, -inf
        %v2603 = vsel %vm890, %v2040, -inf
        %v2604 = vmax.f32 %v2602, %v2603
        %v2605 = vsel %vm890, %v1991, -inf
        %v2606 = vsel %vm890, %v2047, -inf
        %v2607 = vmax.f32 %v2605, %v2606
        %v2608 = vsel %vm890, %v1998, -inf
        %v2609 = vsel %vm890, %v2054, -inf
        %v2610 = vmax.f32 %v2608, %v2609
        %v2611 = vsel %vm890, %v2005, -inf
        %v2612 = vsel %vm890, %v2061, -inf
        %v2613 = vmax.f32 %v2611, %v2612
        %v2614 = vsel %vm890, %v2012, -inf
        %v2615 = vsel %vm890, %v2068, -inf
        %v2616 = vmax.f32 %v2614, %v2615
        %v2617 = vsel %vm890, %v2019, -inf
        %v2618 = vsel %vm890, %v2075, -inf
        %v2619 = vmax.f32 %v2617, %v2618
        %v2620 = vsel %vm890, %v2082, -inf
        %v2621 = vsel %vm890, %v2138, -inf
        %v2622 = vmax.f32 %v2620, %v2621
        %v2623 = vsel %vm890, %v2089, -inf
        %v2624 = vsel %vm890, %v2145, -inf
        %v2625 = vmax.f32 %v2623, %v2624
        %v2626 = vsel %vm890, %v2096, -inf
        %v2627 = vsel %vm890, %v2152, -inf
        %v2628 = vmax.f32 %v2626, %v2627
        %v2629 = vsel %vm890, %v2103, -inf
        %v2630 = vsel %vm890, %v2159, -inf
        %v2631 = vmax.f32 %v2629, %v2630
        %v2632 = vsel %vm890, %v2110, -inf
        %v2633 = vsel %vm890, %v2166, -inf
        %v2634 = vmax.f32 %v2632, %v2633
        %v2635 = vsel %vm890, %v2117, -inf
        %v2636 = vsel %vm890, %v2173, -inf
        %v2637 = vmax.f32 %v2635, %v2636
        %v2638 = vsel %vm890, %v2124, -inf
        %v2639 = vsel %vm890, %v2180, -inf
        %v2640 = vmax.f32 %v2638, %v2639
        %v2641 = vsel %vm890, %v2131, -inf
        %v2642 = vsel %vm890, %v2187, -inf
        %v2643 = vmax.f32 %v2641, %v2642
        %v2644 = vsel %vm890, %v2194, -inf
        %v2645 = vsel %vm890, %v2250, -inf
        %v2646 = vmax.f32 %v2644, %v2645
        %v2647 = vsel %vm890, %v2201, -inf
        %v2648 = vsel %vm890, %v2257, -inf
        %v2649 = vmax.f32 %v2647, %v2648
        %v2650 = vsel %vm890, %v2208, -inf
        %v2651 = vsel %vm890, %v2264, -inf
        %v2652 = vmax.f32 %v2650, %v2651
        %v2653 = vsel %vm890, %v2215, -inf
        %v2654 = vsel %vm890, %v2271, -inf
        %v2655 = vmax.f32 %v2653, %v2654
        %v2656 = vsel %vm890, %v2222, -inf
        %v2657 = vsel %vm890, %v2278, -inf
        %v2658 = vmax.f32 %v2656, %v2657
        %v2659 = vsel %vm890, %v2229, -inf
        %v2660 = vsel %vm890, %v2285, -inf
        %v2661 = vmax.f32 %v2659, %v2660
        %v2662 = vsel %vm890, %v2236, -inf
        %v2663 = vsel %vm890, %v2292, -inf
        %v2664 = vmax.f32 %v2662, %v2663
        %v2665 = vsel %vm890, %v2243, -inf
        %v2666 = vsel %vm890, %v2299, -inf
        %v2667 = vmax.f32 %v2665, %v2666
        %v2668 = vsel %vm890, %v2306, -inf
        %v2669 = vsel %vm890, %v2362, -inf
        %v2670 = vmax.f32 %v2668, %v2669
        %v2671 = vsel %vm890, %v2313, -inf
        %v2672 = vsel %vm890, %v2369, -inf
        %v2673 = vmax.f32 %v2671, %v2672
        %v2674 = vsel %vm890, %v2320, -inf
        %v2675 = vsel %vm890, %v2376, -inf
        %v2676 = vmax.f32 %v2674, %v2675
        %v2677 = vsel %vm890, %v2327, -inf
        %v2678 = vsel %vm890, %v2383, -inf
        %v2679 = vmax.f32 %v2677, %v2678
        %v2680 = vsel %vm890, %v2334, -inf
        %v2681 = vsel %vm890, %v2390, -inf
        %v2682 = vmax.f32 %v2680, %v2681
        %v2683 = vsel %vm890, %v2341, -inf
        %v2684 = vsel %vm890, %v2397, -inf
        %v2685 = vmax.f32 %v2683, %v2684
        %v2686 = vsel %vm890, %v2348, -inf
        %v2687 = vsel %vm890, %v2404, -inf
        %v2688 = vmax.f32 %v2686, %v2687
        %v2689 = vsel %vm890, %v2355, -inf
        %v2690 = vsel %vm890, %v2411, -inf
        %v2691 = vmax.f32 %v2689, %v2690
        %v2692 = vsel %vm890, %v2418, -inf
        %v2693 = vsel %vm890, %v2474, -inf
        %v2694 = vmax.f32 %v2692, %v2693
        %v2695 = vsel %vm890, %v2425, -inf
        %v2696 = vsel %vm890, %v2481, -inf
        %v2697 = vmax.f32 %v2695, %v2696
        %v2698 = vsel %vm890, %v2432, -inf
        %v2699 = vsel %vm890, %v2488, -inf
        %v2700 = vmax.f32 %v2698, %v2699
        %v2701 = vsel %vm890, %v2439, -inf
        %v2702 = vsel %vm890, %v2495, -inf
        %v2703 = vmax.f32 %v2701, %v2702
        %v2704 = vsel %vm890, %v2446, -inf
        %v2705 = vsel %vm890, %v2502, -inf
        %v2706 = vmax.f32 %v2704, %v2705
        %v2707 = vsel %vm890, %v2453, -inf
        %v2708 = vsel %vm890, %v2509, -inf
        %v2709 = vmax.f32 %v2707, %v2708
        %v2710 = vsel %vm890, %v2460, -inf
        %v2711 = vsel %vm890, %v2516, -inf
        %v2712 = vmax.f32 %v2710, %v2711
        %v2713 = vsel %vm890, %v2467, -inf
        %v2714 = vsel %vm890, %v2523, -inf
        %v2715 = vmax.f32 %v2713, %v2714
        %vm2780 = vcmask 1041409
        %v2781 = vsel %vm2780, %v2529, %v2526
        %vm2782 = vcmask 1042434
        %v2783 = vsel %vm2782, %v2532, %v2781
        %vm2784 = vcmask 1043459
        %v2785 = vsel %vm2784, %v2535, %v2783
        %vm2786 = vcmask 1044484
        %v2787 = vsel %vm2786, %v2538, %v2785
        %vm2788 = vcmask 1045509
        %v2789 = vsel %vm2788, %v2541, %v2787
        %vm2790 = vcmask 1046534
        %v2791 = vsel %vm2790, %v2544, %v2789
        %vm2792 = vcmask 1047559
        %v2793 = vsel %vm2792, %v2547, %v2791
        %v2794 = vsel %vm2780, %v2553, %v2550
        %v2795 = vsel %vm2782, %v2556, %v2794
        %v2796 = vsel %vm2784, %v2559, %v2795
        %v2797 = vsel %vm2786, %v2562, %v2796
        %v2798 = vsel %vm2788, %v2565, %v2797
        %v2799 = vsel %vm2790, %v2568, %v2798
        %v2800 = vsel %vm2792, %v2571, %v2799
        %v2801 = vsel %vm2780, %v2577, %v2574
        %v2802 = vsel %vm2782, %v2580, %v2801
        %v2803 = vsel %vm2784, %v2583, %v2802
        %v2804 = vsel %vm2786, %v2586, %v2803
        %v2805 = vsel %vm2788, %v2589, %v2804
        %v2806 = vsel %vm2790, %v2592, %v2805
        %v2807 = vsel %vm2792, %v2595, %v2806
        %v2808 = vsel %vm2780, %v2601, %v2598
        %v2809 = vsel %vm2782, %v2604, %v2808
        %v2810 = vsel %vm2784, %v2607, %v2809
        %v2811 = vsel %vm2786, %v2610, %v2810
        %v2812 = vsel %vm2788, %v2613, %v2811
        %v2813 = vsel %vm2790, %v2616, %v2812
        %v2814 = vsel %vm2792, %v2619, %v2813
        %v2815 = vsel %vm2780, %v2625, %v2622
        %v2816 = vsel %vm2782, %v2628, %v2815
        %v2817 = vsel %vm2784, %v2631, %v2816
        %v2818 = vsel %vm2786, %v2634, %v2817
        %v2819 = vsel %vm2788, %v2637, %v2818
        %v2820 = vsel %vm2790, %v2640, %v2819
        %v2821 = vsel %vm2792, %v2643, %v2820
        %v2822 = vsel %vm2780, %v2649, %v2646
        %v2823 = vsel %vm2782, %v2652, %v2822
        %v2824 = vsel %vm2784, %v2655, %v2823
        %v2825 = vsel %vm2786, %v2658, %v2824
        %v2826 = vsel %vm2788, %v2661, %v2825
        %v2827 = vsel %vm2790, %v2664, %v2826
        %v2828 = vsel %vm2792, %v2667, %v2827
        %v2829 = vsel %vm2780, %v2673, %v2670
        %v2830 = vsel %vm2782, %v2676, %v2829
        %v2831 = vsel %vm2784, %v2679, %v2830
        %v2832 = vsel %vm2786, %v2682, %v2831
        %v2833 = vsel %vm2788, %v2685, %v2832
        %v2834 = vsel %vm2790, %v2688, %v2833
        %v2835 = vsel %vm2792, %v2691, %v2834
        %v2836 = vsel %vm2780, %v2697, %v2694
        %v2837 = vsel %vm2782, %v2700, %v2836
        %v2838 = vsel %vm2784, %v2703, %v2837
        %v2839 = vsel %vm2786, %v2706, %v2838
        %v2840 = vsel %vm2788, %v2709, %v2839
        %v2841 = vsel %vm2790, %v2712, %v2840
        %v2842 = vsel %vm2792, %v2715, %v2841
        %2851 = vst.msk [vmem:[%s472] sm:$0xff] %vm890, %v2793
        %2852 = vst.msk [vmem:[%s472 + $0x8] sm:$0xff] %vm890, %v2800
        %2853 = vst.msk [vmem:[%s472 + $0x10] sm:$0xff] %vm890, %v2807
        %2854 = vst.msk [vmem:[%s472 + $0x18] sm:$0xff] %vm890, %v2814
        %2855 = vst.msk [vmem:[%s472 + $0x20] sm:$0xff] %vm890, %v2821
        %2856 = vst.msk [vmem:[%s472 + $0x28] sm:$0xff] %vm890, %v2828
        %2857 = vst.msk [vmem:[%s472 + $0x30] sm:$0xff] %vm890, %v2835
        %2858 = vst.msk [vmem:[%s472 + $0x38] sm:$0xff] %vm890, %v2842
        %2859 = vst.msk [vmem:[#allocation2] sm:$0xff] %vm890, 0.0
        %2860 = vst.msk [vmem:[#allocation2 + $0x8] sm:$0x3] %vm1627, 0.0
        %2861 = vst.msk [vmem:[#allocation2 + $0x10] sm:$0xff] %vm890, 0.0
        %2862 = vst.msk [vmem:[#allocation2 + $0x18] sm:$0x3] %vm1627, 0.0
        %2863 = vst.msk [vmem:[#allocation2 + $0x20] sm:$0xff] %vm890, 0.0
        %2864 = vst.msk [vmem:[#allocation2 + $0x28] sm:$0x3] %vm1627, 0.0
        %2865 = vst.msk [vmem:[#allocation2 + $0x30] sm:$0xff] %vm890, 0.0
        %2866 = vst.msk [vmem:[#allocation2 + $0x38] sm:$0x3] %vm1627, 0.0
        %2867 = vst.msk [vmem:[#allocation2 + $0x40] sm:$0xff] %vm890, 0.0
        %2868 = vst.msk [vmem:[#allocation2 + $0x48] sm:$0x3] %vm1627, 0.0
        %2869 = vst.msk [vmem:[#allocation2 + $0x50] sm:$0xff] %vm890, 0.0
        %2870 = vst.msk [vmem:[#allocation2 + $0x58] sm:$0x3] %vm1627, 0.0
        %2871 = vst.msk [vmem:[#allocation2 + $0x60] sm:$0xff] %vm890, 0.0
        %2872 = vst.msk [vmem:[#allocation2 + $0x68] sm:$0x3] %vm1627, 0.0
        %2873 = vst.msk [vmem:[#allocation2 + $0x70] sm:$0xff] %vm890, 0.0
        %2874 = vst.msk [vmem:[#allocation2 + $0x78] sm:$0x3] %vm1627, 0.0
        %2875 = vst.msk [vmem:[#allocation2 + $0x80] sm:$0xff] %vm890, 0.0
        %2876 = vst.msk [vmem:[#allocation2 + $0x88] sm:$0x3] %vm1627, 0.0
        %2877 = vst.msk [vmem:[#allocation2 + $0x90] sm:$0xff] %vm890, 0.0
        %2878 = vst.msk [vmem:[#allocation2 + $0x98] sm:$0x3] %vm1627, 0.0
        %s2879 = scalar_lea.vmem [#allocation2], 16
        %2880 = vst.msk [vmem:[%s2879 + $0x1] sm:$0xff] %vm890, %v2793
        %2881 = vst.msk [vmem:[%s2879 + $0x11] sm:$0xff] %vm890, %v2800
        %2882 = vst.msk [vmem:[%s2879 + $0x21] sm:$0xff] %vm890, %v2807
        %2883 = vst.msk [vmem:[%s2879 + $0x31] sm:$0xff] %vm890, %v2814
        %2884 = vst.msk [vmem:[%s2879 + $0x41] sm:$0xff] %vm890, %v2821
        %2885 = vst.msk [vmem:[%s2879 + $0x51] sm:$0xff] %vm890, %v2828
        %2886 = vst.msk [vmem:[%s2879 + $0x61] sm:$0xff] %vm890, %v2835
        %2887 = vst.msk [vmem:[%s2879 + $0x71] sm:$0xff] %vm890, %v2842
        %v2888 = vld [vmem:[#allocation2] sm:$0xff]
        %v2889 = vld [vmem:[#allocation2 + $0x10] sm:$0xff]
        %v2890 = vld [vmem:[#allocation2 + $0x20] sm:$0xff]
        %v2891 = vld [vmem:[#allocation2 + $0x30] sm:$0xff]
        %v2892 = vld [vmem:[#allocation2 + $0x40] sm:$0xff]
        %v2893 = vld [vmem:[#allocation2 + $0x50] sm:$0xff]
        %v2894 = vld [vmem:[#allocation2 + $0x60] sm:$0xff]
        %v2895 = vld [vmem:[#allocation2 + $0x70] sm:$0xff]
        %2896 = vst.msk [vmem:[#allocation3] sm:$0xff] %vm890, %v2888
        %2897 = vst.msk [vmem:[#allocation3 + $0x10] sm:$0xff] %vm890, %v2889
        %2898 = vst.msk [vmem:[#allocation3 + $0x20] sm:$0xff] %vm890, %v2890
        %2899 = vst.msk [vmem:[#allocation3 + $0x30] sm:$0xff] %vm890, %v2891
        %2900 = vst.msk [vmem:[#allocation3 + $0x40] sm:$0xff] %vm890, %v2892
        %2901 = vst.msk [vmem:[#allocation3 + $0x50] sm:$0xff] %vm890, %v2893
        %2902 = vst.msk [vmem:[#allocation3 + $0x60] sm:$0xff] %vm890, %v2894
        %2903 = vst.msk [vmem:[#allocation3 + $0x70] sm:$0xff] %vm890, %v2895
        %v2904 = vld [vmem:[#allocation2 + $0x1] sm:$0xff]
        %v2905 = vld [vmem:[#allocation2 + $0x11] sm:$0xff]
        %v2906 = vld [vmem:[#allocation2 + $0x21] sm:$0xff]
        %v2907 = vld [vmem:[#allocation2 + $0x31] sm:$0xff]
        %v2908 = vld [vmem:[#allocation2 + $0x41] sm:$0xff]
        %v2909 = vld [vmem:[#allocation2 + $0x51] sm:$0xff]
        %v2910 = vld [vmem:[#allocation2 + $0x61] sm:$0xff]
        %v2911 = vld [vmem:[#allocation2 + $0x71] sm:$0xff]
        %2920 = vrot.lane.b32.xlu0 %v2904, 16
        %v2921 = vpop.permute.xlu0 %2920
        %2922 = vrot.lane.b32.xlu0 %v2905, 16
        %v2923 = vpop.permute.xlu0 %2922
        %2924 = vrot.lane.b32.xlu0 %v2906, 16
        %v2925 = vpop.permute.xlu0 %2924
        %2926 = vrot.lane.b32.xlu0 %v2907, 16
        %v2927 = vpop.permute.xlu0 %2926
        %2928 = vrot.lane.b32.xlu0 %v2908, 16
        %v2929 = vpop.permute.xlu0 %2928
        %2930 = vrot.lane.b32.xlu0 %v2909, 16
        %v2931 = vpop.permute.xlu0 %2930
        %2932 = vrot.lane.b32.xlu0 %v2910, 16
        %v2933 = vpop.permute.xlu0 %2932
        %2934 = vrot.lane.b32.xlu0 %v2911, 16
        %v2935 = vpop.permute.xlu0 %2934
        %vm2944 = vcmask 261248
        %2945 = vst.msk [vmem:[#allocation3] sm:$0xff] %vm2944, %v2921
        %2946 = vst.msk [vmem:[#allocation3 + $0x10] sm:$0xff] %vm2944, %v2923
        %2947 = vst.msk [vmem:[#allocation3 + $0x20] sm:$0xff] %vm2944, %v2925
        %2948 = vst.msk [vmem:[#allocation3 + $0x30] sm:$0xff] %vm2944, %v2927
        %2949 = vst.msk [vmem:[#allocation3 + $0x40] sm:$0xff] %vm2944, %v2929
        %2950 = vst.msk [vmem:[#allocation3 + $0x50] sm:$0xff] %vm2944, %v2931
        %2951 = vst.msk [vmem:[#allocation3 + $0x60] sm:$0xff] %vm2944, %v2933
        %2952 = vst.msk [vmem:[#allocation3 + $0x70] sm:$0xff] %vm2944, %v2935
        %v2953 = vld [vmem:[#allocation2 + $0x2] sm:$0xff]
        %v2954 = vld [vmem:[#allocation2 + $0x12] sm:$0xff]
        %v2955 = vld [vmem:[#allocation2 + $0x22] sm:$0xff]
        %v2956 = vld [vmem:[#allocation2 + $0x32] sm:$0xff]
        %v2957 = vld [vmem:[#allocation2 + $0x42] sm:$0xff]
        %v2958 = vld [vmem:[#allocation2 + $0x52] sm:$0xff]
        %v2959 = vld [vmem:[#allocation2 + $0x62] sm:$0xff]
        %v2960 = vld [vmem:[#allocation2 + $0x72] sm:$0xff]
        %2969 = vrot.lane.b32.xlu0 %v2953, 32
        %v2970 = vpop.permute.xlu0 %2969
        %2971 = vrot.lane.b32.xlu0 %v2954, 32
        %v2972 = vpop.permute.xlu0 %2971
        %2973 = vrot.lane.b32.xlu0 %v2955, 32
        %v2974 = vpop.permute.xlu0 %2973
        %2975 = vrot.lane.b32.xlu0 %v2956, 32
        %v2976 = vpop.permute.xlu0 %2975
        %2977 = vrot.lane.b32.xlu0 %v2957, 32
        %v2978 = vpop.permute.xlu0 %2977
        %2979 = vrot.lane.b32.xlu0 %v2958, 32
        %v2980 = vpop.permute.xlu0 %2979
        %2981 = vrot.lane.b32.xlu0 %v2959, 32
        %v2982 = vpop.permute.xlu0 %2981
        %2983 = vrot.lane.b32.xlu0 %v2960, 32
        %v2984 = vpop.permute.xlu0 %2983
        %vm2993 = vcmask 392448
        %2994 = vst.msk [vmem:[#allocation3] sm:$0xff] %vm2993, %v2970
        %2995 = vst.msk [vmem:[#allocation3 + $0x10] sm:$0xff] %vm2993, %v2972
        %2996 = vst.msk [vmem:[#allocation3 + $0x20] sm:$0xff] %vm2993, %v2974
        %2997 = vst.msk [vmem:[#allocation3 + $0x30] sm:$0xff] %vm2993, %v2976
        %2998 = vst.msk [vmem:[#allocation3 + $0x40] sm:$0xff] %vm2993, %v2978
        %2999 = vst.msk [vmem:[#allocation3 + $0x50] sm:$0xff] %vm2993, %v2980
        %3000 = vst.msk [vmem:[#allocation3 + $0x60] sm:$0xff] %vm2993, %v2982
        %3001 = vst.msk [vmem:[#allocation3 + $0x70] sm:$0xff] %vm2993, %v2984
        %v3002 = vld [vmem:[%s2879] sm:$0xff]
        %v3003 = vld [vmem:[%s2879 + $0x10] sm:$0xff]
        %v3004 = vld [vmem:[%s2879 + $0x20] sm:$0xff]
        %v3005 = vld [vmem:[%s2879 + $0x30] sm:$0xff]
        %v3006 = vld [vmem:[%s2879 + $0x40] sm:$0xff]
        %v3007 = vld [vmem:[%s2879 + $0x50] sm:$0xff]
        %v3008 = vld [vmem:[%s2879 + $0x60] sm:$0xff]
        %v3009 = vld [vmem:[%s2879 + $0x70] sm:$0xff]
        %3018 = vrot.lane.b32.xlu0 %v3002, 48
        %v3019 = vpop.permute.xlu0 %3018
        %3020 = vrot.lane.b32.xlu0 %v3003, 48
        %v3021 = vpop.permute.xlu0 %3020
        %3022 = vrot.lane.b32.xlu0 %v3004, 48
        %v3023 = vpop.permute.xlu0 %3022
        %3024 = vrot.lane.b32.xlu0 %v3005, 48
        %v3025 = vpop.permute.xlu0 %3024
        %3026 = vrot.lane.b32.xlu0 %v3006, 48
        %v3027 = vpop.permute.xlu0 %3026
        %3028 = vrot.lane.b32.xlu0 %v3007, 48
        %v3029 = vpop.permute.xlu0 %3028
        %3030 = vrot.lane.b32.xlu0 %v3008, 48
        %v3031 = vpop.permute.xlu0 %3030
        %3032 = vrot.lane.b32.xlu0 %v3009, 48
        %v3033 = vpop.permute.xlu0 %3032
        %vm3042 = vcmask 523648
        %3043 = vst.msk [vmem:[#allocation3] sm:$0xff] %vm3042, %v3019
        %3044 = vst.msk [vmem:[#allocation3 + $0x10] sm:$0xff] %vm3042, %v3021
        %3045 = vst.msk [vmem:[#allocation3 + $0x20] sm:$0xff] %vm3042, %v3023
        %3046 = vst.msk [vmem:[#allocation3 + $0x30] sm:$0xff] %vm3042, %v3025
        %3047 = vst.msk [vmem:[#allocation3 + $0x40] sm:$0xff] %vm3042, %v3027
        %3048 = vst.msk [vmem:[#allocation3 + $0x50] sm:$0xff] %vm3042, %v3029
        %3049 = vst.msk [vmem:[#allocation3 + $0x60] sm:$0xff] %vm3042, %v3031
        %3050 = vst.msk [vmem:[#allocation3 + $0x70] sm:$0xff] %vm3042, %v3033
        %v3051 = vld [vmem:[%s2879 + $0x1] sm:$0xff]
        %v3052 = vld [vmem:[%s2879 + $0x11] sm:$0xff]
        %v3053 = vld [vmem:[%s2879 + $0x21] sm:$0xff]
        %v3054 = vld [vmem:[%s2879 + $0x31] sm:$0xff]
        %v3055 = vld [vmem:[%s2879 + $0x41] sm:$0xff]
        %v3056 = vld [vmem:[%s2879 + $0x51] sm:$0xff]
        %v3057 = vld [vmem:[%s2879 + $0x61] sm:$0xff]
        %v3058 = vld [vmem:[%s2879 + $0x71] sm:$0xff]
        %3067 = vrot.lane.b32.xlu0 %v3051, 64
        %v3068 = vpop.permute.xlu0 %3067
        %3069 = vrot.lane.b32.xlu0 %v3052, 64
        %v3070 = vpop.permute.xlu0 %3069
        %3071 = vrot.lane.b32.xlu0 %v3053, 64
        %v3072 = vpop.permute.xlu0 %3071
        %3073 = vrot.lane.b32.xlu0 %v3054, 64
        %v3074 = vpop.permute.xlu0 %3073
        %3075 = vrot.lane.b32.xlu0 %v3055, 64
        %v3076 = vpop.permute.xlu0 %3075
        %3077 = vrot.lane.b32.xlu0 %v3056, 64
        %v3078 = vpop.permute.xlu0 %3077
        %3079 = vrot.lane.b32.xlu0 %v3057, 64
        %v3080 = vpop.permute.xlu0 %3079
        %3081 = vrot.lane.b32.xlu0 %v3058, 64
        %v3082 = vpop.permute.xlu0 %3081
        %vm3091 = vcmask 654848
        %3092 = vst.msk [vmem:[#allocation3] sm:$0xff] %vm3091, %v3068
        %3093 = vst.msk [vmem:[#allocation3 + $0x10] sm:$0xff] %vm3091, %v3070
        %3094 = vst.msk [vmem:[#allocation3 + $0x20] sm:$0xff] %vm3091, %v3072
        %3095 = vst.msk [vmem:[#allocation3 + $0x30] sm:$0xff] %vm3091, %v3074
        %3096 = vst.msk [vmem:[#allocation3 + $0x40] sm:$0xff] %vm3091, %v3076
        %3097 = vst.msk [vmem:[#allocation3 + $0x50] sm:$0xff] %vm3091, %v3078
        %3098 = vst.msk [vmem:[#allocation3 + $0x60] sm:$0xff] %vm3091, %v3080
        %3099 = vst.msk [vmem:[#allocation3 + $0x70] sm:$0xff] %vm3091, %v3082
        %v3100 = vld [vmem:[%s2879 + $0x2] sm:$0xff]
        %v3101 = vld [vmem:[%s2879 + $0x12] sm:$0xff]
        %v3102 = vld [vmem:[%s2879 + $0x22] sm:$0xff]
        %v3103 = vld [vmem:[%s2879 + $0x32] sm:$0xff]
        %v3104 = vld [vmem:[%s2879 + $0x42] sm:$0xff]
        %v3105 = vld [vmem:[%s2879 + $0x52] sm:$0xff]
        %v3106 = vld [vmem:[%s2879 + $0x62] sm:$0xff]
        %v3107 = vld [vmem:[%s2879 + $0x72] sm:$0xff]
        %3116 = vrot.lane.b32.xlu0 %v3100, 80
        %v3117 = vpop.permute.xlu0 %3116
        %3118 = vrot.lane.b32.xlu0 %v3101, 80
        %v3119 = vpop.permute.xlu0 %3118
        %3120 = vrot.lane.b32.xlu0 %v3102, 80
        %v3121 = vpop.permute.xlu0 %3120
        %3122 = vrot.lane.b32.xlu0 %v3103, 80
        %v3123 = vpop.permute.xlu0 %3122
        %3124 = vrot.lane.b32.xlu0 %v3104, 80
        %v3125 = vpop.permute.xlu0 %3124
        %3126 = vrot.lane.b32.xlu0 %v3105, 80
        %v3127 = vpop.permute.xlu0 %3126
        %3128 = vrot.lane.b32.xlu0 %v3106, 80
        %v3129 = vpop.permute.xlu0 %3128
        %3130 = vrot.lane.b32.xlu0 %v3107, 80
        %v3131 = vpop.permute.xlu0 %3130
        %vm3140 = vcmask 786048
        %3141 = vst.msk [vmem:[#allocation3] sm:$0xff] %vm3140, %v3117
        %3142 = vst.msk [vmem:[#allocation3 + $0x10] sm:$0xff] %vm3140, %v3119
        %3143 = vst.msk [vmem:[#allocation3 + $0x20] sm:$0xff] %vm3140, %v3121
        %3144 = vst.msk [vmem:[#allocation3 + $0x30] sm:$0xff] %vm3140, %v3123
        %3145 = vst.msk [vmem:[#allocation3 + $0x40] sm:$0xff] %vm3140, %v3125
        %3146 = vst.msk [vmem:[#allocation3 + $0x50] sm:$0xff] %vm3140, %v3127
        %3147 = vst.msk [vmem:[#allocation3 + $0x60] sm:$0xff] %vm3140, %v3129
        %3148 = vst.msk [vmem:[#allocation3 + $0x70] sm:$0xff] %vm3140, %v3131
        %s3149 = scalar_lea.vmem [#allocation2], 32
        %v3150 = vld [vmem:[%s3149] sm:$0xff]
        %v3151 = vld [vmem:[%s3149 + $0x10] sm:$0xff]
        %v3152 = vld [vmem:[%s3149 + $0x20] sm:$0xff]
        %v3153 = vld [vmem:[%s3149 + $0x30] sm:$0xff]
        %v3154 = vld [vmem:[%s3149 + $0x40] sm:$0xff]
        %v3155 = vld [vmem:[%s3149 + $0x50] sm:$0xff]
        %v3156 = vld [vmem:[%s3149 + $0x60] sm:$0xff]
        %v3157 = vld [vmem:[%s3149 + $0x70] sm:$0xff]
        %3166 = vrot.lane.b32.xlu0 %v3150, 96
        %v3167 = vpop.permute.xlu0 %3166
        %3168 = vrot.lane.b32.xlu0 %v3151, 96
        %v3169 = vpop.permute.xlu0 %3168
        %3170 = vrot.lane.b32.xlu0 %v3152, 96
        %v3171 = vpop.permute.xlu0 %3170
        %3172 = vrot.lane.b32.xlu0 %v3153, 96
        %v3173 = vpop.permute.xlu0 %3172
        %3174 = vrot.lane.b32.xlu0 %v3154, 96
        %v3175 = vpop.permute.xlu0 %3174
        %3176 = vrot.lane.b32.xlu0 %v3155, 96
        %v3177 = vpop.permute.xlu0 %3176
        %3178 = vrot.lane.b32.xlu0 %v3156, 96
        %v3179 = vpop.permute.xlu0 %3178
        %3180 = vrot.lane.b32.xlu0 %v3157, 96
        %v3181 = vpop.permute.xlu0 %3180
        %vm3190 = vcmask 917248
        %3191 = vst.msk [vmem:[#allocation3] sm:$0xff] %vm3190, %v3167
        %3192 = vst.msk [vmem:[#allocation3 + $0x10] sm:$0xff] %vm3190, %v3169
        %3193 = vst.msk [vmem:[#allocation3 + $0x20] sm:$0xff] %vm3190, %v3171
        %3194 = vst.msk [vmem:[#allocation3 + $0x30] sm:$0xff] %vm3190, %v3173
        %3195 = vst.msk [vmem:[#allocation3 + $0x40] sm:$0xff] %vm3190, %v3175
        %3196 = vst.msk [vmem:[#allocation3 + $0x50] sm:$0xff] %vm3190, %v3177
        %3197 = vst.msk [vmem:[#allocation3 + $0x60] sm:$0xff] %vm3190, %v3179
        %3198 = vst.msk [vmem:[#allocation3 + $0x70] sm:$0xff] %vm3190, %v3181
        %v3199 = vld [vmem:[%s3149 + $0x1] sm:$0xff]
        %v3200 = vld [vmem:[%s3149 + $0x11] sm:$0xff]
        %v3201 = vld [vmem:[%s3149 + $0x21] sm:$0xff]
        %v3202 = vld [vmem:[%s3149 + $0x31] sm:$0xff]
        %v3203 = vld [vmem:[%s3149 + $0x41] sm:$0xff]
        %v3204 = vld [vmem:[%s3149 + $0x51] sm:$0xff]
        %v3205 = vld [vmem:[%s3149 + $0x61] sm:$0xff]
        %v3206 = vld [vmem:[%s3149 + $0x71] sm:$0xff]
        %3215 = vrot.lane.b32.xlu0 %v3199, 112
        %v3216 = vpop.permute.xlu0 %3215
        %3217 = vrot.lane.b32.xlu0 %v3200, 112
        %v3218 = vpop.permute.xlu0 %3217
        %3219 = vrot.lane.b32.xlu0 %v3201, 112
        %v3220 = vpop.permute.xlu0 %3219
        %3221 = vrot.lane.b32.xlu0 %v3202, 112
        %v3222 = vpop.permute.xlu0 %3221
        %3223 = vrot.lane.b32.xlu0 %v3203, 112
        %v3224 = vpop.permute.xlu0 %3223
        %3225 = vrot.lane.b32.xlu0 %v3204, 112
        %v3226 = vpop.permute.xlu0 %3225
        %3227 = vrot.lane.b32.xlu0 %v3205, 112
        %v3228 = vpop.permute.xlu0 %3227
        %3229 = vrot.lane.b32.xlu0 %v3206, 112
        %v3230 = vpop.permute.xlu0 %3229
        %vm3239 = vcmask 1048448
        %3240 = vst.msk [vmem:[#allocation3] sm:$0xff] %vm3239, %v3216
        %3241 = vst.msk [vmem:[#allocation3 + $0x10] sm:$0xff] %vm3239, %v3218
        %3242 = vst.msk [vmem:[#allocation3 + $0x20] sm:$0xff] %vm3239, %v3220
        %3243 = vst.msk [vmem:[#allocation3 + $0x30] sm:$0xff] %vm3239, %v3222
        %3244 = vst.msk [vmem:[#allocation3 + $0x40] sm:$0xff] %vm3239, %v3224
        %3245 = vst.msk [vmem:[#allocation3 + $0x50] sm:$0xff] %vm3239, %v3226
        %3246 = vst.msk [vmem:[#allocation3 + $0x60] sm:$0xff] %vm3239, %v3228
        %3247 = vst.msk [vmem:[#allocation3 + $0x70] sm:$0xff] %vm3239, %v3230
        %v3248 = vld [vmem:[%s3149 + $0x2] sm:$0xff]
        %v3249 = vld [vmem:[%s3149 + $0x12] sm:$0xff]
        %v3250 = vld [vmem:[%s3149 + $0x22] sm:$0xff]
        %v3251 = vld [vmem:[%s3149 + $0x32] sm:$0xff]
        %v3252 = vld [vmem:[%s3149 + $0x42] sm:$0xff]
        %v3253 = vld [vmem:[%s3149 + $0x52] sm:$0xff]
        %v3254 = vld [vmem:[%s3149 + $0x62] sm:$0xff]
        %v3255 = vld [vmem:[%s3149 + $0x72] sm:$0xff]
        %3256 = vst.msk [vmem:[#allocation3 + $0x8] sm:$0xff] %vm890, %v3248
        %3257 = vst.msk [vmem:[#allocation3 + $0x18] sm:$0xff] %vm890, %v3249
        %3258 = vst.msk [vmem:[#allocation3 + $0x28] sm:$0xff] %vm890, %v3250
        %3259 = vst.msk [vmem:[#allocation3 + $0x38] sm:$0xff] %vm890, %v3251
        %3260 = vst.msk [vmem:[#allocation3 + $0x48] sm:$0xff] %vm890, %v3252
        %3261 = vst.msk [vmem:[#allocation3 + $0x58] sm:$0xff] %vm890, %v3253
        %3262 = vst.msk [vmem:[#allocation3 + $0x68] sm:$0xff] %vm890, %v3254
        %3263 = vst.msk [vmem:[#allocation3 + $0x78] sm:$0xff] %vm890, %v3255
        %v3264 = vld [vmem:[#allocation3] sm:$0xff]
        %v3265 = vld [vmem:[#allocation3 + $0x8] sm:$0xff]
        %v3266 = vld [vmem:[#allocation3 + $0x10] sm:$0xff]
        %v3267 = vld [vmem:[#allocation3 + $0x18] sm:$0xff]
        %v3268 = vld [vmem:[#allocation3 + $0x20] sm:$0xff]
        %v3269 = vld [vmem:[#allocation3 + $0x28] sm:$0xff]
        %v3270 = vld [vmem:[#allocation3 + $0x30] sm:$0xff]
        %v3271 = vld [vmem:[#allocation3 + $0x38] sm:$0xff]
        %v3272 = vld [vmem:[#allocation3 + $0x40] sm:$0xff]
        %v3273 = vld [vmem:[#allocation3 + $0x48] sm:$0xff]
        %v3274 = vld [vmem:[#allocation3 + $0x50] sm:$0xff]
        %v3275 = vld [vmem:[#allocation3 + $0x58] sm:$0xff]
        %v3276 = vld [vmem:[#allocation3 + $0x60] sm:$0xff]
        %v3277 = vld [vmem:[#allocation3 + $0x68] sm:$0xff]
        %v3278 = vld [vmem:[#allocation3 + $0x70] sm:$0xff]
        %v3279 = vld [vmem:[#allocation3 + $0x78] sm:$0xff]
        %v3280 = vld [vmem:[%s3] sm:$0xff]
        %v3281 = vld [vmem:[%s3 + $0x8] sm:$0xff]
        %v3282 = vld [vmem:[%s3 + $0x10] sm:$0xff]
        %v3283 = vld [vmem:[%s3 + $0x18] sm:$0xff]
        %v3284 = vld [vmem:[%s3 + $0x20] sm:$0xff]
        %v3285 = vld [vmem:[%s3 + $0x28] sm:$0xff]
        %v3286 = vld [vmem:[%s3 + $0x30] sm:$0xff]
        %v3287 = vld [vmem:[%s3 + $0x38] sm:$0xff]
        %v3288 = vld [vmem:[%s3 + $0x40] sm:$0xff]
        %v3289 = vld [vmem:[%s3 + $0x48] sm:$0xff]
        %v3290 = vld [vmem:[%s3 + $0x50] sm:$0xff]
        %v3291 = vld [vmem:[%s3 + $0x58] sm:$0xff]
        %v3292 = vld [vmem:[%s3 + $0x60] sm:$0xff]
        %v3293 = vld [vmem:[%s3 + $0x68] sm:$0xff]
        %v3294 = vld [vmem:[%s3 + $0x70] sm:$0xff]
        %v3295 = vld [vmem:[%s3 + $0x78] sm:$0xff]
        %v3296 = vld [vmem:[%s3 + $0x80] sm:$0xff]
        %v3297 = vld [vmem:[%s3 + $0x88] sm:$0xff]
        %v3298 = vld [vmem:[%s4] sm:$0x1]
        %v3300 = vlaneseq
        %v3301 = vshrl.u32 %v3300, 7
        %v3302 = vsub.s32 0, %v3301
        %v3303 = vrot.slane %v3298, %v3302
        %v3306 = vsel %vm890, %v3265, 0
        %v3309 = vsel %vm890, %v3267, 0
        %v3312 = vsel %vm890, %v3269, 0
        %v3315 = vsel %vm890, %v3271, 0
        %v3318 = vsel %vm890, %v3273, 0
        %v3321 = vsel %vm890, %v3275, 0
        %v3324 = vsel %vm890, %v3277, 0
        %v3327 = vsel %vm890, %v3279, 0
        %3329 = vmatprep.subr.mxu0 0.0
        %3330 = vmatpush1.msra.mxu0 %v3280
        %3331 = vmatprep.subr.mxu0 0.0
        %3332 = vmatpush1.msra.mxu0 %v3281
        %3333 = vmatprep.subr.mxu0 0.0
        %3334 = vmatpush1.msra.mxu0 %v3282
        %3335 = vmatprep.subr.mxu0 0.0
        %3336 = vmatpush1.msra.mxu0 %v3283
        %3337 = vmatprep.subr.mxu0 0.0
        %3338 = vmatpush1.msra.mxu0 %v3284
        %3339 = vmatprep.subr.mxu0 0.0
        %3340 = vmatpush1.msra.mxu0 %v3285
        %3341 = vmatprep.subr.mxu0 0.0
        %3342 = vmatpush1.msra.mxu0 %v3286
        %3343 = vmatprep.subr.mxu0 0.0
        %3344 = vmatpush1.msra.mxu0 %v3287
        %3345 = vmatprep.subr.mxu0 0.0
        %3346 = vmatpush1.msra.mxu0 %v3288
        %3347 = vmatprep.subr.mxu0 0.0
        %3348 = vmatpush1.msra.mxu0 %v3289
        %3349 = vmatprep.subr.mxu0 0.0
        %3350 = vmatpush1.msra.mxu0 %v3290
        %3351 = vmatprep.subr.mxu0 0.0
        %3352 = vmatpush1.msra.mxu0 %v3291
        %3353 = vmatprep.subr.mxu0 0.0
        %3354 = vmatpush1.msra.mxu0 %v3292
        %3355 = vmatprep.subr.mxu0 0.0
        %3356 = vmatpush1.msra.mxu0 %v3293
        %3357 = vmatprep.subr.mxu0 0.0
        %3358 = vmatpush1.msra.mxu0 %v3294
        %3359 = vmatprep.subr.mxu0 0.0
        %3360 = vmatpush1.msra.mxu0 %v3295
        %3361 = vmatprep.subr.mxu0 0.0
        %3362 = vmatpush1.msra.mxu0 %v3296
        %3363 = vmatprep.subr.mxu0 0.0
        %3364 = vmatpush1.msra.mxu0 %v3297
        %3365 = vmatprep.subr.mxu0 0.0
        %3366 = vmatpush1.msra.mxu0 0.0
        %3367 = vmatprep.subr.mxu0 0.0
        %3368 = vmatpush1.msra.mxu0 0.0
        %3369 = vmatprep.subr.mxu0 0.0
        %3370 = vmatpush1.msra.mxu0 0.0
        %3371 = vmatprep.subr.mxu0 0.0
        %3372 = vmatpush1.msra.mxu0 0.0
        %3373 = vmatprep.subr.mxu0 0.0
        %3374 = vmatpush1.msra.mxu0 0.0
        %3375 = vmatprep.subr.mxu0 0.0
        %3376 = vmatpush1.msra.mxu0 0.0
        %3377 = vmatprep.subr.mxu0 0.0
        %3378 = vmatpush1.msra.mxu0 0.0
        %3379 = vmatprep.subr.mxu0 0.0
        %3380 = vmatpush1.msra.mxu0 0.0
        %3381 = vmatprep.subr.mxu0 0.0
        %3382 = vmatpush1.msra.mxu0 0.0
        %3383 = vmatprep.subr.mxu0 0.0
        %3384 = vmatpush1.msra.mxu0 0.0
        %3385 = vmatprep.subr.mxu0 0.0
        %3386 = vmatpush1.msra.mxu0 0.0
        %3387 = vmatprep.subr.mxu0 0.0
        %3388 = vmatpush1.msra.mxu0 0.0
        %3389 = vmatprep.subr.mxu0 0.0
        %3390 = vmatpush1.msra.mxu0 0.0
        %3391 = vmatprep.subr.mxu0 0.0
        %3392 = vmatpush1.msra.mxu0 0.0
        %3393 = vmatprep.mubr.f32.mxu0 %v3306
        %3394 = vmatmul.mubr.f32.gmra.mrb[0].mxu0 %v3264
        %v3395 = vpop.f32.mrb[0].mxu0
        %v3396 = vadd.f32 %v3303, %v3395
        %v3397 = vpop.f32.mrb[0].mxu0
        %3398 = vmatprep.mubr.f32.mxu0 %v3309
        %3399 = vmatmul.mubr.f32.gmra.mrb[0].mxu0 %v3266
        %v3400 = vpop.f32.mrb[0].mxu0
        %v3401 = vadd.f32 %v3303, %v3400
        %v3402 = vpop.f32.mrb[0].mxu0
        %3403 = vmatprep.mubr.f32.mxu0 %v3312
        %3404 = vmatmul.mubr.f32.gmra.mrb[0].mxu0 %v3268
        %v3405 = vpop.f32.mrb[0].mxu0
        %v3406 = vadd.f32 %v3303, %v3405
        %v3407 = vpop.f32.mrb[0].mxu0
        %3408 = vmatprep.mubr.f32.mxu0 %v3315
        %3409 = vmatmul.mubr.f32.gmra.mrb[0].mxu0 %v3270
        %v3410 = vpop.f32.mrb[0].mxu0
        %v3411 = vadd.f32 %v3303, %v3410
        %v3412 = vpop.f32.mrb[0].mxu0
        %3413 = vmatprep.mubr.f32.mxu0 %v3318
        %3414 = vmatmul.mubr.f32.gmra.mrb[0].mxu0 %v3272
        %v3415 = vpop.f32.mrb[0].mxu0
        %v3416 = vadd.f32 %v3303, %v3415
        %v3417 = vpop.f32.mrb[0].mxu0
        %3418 = vmatprep.mubr.f32.mxu0 %v3321
        %3419 = vmatmul.mubr.f32.gmra.mrb[0].mxu0 %v3274
        %v3420 = vpop.f32.mrb[0].mxu0
        %v3421 = vadd.f32 %v3303, %v3420
        %v3422 = vpop.f32.mrb[0].mxu0
        %3423 = vmatprep.mubr.f32.mxu0 %v3324
        %3424 = vmatmul.mubr.f32.gmra.mrb[0].mxu0 %v3276
        %v3425 = vpop.f32.mrb[0].mxu0
        %v3426 = vadd.f32 %v3303, %v3425
        %v3427 = vpop.f32.mrb[0].mxu0
        %3428 = vmatprep.mubr.f32.mxu0 %v3327
        %3429 = vmatmul.mubr.f32.gmra.mrb[0].mxu0 %v3278
        %v3430 = vpop.f32.mrb[0].mxu0
        %v3431 = vadd.f32 %v3303, %v3430
        %v3432 = vpop.f32.mrb[0].mxu0
        %3433 = vdwg.mxu0
        %v3434 = vmax.f32 %v3396, 0.0
        %v3435 = vmax.f32 %v3401, 0.0
        %v3436 = vmax.f32 %v3406, 0.0
        %v3437 = vmax.f32 %v3411, 0.0
        %v3438 = vmax.f32 %v3416, 0.0
        %v3439 = vmax.f32 %v3421, 0.0
        %v3440 = vmax.f32 %v3426, 0.0
        %v3441 = vmax.f32 %v3431, 0.0
        %vm3442 = vcmask 261120
        %3443 = vst.msk [vmem:[%s479] sm:$0xff] %vm3442, %v3434
        %3444 = vst.msk [vmem:[%s479 + $0x8] sm:$0xff] %vm3442, %v3435
        %3445 = vst.msk [vmem:[%s479 + $0x10] sm:$0xff] %vm3442, %v3436
        %3446 = vst.msk [vmem:[%s479 + $0x18] sm:$0xff] %vm3442, %v3437
        %3447 = vst.msk [vmem:[%s479 + $0x20] sm:$0xff] %vm3442, %v3438
        %3448 = vst.msk [vmem:[%s479 + $0x28] sm:$0xff] %vm3442, %v3439
        %3449 = vst.msk [vmem:[%s479 + $0x30] sm:$0xff] %vm3442, %v3440
        %3450 = vst.msk [vmem:[%s479 + $0x38] sm:$0xff] %vm3442, %v3441
        %v3459 = vcombine.high %v3434, %v3434
        %v3461 = vunpack.c.l.s4 1983009808
        %v3462 = vunpack.c.0.s8 %v3461
        %v3463 = vlaneseq
        %v3464 = vshrl.u32 %v3463, 7
        %v3465 = vsub.s32 %v3462, %v3464
        %v3466 = vrot.slane %v3434, %v3465
        %v3468 = vunpack.c.l.s4 1983009808
        %v3469 = vunpack.c.0.s8 %v3468
        %v3470 = vlaneseq
        %v3471 = vshrl.u32 %v3470, 7
        %v3472 = vsub.s32 %v3469, %v3471
        %v3473 = vrot.slane %v3459, %v3472
        %v3474 = vcombine.high %v3466, %v3466
        %v3475 = vcombine.high %v3473, %v3473
        %v3476 = vcombine.high %v3435, %v3435
        %v3478 = vunpack.c.l.s4 1983009808
        %v3479 = vunpack.c.0.s8 %v3478
        %v3480 = vlaneseq
        %v3481 = vshrl.u32 %v3480, 7
        %v3482 = vsub.s32 %v3479, %v3481
        %v3483 = vrot.slane %v3435, %v3482
        %v3485 = vunpack.c.l.s4 1983009808
        %v3486 = vunpack.c.0.s8 %v3485
        %v3487 = vlaneseq
        %v3488 = vshrl.u32 %v3487, 7
        %v3489 = vsub.s32 %v3486, %v3488
        %v3490 = vrot.slane %v3476, %v3489
        %v3491 = vcombine.high %v3483, %v3483
        %v3492 = vcombine.high %v3490, %v3490
        %v3493 = vcombine.high %v3436, %v3436
        %v3495 = vunpack.c.l.s4 1983009808
        %v3496 = vunpack.c.0.s8 %v3495
        %v3497 = vlaneseq
        %v3498 = vshrl.u32 %v3497, 7
        %v3499 = vsub.s32 %v3496, %v3498
        %v3500 = vrot.slane %v3436, %v3499
        %v3502 = vunpack.c.l.s4 1983009808
        %v3503 = vunpack.c.0.s8 %v3502
        %v3504 = vlaneseq
        %v3505 = vshrl.u32 %v3504, 7
        %v3506 = vsub.s32 %v3503, %v3505
        %v3507 = vrot.slane %v3493, %v3506
        %v3508 = vcombine.high %v3500, %v3500
        %v3509 = vcombine.high %v3507, %v3507
        %v3510 = vcombine.high %v3437, %v3437
        %v3512 = vunpack.c.l.s4 1983009808
        %v3513 = vunpack.c.0.s8 %v3512
        %v3514 = vlaneseq
        %v3515 = vshrl.u32 %v3514, 7
        %v3516 = vsub.s32 %v3513, %v3515
        %v3517 = vrot.slane %v3437, %v3516
        %v3519 = vunpack.c.l.s4 1983009808
        %v3520 = vunpack.c.0.s8 %v3519
        %v3521 = vlaneseq
        %v3522 = vshrl.u32 %v3521, 7
        %v3523 = vsub.s32 %v3520, %v3522
        %v3524 = vrot.slane %v3510, %v3523
        %v3525 = vcombine.high %v3517, %v3517
        %v3526 = vcombine.high %v3524, %v3524
        %v3527 = vcombine.high %v3438, %v3438
        %v3529 = vunpack.c.l.s4 1983009808
        %v3530 = vunpack.c.0.s8 %v3529
        %v3531 = vlaneseq
        %v3532 = vshrl.u32 %v3531, 7
        %v3533 = vsub.s32 %v3530, %v3532
        %v3534 = vrot.slane %v3438, %v3533
        %v3536 = vunpack.c.l.s4 1983009808
        %v3537 = vunpack.c.0.s8 %v3536
        %v3538 = vlaneseq
        %v3539 = vshrl.u32 %v3538, 7
        %v3540 = vsub.s32 %v3537, %v3539
        %v3541 = vrot.slane %v3527, %v3540
        %v3542 = vcombine.high %v3534, %v3534
        %v3543 = vcombine.high %v3541, %v3541
        %v3544 = vcombine.high %v3439, %v3439
        %v3546 = vunpack.c.l.s4 1983009808
        %v3547 = vunpack.c.0.s8 %v3546
        %v3548 = vlaneseq
        %v3549 = vshrl.u32 %v3548, 7
        %v3550 = vsub.s32 %v3547, %v3549
        %v3551 = vrot.slane %v3439, %v3550
        %v3553 = vunpack.c.l.s4 1983009808
        %v3554 = vunpack.c.0.s8 %v3553
        %v3555 = vlaneseq
        %v3556 = vshrl.u32 %v3555, 7
        %v3557 = vsub.s32 %v3554, %v3556
        %v3558 = vrot.slane %v3544, %v3557
        %v3559 = vcombine.high %v3551, %v3551
        %v3560 = vcombine.high %v3558, %v3558
        %v3561 = vcombine.high %v3440, %v3440
        %v3563 = vunpack.c.l.s4 1983009808
        %v3564 = vunpack.c.0.s8 %v3563
        %v3565 = vlaneseq
        %v3566 = vshrl.u32 %v3565, 7
        %v3567 = vsub.s32 %v3564, %v3566
        %v3568 = vrot.slane %v3440, %v3567
        %v3570 = vunpack.c.l.s4 1983009808
        %v3571 = vunpack.c.0.s8 %v3570
        %v3572 = vlaneseq
        %v3573 = vshrl.u32 %v3572, 7
        %v3574 = vsub.s32 %v3571, %v3573
        %v3575 = vrot.slane %v3561, %v3574
        %v3576 = vcombine.high %v3568, %v3568
        %v3577 = vcombine.high %v3575, %v3575
        %v3578 = vcombine.high %v3441, %v3441
        %v3580 = vunpack.c.l.s4 1983009808
        %v3581 = vunpack.c.0.s8 %v3580
        %v3582 = vlaneseq
        %v3583 = vshrl.u32 %v3582, 7
        %v3584 = vsub.s32 %v3581, %v3583
        %v3585 = vrot.slane %v3441, %v3584
        %v3587 = vunpack.c.l.s4 1983009808
        %v3588 = vunpack.c.0.s8 %v3587
        %v3589 = vlaneseq
        %v3590 = vshrl.u32 %v3589, 7
        %v3591 = vsub.s32 %v3588, %v3590
        %v3592 = vrot.slane %v3578, %v3591
        %v3593 = vcombine.high %v3585, %v3585
        %v3594 = vcombine.high %v3592, %v3592
        %vm3627 = vcmask 254976
        %v3628 = vsel %vm3627, %v3466, -inf
        %v3629 = vrot.slane %v3628, 4
        %v3630 = vmax.f32 %v3628, %v3629
        %v3631 = vrot.slane %v3630, 2
        %v3632 = vmax.f32 %v3630, %v3631
        %v3633 = vrot.slane %v3632, 1
        %v3634 = vmax.f32 %v3632, %v3633
        %v3635 = vsel %vm3627, %v3474, -inf
        %v3636 = vrot.slane %v3635, 4
        %v3637 = vmax.f32 %v3635, %v3636
        %v3638 = vrot.slane %v3637, 2
        %v3639 = vmax.f32 %v3637, %v3638
        %v3640 = vrot.slane %v3639, 1
        %v3641 = vmax.f32 %v3639, %v3640
        %v3642 = vsel %vm3627, %v3473, -inf
        %v3643 = vrot.slane %v3642, 4
        %v3644 = vmax.f32 %v3642, %v3643
        %v3645 = vrot.slane %v3644, 2
        %v3646 = vmax.f32 %v3644, %v3645
        %v3647 = vrot.slane %v3646, 1
        %v3648 = vmax.f32 %v3646, %v3647
        %v3649 = vsel %vm3627, %v3475, -inf
        %v3650 = vrot.slane %v3649, 4
        %v3651 = vmax.f32 %v3649, %v3650
        %v3652 = vrot.slane %v3651, 2
        %v3653 = vmax.f32 %v3651, %v3652
        %v3654 = vrot.slane %v3653, 1
        %v3655 = vmax.f32 %v3653, %v3654
        %v3656 = vsel %vm3627, %v3483, -inf
        %v3657 = vrot.slane %v3656, 4
        %v3658 = vmax.f32 %v3656, %v3657
        %v3659 = vrot.slane %v3658, 2
        %v3660 = vmax.f32 %v3658, %v3659
        %v3661 = vrot.slane %v3660, 1
        %v3662 = vmax.f32 %v3660, %v3661
        %v3663 = vsel %vm3627, %v3491, -inf
        %v3664 = vrot.slane %v3663, 4
        %v3665 = vmax.f32 %v3663, %v3664
        %v3666 = vrot.slane %v3665, 2
        %v3667 = vmax.f32 %v3665, %v3666
        %v3668 = vrot.slane %v3667, 1
        %v3669 = vmax.f32 %v3667, %v3668
        %v3670 = vsel %vm3627, %v3490, -inf
        %v3671 = vrot.slane %v3670, 4
        %v3672 = vmax.f32 %v3670, %v3671
        %v3673 = vrot.slane %v3672, 2
        %v3674 = vmax.f32 %v3672, %v3673
        %v3675 = vrot.slane %v3674, 1
        %v3676 = vmax.f32 %v3674, %v3675
        %v3677 = vsel %vm3627, %v3492, -inf
        %v3678 = vrot.slane %v3677, 4
        %v3679 = vmax.f32 %v3677, %v3678
        %v3680 = vrot.slane %v3679, 2
        %v3681 = vmax.f32 %v3679, %v3680
        %v3682 = vrot.slane %v3681, 1
        %v3683 = vmax.f32 %v3681, %v3682
        %v3684 = vsel %vm3627, %v3500, -inf
        %v3685 = vrot.slane %v3684, 4
        %v3686 = vmax.f32 %v3684, %v3685
        %v3687 = vrot.slane %v3686, 2
        %v3688 = vmax.f32 %v3686, %v3687
        %v3689 = vrot.slane %v3688, 1
        %v3690 = vmax.f32 %v3688, %v3689
        %v3691 = vsel %vm3627, %v3508, -inf
        %v3692 = vrot.slane %v3691, 4
        %v3693 = vmax.f32 %v3691, %v3692
        %v3694 = vrot.slane %v3693, 2
        %v3695 = vmax.f32 %v3693, %v3694
        %v3696 = vrot.slane %v3695, 1
        %v3697 = vmax.f32 %v3695, %v3696
        %v3698 = vsel %vm3627, %v3507, -inf
        %v3699 = vrot.slane %v3698, 4
        %v3700 = vmax.f32 %v3698, %v3699
        %v3701 = vrot.slane %v3700, 2
        %v3702 = vmax.f32 %v3700, %v3701
        %v3703 = vrot.slane %v3702, 1
        %v3704 = vmax.f32 %v3702, %v3703
        %v3705 = vsel %vm3627, %v3509, -inf
        %v3706 = vrot.slane %v3705, 4
        %v3707 = vmax.f32 %v3705, %v3706
        %v3708 = vrot.slane %v3707, 2
        %v3709 = vmax.f32 %v3707, %v3708
        %v3710 = vrot.slane %v3709, 1
        %v3711 = vmax.f32 %v3709, %v3710
        %v3712 = vsel %vm3627, %v3517, -inf
        %v3713 = vrot.slane %v3712, 4
        %v3714 = vmax.f32 %v3712, %v3713
        %v3715 = vrot.slane %v3714, 2
        %v3716 = vmax.f32 %v3714, %v3715
        %v3717 = vrot.slane %v3716, 1
        %v3718 = vmax.f32 %v3716, %v3717
        %v3719 = vsel %vm3627, %v3525, -inf
        %v3720 = vrot.slane %v3719, 4
        %v3721 = vmax.f32 %v3719, %v3720
        %v3722 = vrot.slane %v3721, 2
        %v3723 = vmax.f32 %v3721, %v3722
        %v3724 = vrot.slane %v3723, 1
        %v3725 = vmax.f32 %v3723, %v3724
        %v3726 = vsel %vm3627, %v3524, -inf
        %v3727 = vrot.slane %v3726, 4
        %v3728 = vmax.f32 %v3726, %v3727
        %v3729 = vrot.slane %v3728, 2
        %v3730 = vmax.f32 %v3728, %v3729
        %v3731 = vrot.slane %v3730, 1
        %v3732 = vmax.f32 %v3730, %v3731
        %v3733 = vsel %vm3627, %v3526, -inf
        %v3734 = vrot.slane %v3733, 4
        %v3735 = vmax.f32 %v3733, %v3734
        %v3736 = vrot.slane %v3735, 2
        %v3737 = vmax.f32 %v3735, %v3736
        %v3738 = vrot.slane %v3737, 1
        %v3739 = vmax.f32 %v3737, %v3738
        %v3740 = vsel %vm3627, %v3534, -inf
        %v3741 = vrot.slane %v3740, 4
        %v3742 = vmax.f32 %v3740, %v3741
        %v3743 = vrot.slane %v3742, 2
        %v3744 = vmax.f32 %v3742, %v3743
        %v3745 = vrot.slane %v3744, 1
        %v3746 = vmax.f32 %v3744, %v3745
        %v3747 = vsel %vm3627, %v3542, -inf
        %v3748 = vrot.slane %v3747, 4
        %v3749 = vmax.f32 %v3747, %v3748
        %v3750 = vrot.slane %v3749, 2
        %v3751 = vmax.f32 %v3749, %v3750
        %v3752 = vrot.slane %v3751, 1
        %v3753 = vmax.f32 %v3751, %v3752
        %v3754 = vsel %vm3627, %v3541, -inf
        %v3755 = vrot.slane %v3754, 4
        %v3756 = vmax.f32 %v3754, %v3755
        %v3757 = vrot.slane %v3756, 2
        %v3758 = vmax.f32 %v3756, %v3757
        %v3759 = vrot.slane %v3758, 1
        %v3760 = vmax.f32 %v3758, %v3759
        %v3761 = vsel %vm3627, %v3543, -inf
        %v3762 = vrot.slane %v3761, 4
        %v3763 = vmax.f32 %v3761, %v3762
        %v3764 = vrot.slane %v3763, 2
        %v3765 = vmax.f32 %v3763, %v3764
        %v3766 = vrot.slane %v3765, 1
        %v3767 = vmax.f32 %v3765, %v3766
        %v3768 = vsel %vm3627, %v3551, -inf
        %v3769 = vrot.slane %v3768, 4
        %v3770 = vmax.f32 %v3768, %v3769
        %v3771 = vrot.slane %v3770, 2
        %v3772 = vmax.f32 %v3770, %v3771
        %v3773 = vrot.slane %v3772, 1
        %v3774 = vmax.f32 %v3772, %v3773
        %v3775 = vsel %vm3627, %v3559, -inf
        %v3776 = vrot.slane %v3775, 4
        %v3777 = vmax.f32 %v3775, %v3776
        %v3778 = vrot.slane %v3777, 2
        %v3779 = vmax.f32 %v3777, %v3778
        %v3780 = vrot.slane %v3779, 1
        %v3781 = vmax.f32 %v3779, %v3780
        %v3782 = vsel %vm3627, %v3558, -inf
        %v3783 = vrot.slane %v3782, 4
        %v3784 = vmax.f32 %v3782, %v3783
        %v3785 = vrot.slane %v3784, 2
        %v3786 = vmax.f32 %v3784, %v3785
        %v3787 = vrot.slane %v3786, 1
        %v3788 = vmax.f32 %v3786, %v3787
        %v3789 = vsel %vm3627, %v3560, -inf
        %v3790 = vrot.slane %v3789, 4
        %v3791 = vmax.f32 %v3789, %v3790
        %v3792 = vrot.slane %v3791, 2
        %v3793 = vmax.f32 %v3791, %v3792
        %v3794 = vrot.slane %v3793, 1
        %v3795 = vmax.f32 %v3793, %v3794
        %v3796 = vsel %vm3627, %v3568, -inf
        %v3797 = vrot.slane %v3796, 4
        %v3798 = vmax.f32 %v3796, %v3797
        %v3799 = vrot.slane %v3798, 2
        %v3800 = vmax.f32 %v3798, %v3799
        %v3801 = vrot.slane %v3800, 1
        %v3802 = vmax.f32 %v3800, %v3801
        %v3803 = vsel %vm3627, %v3576, -inf
        %v3804 = vrot.slane %v3803, 4
        %v3805 = vmax.f32 %v3803, %v3804
        %v3806 = vrot.slane %v3805, 2
        %v3807 = vmax.f32 %v3805, %v3806
        %v3808 = vrot.slane %v3807, 1
        %v3809 = vmax.f32 %v3807, %v3808
        %v3810 = vsel %vm3627, %v3575, -inf
        %v3811 = vrot.slane %v3810, 4
        %v3812 = vmax.f32 %v3810, %v3811
        %v3813 = vrot.slane %v3812, 2
        %v3814 = vmax.f32 %v3812, %v3813
        %v3815 = vrot.slane %v3814, 1
        %v3816 = vmax.f32 %v3814, %v3815
        %v3817 = vsel %vm3627, %v3577, -inf
        %v3818 = vrot.slane %v3817, 4
        %v3819 = vmax.f32 %v3817, %v3818
        %v3820 = vrot.slane %v3819, 2
        %v3821 = vmax.f32 %v3819, %v3820
        %v3822 = vrot.slane %v3821, 1
        %v3823 = vmax.f32 %v3821, %v3822
        %v3824 = vsel %vm3627, %v3585, -inf
        %v3825 = vrot.slane %v3824, 4
        %v3826 = vmax.f32 %v3824, %v3825
        %v3827 = vrot.slane %v3826, 2
        %v3828 = vmax.f32 %v3826, %v3827
        %v3829 = vrot.slane %v3828, 1
        %v3830 = vmax.f32 %v3828, %v3829
        %v3831 = vsel %vm3627, %v3593, -inf
        %v3832 = vrot.slane %v3831, 4
        %v3833 = vmax.f32 %v3831, %v3832
        %v3834 = vrot.slane %v3833, 2
        %v3835 = vmax.f32 %v3833, %v3834
        %v3836 = vrot.slane %v3835, 1
        %v3837 = vmax.f32 %v3835, %v3836
        %v3838 = vsel %vm3627, %v3592, -inf
        %v3839 = vrot.slane %v3838, 4
        %v3840 = vmax.f32 %v3838, %v3839
        %v3841 = vrot.slane %v3840, 2
        %v3842 = vmax.f32 %v3840, %v3841
        %v3843 = vrot.slane %v3842, 1
        %v3844 = vmax.f32 %v3842, %v3843
        %v3845 = vsel %vm3627, %v3594, -inf
        %v3846 = vrot.slane %v3845, 4
        %v3847 = vmax.f32 %v3845, %v3846
        %v3848 = vrot.slane %v3847, 2
        %v3849 = vmax.f32 %v3847, %v3848
        %v3850 = vrot.slane %v3849, 1
        %v3851 = vmax.f32 %v3849, %v3850
        %v3852 = vsel %vm3442, %v3634, -inf
        %v3853 = vsel %vm3442, %v3662, -inf
        %v3854 = vmax.f32 %v3852, %v3853
        %v3855 = vsel %vm3442, %v3641, -inf
        %v3856 = vsel %vm3442, %v3669, -inf
        %v3857 = vmax.f32 %v3855, %v3856
        %v3858 = vsel %vm3442, %v3648, -inf
        %v3859 = vsel %vm3442, %v3676, -inf
        %v3860 = vmax.f32 %v3858, %v3859
        %v3861 = vsel %vm3442, %v3655, -inf
        %v3862 = vsel %vm3442, %v3683, -inf
        %v3863 = vmax.f32 %v3861, %v3862
        %v3864 = vsel %vm3442, %v3690, -inf
        %v3865 = vsel %vm3442, %v3718, -inf
        %v3866 = vmax.f32 %v3864, %v3865
        %v3867 = vsel %vm3442, %v3697, -inf
        %v3868 = vsel %vm3442, %v3725, -inf
        %v3869 = vmax.f32 %v3867, %v3868
        %v3870 = vsel %vm3442, %v3704, -inf
        %v3871 = vsel %vm3442, %v3732, -inf
        %v3872 = vmax.f32 %v3870, %v3871
        %v3873 = vsel %vm3442, %v3711, -inf
        %v3874 = vsel %vm3442, %v3739, -inf
        %v3875 = vmax.f32 %v3873, %v3874
        %v3876 = vsel %vm3442, %v3746, -inf
        %v3877 = vsel %vm3442, %v3774, -inf
        %v3878 = vmax.f32 %v3876, %v3877
        %v3879 = vsel %vm3442, %v3753, -inf
        %v3880 = vsel %vm3442, %v3781, -inf
        %v3881 = vmax.f32 %v3879, %v3880
        %v3882 = vsel %vm3442, %v3760, -inf
        %v3883 = vsel %vm3442, %v3788, -inf
        %v3884 = vmax.f32 %v3882, %v3883
        %v3885 = vsel %vm3442, %v3767, -inf
        %v3886 = vsel %vm3442, %v3795, -inf
        %v3887 = vmax.f32 %v3885, %v3886
        %v3888 = vsel %vm3442, %v3802, -inf
        %v3889 = vsel %vm3442, %v3830, -inf
        %v3890 = vmax.f32 %v3888, %v3889
        %v3891 = vsel %vm3442, %v3809, -inf
        %v3892 = vsel %vm3442, %v3837, -inf
        %v3893 = vmax.f32 %v3891, %v3892
        %v3894 = vsel %vm3442, %v3816, -inf
        %v3895 = vsel %vm3442, %v3844, -inf
        %v3896 = vmax.f32 %v3894, %v3895
        %v3897 = vsel %vm3442, %v3823, -inf
        %v3898 = vsel %vm3442, %v3851, -inf
        %v3899 = vmax.f32 %v3897, %v3898
        %v3916 = vsel %vm2780, %v3857, %v3854
        %v3917 = vsel %vm2782, %v3860, %v3916
        %v3918 = vsel %vm2784, %v3863, %v3917
        %v3919 = vsel %vm2786, %v3866, %v3918
        %v3920 = vsel %vm2788, %v3869, %v3919
        %v3921 = vsel %vm2790, %v3872, %v3920
        %v3922 = vsel %vm2792, %v3875, %v3921
        %v3923 = vsel %vm2780, %v3881, %v3878
        %v3924 = vsel %vm2782, %v3884, %v3923
        %v3925 = vsel %vm2784, %v3887, %v3924
        %v3926 = vsel %vm2786, %v3890, %v3925
        %v3927 = vsel %vm2788, %v3893, %v3926
        %v3928 = vsel %vm2790, %v3896, %v3927
        %v3929 = vsel %vm2792, %v3899, %v3928
        %3932 = vst.msk [vmem:[#allocation4] sm:$0xff] %vm3442, %v3922
        %3933 = vst.msk [vmem:[#allocation4 + $0x8] sm:$0xff] %vm3442, %v3929
        %v3934 = vld [vmem:[#allocation4] sm:$0x1]
        %v3935 = vlaneseq
        %vm3936 = vcmp.ge.s32.totalorder %v3935, 0
        %vm3937 = vcmp.lt.s32.totalorder %v3935, 32
        %vm3938 = vmand %vm3936, %vm3937
        %3939 = vst.msk [vmem:[#allocation5] sm:$0x1] %vm3938, %v3934
        %v3940 = vld [vmem:[#allocation4 + $0x1] sm:$0x1]
        %v3943 = vunpack.c.l.s4 1966171168
        %v3944 = vunpack.c.0.s8 %v3943
        %v3945 = vlaneseq
        %v3946 = vshrl.u32 %v3945, 7
        %v3947 = vsub.s32 %v3944, %v3946
        %v3948 = vrot.slane %v3940, %v3947
        %v3950 = vunpack.c.l.s4 1966171168
        %v3951 = vunpack.c.0.s8 %v3950
        %v3952 = vlaneseq
        %v3953 = vshrl.u32 %v3952, 7
        %v3954 = vsub.s32 %v3951, %v3953
        %v3955 = vrot.slane %v3948, %v3954
        %3956 = vrot.lane.b32.xlu0 %v3955, 32
        %v3957 = vpop.permute.xlu0 %3956
        %vm3959 = vcmp.ge.s32.totalorder %v3935, 32
        %vm3960 = vcmp.lt.s32.totalorder %v3935, 64
        %vm3961 = vmand %vm3959, %vm3960
        %3962 = vst.msk [vmem:[#allocation5] sm:$0x1] %vm3961, %v3957
        %v3963 = vld [vmem:[#allocation4 + $0x2] sm:$0x1]
        %v3966 = vunpack.c.l.s4 1966171168
        %v3967 = vunpack.c.0.s8 %v3966
        %v3968 = vlaneseq
        %v3969 = vshrl.u32 %v3968, 7
        %v3970 = vsub.s32 %v3967, %v3969
        %v3971 = vrot.slane %v3963, %v3970
        %v3973 = vunpack.c.l.s4 1966171168
        %v3974 = vunpack.c.0.s8 %v3973
        %v3975 = vlaneseq
        %v3976 = vshrl.u32 %v3975, 7
        %v3977 = vsub.s32 %v3974, %v3976
        %v3978 = vrot.slane %v3971, %v3977
        %3979 = vrot.lane.b32.xlu0 %v3978, 64
        %v3980 = vpop.permute.xlu0 %3979
        %vm3982 = vcmp.ge.s32.totalorder %v3935, 64
        %vm3983 = vcmp.lt.s32.totalorder %v3935, 96
        %vm3984 = vmand %vm3982, %vm3983
        %3985 = vst.msk [vmem:[#allocation5] sm:$0x1] %vm3984, %v3980
        %v3986 = vld [vmem:[#allocation4 + $0x3] sm:$0x1]
        %v3989 = vunpack.c.l.s4 1966171168
        %v3990 = vunpack.c.0.s8 %v3989
        %v3991 = vlaneseq
        %v3992 = vshrl.u32 %v3991, 7
        %v3993 = vsub.s32 %v3990, %v3992
        %v3994 = vrot.slane %v3986, %v3993
        %v3996 = vunpack.c.l.s4 1966171168
        %v3997 = vunpack.c.0.s8 %v3996
        %v3998 = vlaneseq
        %v3999 = vshrl.u32 %v3998, 7
        %v4000 = vsub.s32 %v3997, %v3999
        %v4001 = vrot.slane %v3994, %v4000
        %4002 = vrot.lane.b32.xlu0 %v4001, 96
        %v4003 = vpop.permute.xlu0 %4002
        %vm4005 = vcmp.ge.s32.totalorder %v3935, 96
        %vm4006 = vcmp.lt.s32.totalorder %v3935, 128
        %vm4007 = vmand %vm4005, %vm4006
        %4008 = vst.msk [vmem:[#allocation5] sm:$0x1] %vm4007, %v4003
        %v4009 = vld [vmem:[#allocation4 + $0x4] sm:$0x1]
        %4010 = vst.msk [vmem:[#allocation5 + $0x1] sm:$0x1] %vm3938, %v4009
        %v4011 = vld [vmem:[#allocation4 + $0x5] sm:$0x1]
        %v4014 = vunpack.c.l.s4 1966171168
        %v4015 = vunpack.c.0.s8 %v4014
        %v4016 = vlaneseq
        %v4017 = vshrl.u32 %v4016, 7
        %v4018 = vsub.s32 %v4015, %v4017
        %v4019 = vrot.slane %v4011, %v4018
        %v4021 = vunpack.c.l.s4 1966171168
        %v4022 = vunpack.c.0.s8 %v4021
        %v4023 = vlaneseq
        %v4024 = vshrl.u32 %v4023, 7
        %v4025 = vsub.s32 %v4022, %v4024
        %v4026 = vrot.slane %v4019, %v4025
        %4027 = vrot.lane.b32.xlu0 %v4026, 32
        %v4028 = vpop.permute.xlu0 %4027
        %4030 = vst.msk [vmem:[#allocation5 + $0x1] sm:$0x1] %vm3961, %v4028
        %v4031 = vld [vmem:[#allocation4 + $0x6] sm:$0x1]
        %v4034 = vunpack.c.l.s4 1966171168
        %v4035 = vunpack.c.0.s8 %v4034
        %v4036 = vlaneseq
        %v4037 = vshrl.u32 %v4036, 7
        %v4038 = vsub.s32 %v4035, %v4037
        %v4039 = vrot.slane %v4031, %v4038
        %v4041 = vunpack.c.l.s4 1966171168
        %v4042 = vunpack.c.0.s8 %v4041
        %v4043 = vlaneseq
        %v4044 = vshrl.u32 %v4043, 7
        %v4045 = vsub.s32 %v4042, %v4044
        %v4046 = vrot.slane %v4039, %v4045
        %4047 = vrot.lane.b32.xlu0 %v4046, 64
        %v4048 = vpop.permute.xlu0 %4047
        %4050 = vst.msk [vmem:[#allocation5 + $0x1] sm:$0x1] %vm3984, %v4048
        %v4051 = vld [vmem:[#allocation4 + $0x7] sm:$0x1]
        %v4054 = vunpack.c.l.s4 1966171168
        %v4055 = vunpack.c.0.s8 %v4054
        %v4056 = vlaneseq
        %v4057 = vshrl.u32 %v4056, 7
        %v4058 = vsub.s32 %v4055, %v4057
        %v4059 = vrot.slane %v4051, %v4058
        %v4061 = vunpack.c.l.s4 1966171168
        %v4062 = vunpack.c.0.s8 %v4061
        %v4063 = vlaneseq
        %v4064 = vshrl.u32 %v4063, 7
        %v4065 = vsub.s32 %v4062, %v4064
        %v4066 = vrot.slane %v4059, %v4065
        %4067 = vrot.lane.b32.xlu0 %v4066, 96
        %v4068 = vpop.permute.xlu0 %4067
        %4070 = vst.msk [vmem:[#allocation5 + $0x1] sm:$0x1] %vm4007, %v4068
        %v4071 = vld [vmem:[#allocation4 + $0x8] sm:$0x1]
        %4072 = vst.msk [vmem:[#allocation5 + $0x2] sm:$0x1] %vm3938, %v4071
        %v4073 = vld [vmem:[#allocation4 + $0x9] sm:$0x1]
        %v4076 = vunpack.c.l.s4 1966171168
        %v4077 = vunpack.c.0.s8 %v4076
        %v4078 = vlaneseq
        %v4079 = vshrl.u32 %v4078, 7
        %v4080 = vsub.s32 %v4077, %v4079
        %v4081 = vrot.slane %v4073, %v4080
        %v4083 = vunpack.c.l.s4 1966171168
        %v4084 = vunpack.c.0.s8 %v4083
        %v4085 = vlaneseq
        %v4086 = vshrl.u32 %v4085, 7
        %v4087 = vsub.s32 %v4084, %v4086
        %v4088 = vrot.slane %v4081, %v4087
        %4089 = vrot.lane.b32.xlu0 %v4088, 32
        %v4090 = vpop.permute.xlu0 %4089
        %4092 = vst.msk [vmem:[#allocation5 + $0x2] sm:$0x1] %vm3961, %v4090
        %v4093 = vld [vmem:[#allocation4 + $0xa] sm:$0x1]
        %v4096 = vunpack.c.l.s4 1966171168
        %v4097 = vunpack.c.0.s8 %v4096
        %v4098 = vlaneseq
        %v4099 = vshrl.u32 %v4098, 7
        %v4100 = vsub.s32 %v4097, %v4099
        %v4101 = vrot.slane %v4093, %v4100
        %v4103 = vunpack.c.l.s4 1966171168
        %v4104 = vunpack.c.0.s8 %v4103
        %v4105 = vlaneseq
        %v4106 = vshrl.u32 %v4105, 7
        %v4107 = vsub.s32 %v4104, %v4106
        %v4108 = vrot.slane %v4101, %v4107
        %4109 = vrot.lane.b32.xlu0 %v4108, 64
        %v4110 = vpop.permute.xlu0 %4109
        %4112 = vst.msk [vmem:[#allocation5 + $0x2] sm:$0x1] %vm3984, %v4110
        %v4113 = vld [vmem:[#allocation4 + $0xb] sm:$0x1]
        %v4116 = vunpack.c.l.s4 1966171168
        %v4117 = vunpack.c.0.s8 %v4116
        %v4118 = vlaneseq
        %v4119 = vshrl.u32 %v4118, 7
        %v4120 = vsub.s32 %v4117, %v4119
        %v4121 = vrot.slane %v4113, %v4120
        %v4123 = vunpack.c.l.s4 1966171168
        %v4124 = vunpack.c.0.s8 %v4123
        %v4125 = vlaneseq
        %v4126 = vshrl.u32 %v4125, 7
        %v4127 = vsub.s32 %v4124, %v4126
        %v4128 = vrot.slane %v4121, %v4127
        %4129 = vrot.lane.b32.xlu0 %v4128, 96
        %v4130 = vpop.permute.xlu0 %4129
        %4132 = vst.msk [vmem:[#allocation5 + $0x2] sm:$0x1] %vm4007, %v4130
        %v4133 = vld [vmem:[#allocation4 + $0xc] sm:$0x1]
        %4134 = vst.msk [vmem:[#allocation5 + $0x3] sm:$0x1] %vm3938, %v4133
        %v4135 = vld [vmem:[#allocation4 + $0xd] sm:$0x1]
        %v4138 = vunpack.c.l.s4 1966171168
        %v4139 = vunpack.c.0.s8 %v4138
        %v4140 = vlaneseq
        %v4141 = vshrl.u32 %v4140, 7
        %v4142 = vsub.s32 %v4139, %v4141
        %v4143 = vrot.slane %v4135, %v4142
        %v4145 = vunpack.c.l.s4 1966171168
        %v4146 = vunpack.c.0.s8 %v4145
        %v4147 = vlaneseq
        %v4148 = vshrl.u32 %v4147, 7
        %v4149 = vsub.s32 %v4146, %v4148
        %v4150 = vrot.slane %v4143, %v4149
        %4151 = vrot.lane.b32.xlu0 %v4150, 32
        %v4152 = vpop.permute.xlu0 %4151
        %4154 = vst.msk [vmem:[#allocation5 + $0x3] sm:$0x1] %vm3961, %v4152
        %v4155 = vld [vmem:[#allocation4 + $0xe] sm:$0x1]
        %v4158 = vunpack.c.l.s4 1966171168
        %v4159 = vunpack.c.0.s8 %v4158
        %v4160 = vlaneseq
        %v4161 = vshrl.u32 %v4160, 7
        %v4162 = vsub.s32 %v4159, %v4161
        %v4163 = vrot.slane %v4155, %v4162
        %v4165 = vunpack.c.l.s4 1966171168
        %v4166 = vunpack.c.0.s8 %v4165
        %v4167 = vlaneseq
        %v4168 = vshrl.u32 %v4167, 7
        %v4169 = vsub.s32 %v4166, %v4168
        %v4170 = vrot.slane %v4163, %v4169
        %4171 = vrot.lane.b32.xlu0 %v4170, 64
        %v4172 = vpop.permute.xlu0 %4171
        %4174 = vst.msk [vmem:[#allocation5 + $0x3] sm:$0x1] %vm3984, %v4172
        %v4175 = vld [vmem:[#allocation4 + $0xf] sm:$0x1]
        %v4178 = vunpack.c.l.s4 1966171168
        %v4179 = vunpack.c.0.s8 %v4178
        %v4180 = vlaneseq
        %v4181 = vshrl.u32 %v4180, 7
        %v4182 = vsub.s32 %v4179, %v4181
        %v4183 = vrot.slane %v4175, %v4182
        %v4185 = vunpack.c.l.s4 1966171168
        %v4186 = vunpack.c.0.s8 %v4185
        %v4187 = vlaneseq
        %v4188 = vshrl.u32 %v4187, 7
        %v4189 = vsub.s32 %v4186, %v4188
        %v4190 = vrot.slane %v4183, %v4189
        %4191 = vrot.lane.b32.xlu0 %v4190, 96
        %v4192 = vpop.permute.xlu0 %4191
        %4194 = vst.msk [vmem:[#allocation5 + $0x3] sm:$0x1] %vm4007, %v4192
        %v4195 = vld [vmem:[#allocation5] sm:$0xf]
        %v4196 = vld [vmem:[%s5] sm:$0xff]
        %v4197 = vld [vmem:[%s5 + $0x8] sm:$0xff]
        %v4198 = vld [vmem:[%s5 + $0x10] sm:$0xff]
        %v4199 = vld [vmem:[%s5 + $0x18] sm:$0xff]
        %v4200 = vld [vmem:[%s5 + $0x20] sm:$0xff]
        %v4201 = vld [vmem:[%s5 + $0x28] sm:$0xff]
        %v4202 = vld [vmem:[%s5 + $0x30] sm:$0xff]
        %v4203 = vld [vmem:[%s5 + $0x38] sm:$0xff]
        %v4204 = vld [vmem:[%s5 + $0x40] sm:$0xff]
        %v4205 = vld [vmem:[%s5 + $0x48] sm:$0xff]
        %v4206 = vld [vmem:[%s5 + $0x50] sm:$0xff]
        %v4207 = vld [vmem:[%s5 + $0x58] sm:$0xff]
        %v4208 = vld [vmem:[%s5 + $0x60] sm:$0xff]
        %v4209 = vld [vmem:[%s5 + $0x68] sm:$0xff]
        %v4210 = vld [vmem:[%s5 + $0x70] sm:$0xff]
        %v4211 = vld [vmem:[%s5 + $0x78] sm:$0xff]
        %v4212 = vld [vmem:[%s5 + $0x80] sm:$0xff]
        %v4213 = vld [vmem:[%s5 + $0x88] sm:$0xff]
        %v4214 = vld [vmem:[%s5 + $0x90] sm:$0xff]
        %v4215 = vld [vmem:[%s5 + $0x98] sm:$0xff]
        %v4216 = vld [vmem:[%s5 + $0xa0] sm:$0xff]
        %v4217 = vld [vmem:[%s5 + $0xa8] sm:$0xff]
        %v4218 = vld [vmem:[%s5 + $0xb0] sm:$0xff]
        %v4219 = vld [vmem:[%s5 + $0xb8] sm:$0xff]
        %v4220 = vld [vmem:[%s5 + $0xc0] sm:$0xff]
        %v4221 = vld [vmem:[%s5 + $0xc8] sm:$0xff]
        %v4222 = vld [vmem:[%s5 + $0xd0] sm:$0xff]
        %v4223 = vld [vmem:[%s5 + $0xd8] sm:$0xff]
        %v4224 = vld [vmem:[%s5 + $0xe0] sm:$0xff]
        %v4225 = vld [vmem:[%s5 + $0xe8] sm:$0xff]
        %v4226 = vld [vmem:[%s5 + $0xf0] sm:$0xff]
        %v4227 = vld [vmem:[%s5 + $0xf8] sm:$0xff]
        %v4228 = vld [vmem:[%s5 + $0x100] sm:$0xff]
        %v4229 = vld [vmem:[%s5 + $0x108] sm:$0xff]
        %v4230 = vld [vmem:[%s5 + $0x110] sm:$0xff]
        %v4231 = vld [vmem:[%s5 + $0x118] sm:$0xff]
        %v4232 = vld [vmem:[%s5 + $0x120] sm:$0xff]
        %v4233 = vld [vmem:[%s5 + $0x128] sm:$0xff]
        %v4234 = vld [vmem:[%s5 + $0x130] sm:$0xff]
        %v4235 = vld [vmem:[%s5 + $0x138] sm:$0xff]
        %v4236 = vld [vmem:[%s5 + $0x140] sm:$0xff]
        %v4237 = vld [vmem:[%s5 + $0x148] sm:$0xff]
        %v4238 = vld [vmem:[%s5 + $0x150] sm:$0xff]
        %v4239 = vld [vmem:[%s5 + $0x158] sm:$0xff]
        %v4240 = vld [vmem:[%s5 + $0x160] sm:$0xff]
        %v4241 = vld [vmem:[%s5 + $0x168] sm:$0xff]
        %v4242 = vld [vmem:[%s5 + $0x170] sm:$0xff]
        %v4243 = vld [vmem:[%s5 + $0x178] sm:$0xff]
        %v4244 = vld [vmem:[%s5 + $0x180] sm:$0xff]
        %v4245 = vld [vmem:[%s5 + $0x188] sm:$0xff]
        %v4246 = vld [vmem:[%s5 + $0x190] sm:$0xff]
        %v4247 = vld [vmem:[%s5 + $0x198] sm:$0xff]
        %v4248 = vld [vmem:[%s5 + $0x1a0] sm:$0xff]
        %v4249 = vld [vmem:[%s5 + $0x1a8] sm:$0xff]
        %v4250 = vld [vmem:[%s5 + $0x1b0] sm:$0xff]
        %v4251 = vld [vmem:[%s5 + $0x1b8] sm:$0xff]
        %v4252 = vld [vmem:[%s5 + $0x1c0] sm:$0xff]
        %v4253 = vld [vmem:[%s5 + $0x1c8] sm:$0xff]
        %v4254 = vld [vmem:[%s5 + $0x1d0] sm:$0xff]
        %v4255 = vld [vmem:[%s5 + $0x1d8] sm:$0xff]
        %v4256 = vld [vmem:[%s5 + $0x1e0] sm:$0xff]
        %v4257 = vld [vmem:[%s5 + $0x1e8] sm:$0xff]
        %v4258 = vld [vmem:[%s5 + $0x1f0] sm:$0xff]
        %v4259 = vld [vmem:[%s5 + $0x1f8] sm:$0xff]
        %v4260 = vld [vmem:[%s6] sm:$0x1]
        %v4262 = vlaneseq
        %v4263 = vshrl.u32 %v4262, 7
        %v4264 = vsub.s32 0, %v4263
        %v4265 = vrot.slane %v4195, %v4264
        %v4266 = vlaneseq
        %v4267 = vshrl.u32 %v4266, 7
        %v4268 = vsub.s32 1, %v4267
        %v4269 = vrot.slane %v4195, %v4268
        %v4270 = vlaneseq
        %v4271 = vshrl.u32 %v4270, 7
        %v4272 = vsub.s32 2, %v4271
        %v4273 = vrot.slane %v4195, %v4272
        %v4274 = vlaneseq
        %v4275 = vshrl.u32 %v4274, 7
        %v4276 = vsub.s32 3, %v4275
        %v4277 = vrot.slane %v4195, %v4276
        %4282 = vmatprep.subr.mxu0 0.0
        %4283 = vmatpush1.msra.mxu0 %v4196
        %4284 = vmatprep.subr.mxu0 0.0
        %4285 = vmatpush1.msra.mxu0 %v4197
        %4286 = vmatprep.subr.mxu0 0.0
        %4287 = vmatpush1.msra.mxu0 %v4198
        %4288 = vmatprep.subr.mxu0 0.0
        %4289 = vmatpush1.msra.mxu0 %v4199
        %4290 = vmatprep.subr.mxu0 0.0
        %4291 = vmatpush1.msra.mxu0 %v4200
        %4292 = vmatprep.subr.mxu0 0.0
        %4293 = vmatpush1.msra.mxu0 %v4201
        %4294 = vmatprep.subr.mxu0 0.0
        %4295 = vmatpush1.msra.mxu0 %v4202
        %4296 = vmatprep.subr.mxu0 0.0
        %4297 = vmatpush1.msra.mxu0 %v4203
        %4298 = vmatprep.subr.mxu0 0.0
        %4299 = vmatpush1.msra.mxu0 %v4204
        %4300 = vmatprep.subr.mxu0 0.0
        %4301 = vmatpush1.msra.mxu0 %v4205
        %4302 = vmatprep.subr.mxu0 0.0
        %4303 = vmatpush1.msra.mxu0 %v4206
        %4304 = vmatprep.subr.mxu0 0.0
        %4305 = vmatpush1.msra.mxu0 %v4207
        %4306 = vmatprep.subr.mxu0 0.0
        %4307 = vmatpush1.msra.mxu0 %v4208
        %4308 = vmatprep.subr.mxu0 0.0
        %4309 = vmatpush1.msra.mxu0 %v4209
        %4310 = vmatprep.subr.mxu0 0.0
        %4311 = vmatpush1.msra.mxu0 %v4210
        %4312 = vmatprep.subr.mxu0 0.0
        %4313 = vmatpush1.msra.mxu0 %v4211
        %4314 = vmatprep.subr.mxu0 0.0
        %4315 = vmatpush1.msra.mxu0 %v4212
        %4316 = vmatprep.subr.mxu0 0.0
        %4317 = vmatpush1.msra.mxu0 %v4213
        %4318 = vmatprep.subr.mxu0 0.0
        %4319 = vmatpush1.msra.mxu0 %v4214
        %4320 = vmatprep.subr.mxu0 0.0
        %4321 = vmatpush1.msra.mxu0 %v4215
        %4322 = vmatprep.subr.mxu0 0.0
        %4323 = vmatpush1.msra.mxu0 %v4216
        %4324 = vmatprep.subr.mxu0 0.0
        %4325 = vmatpush1.msra.mxu0 %v4217
        %4326 = vmatprep.subr.mxu0 0.0
        %4327 = vmatpush1.msra.mxu0 %v4218
        %4328 = vmatprep.subr.mxu0 0.0
        %4329 = vmatpush1.msra.mxu0 %v4219
        %4330 = vmatprep.subr.mxu0 0.0
        %4331 = vmatpush1.msra.mxu0 %v4220
        %4332 = vmatprep.subr.mxu0 0.0
        %4333 = vmatpush1.msra.mxu0 %v4221
        %4334 = vmatprep.subr.mxu0 0.0
        %4335 = vmatpush1.msra.mxu0 %v4222
        %4336 = vmatprep.subr.mxu0 0.0
        %4337 = vmatpush1.msra.mxu0 %v4223
        %4338 = vmatprep.subr.mxu0 0.0
        %4339 = vmatpush1.msra.mxu0 %v4224
        %4340 = vmatprep.subr.mxu0 0.0
        %4341 = vmatpush1.msra.mxu0 %v4225
        %4342 = vmatprep.subr.mxu0 0.0
        %4343 = vmatpush1.msra.mxu0 %v4226
        %4344 = vmatprep.subr.mxu0 0.0
        %4345 = vmatpush1.msra.mxu0 %v4227
        %4346 = vmatprep.mubr.f32.mxu0 %v4269
        %4347 = vmatmul.mubr.f32.gmra.mrb[0].mxu0 %v4265
        %v4348 = vpop.f32.mrb[0].mxu0
        %v4349 = vadd.f32 %v4260, %v4348
        %v4350 = vpop.f32.mrb[0].mxu0
        %4351 = vdwg.mxu0
        %4352 = vmatprep.subr.mxu0 0.0
        %4353 = vmatpush1.msra.mxu0 %v4228
        %4354 = vmatprep.subr.mxu0 0.0
        %4355 = vmatpush1.msra.mxu0 %v4229
        %4356 = vmatprep.subr.mxu0 0.0
        %4357 = vmatpush1.msra.mxu0 %v4230
        %4358 = vmatprep.subr.mxu0 0.0
        %4359 = vmatpush1.msra.mxu0 %v4231
        %4360 = vmatprep.subr.mxu0 0.0
        %4361 = vmatpush1.msra.mxu0 %v4232
        %4362 = vmatprep.subr.mxu0 0.0
        %4363 = vmatpush1.msra.mxu0 %v4233
        %4364 = vmatprep.subr.mxu0 0.0
        %4365 = vmatpush1.msra.mxu0 %v4234
        %4366 = vmatprep.subr.mxu0 0.0
        %4367 = vmatpush1.msra.mxu0 %v4235
        %4368 = vmatprep.subr.mxu0 0.0
        %4369 = vmatpush1.msra.mxu0 %v4236
        %4370 = vmatprep.subr.mxu0 0.0
        %4371 = vmatpush1.msra.mxu0 %v4237
        %4372 = vmatprep.subr.mxu0 0.0
        %4373 = vmatpush1.msra.mxu0 %v4238
        %4374 = vmatprep.subr.mxu0 0.0
        %4375 = vmatpush1.msra.mxu0 %v4239
        %4376 = vmatprep.subr.mxu0 0.0
        %4377 = vmatpush1.msra.mxu0 %v4240
        %4378 = vmatprep.subr.mxu0 0.0
        %4379 = vmatpush1.msra.mxu0 %v4241
        %4380 = vmatprep.subr.mxu0 0.0
        %4381 = vmatpush1.msra.mxu0 %v4242
        %4382 = vmatprep.subr.mxu0 0.0
        %4383 = vmatpush1.msra.mxu0 %v4243
        %4384 = vmatprep.subr.mxu0 0.0
        %4385 = vmatpush1.msra.mxu0 %v4244
        %4386 = vmatprep.subr.mxu0 0.0
        %4387 = vmatpush1.msra.mxu0 %v4245
        %4388 = vmatprep.subr.mxu0 0.0
        %4389 = vmatpush1.msra.mxu0 %v4246
        %4390 = vmatprep.subr.mxu0 0.0
        %4391 = vmatpush1.msra.mxu0 %v4247
        %4392 = vmatprep.subr.mxu0 0.0
        %4393 = vmatpush1.msra.mxu0 %v4248
        %4394 = vmatprep.subr.mxu0 0.0
        %4395 = vmatpush1.msra.mxu0 %v4249
        %4396 = vmatprep.subr.mxu0 0.0
        %4397 = vmatpush1.msra.mxu0 %v4250
        %4398 = vmatprep.subr.mxu0 0.0
        %4399 = vmatpush1.msra.mxu0 %v4251
        %4400 = vmatprep.subr.mxu0 0.0
        %4401 = vmatpush1.msra.mxu0 %v4252
        %4402 = vmatprep.subr.mxu0 0.0
        %4403 = vmatpush1.msra.mxu0 %v4253
        %4404 = vmatprep.subr.mxu0 0.0
        %4405 = vmatpush1.msra.mxu0 %v4254
        %4406 = vmatprep.subr.mxu0 0.0
        %4407 = vmatpush1.msra.mxu0 %v4255
        %4408 = vmatprep.subr.mxu0 0.0
        %4409 = vmatpush1.msra.mxu0 %v4256
        %4410 = vmatprep.subr.mxu0 0.0
        %4411 = vmatpush1.msra.mxu0 %v4257
        %4412 = vmatprep.subr.mxu0 0.0
        %4413 = vmatpush1.msra.mxu0 %v4258
        %4414 = vmatprep.subr.mxu0 0.0
        %4415 = vmatpush1.msra.mxu0 %v4259
        %4416 = vmatprep.mubr.f32.mxu0 %v4277
        %4417 = vmatmul.mubr.f32.gmra.mrb[0].mxu0 %v4273
        %v4418 = vpop.f32.mrb[0].mxu0
        %v4419 = vadd.f32 %v4349, %v4418
        %v4420 = vpop.f32.mrb[0].mxu0
        %4421 = vdwg.mxu0
        %v4422 = vmax.f32 %v4419, 0.0
        %v4423 = vld [vmem:[%s7] sm:$0xff]
        %v4424 = vld [vmem:[%s7 + $0x8] sm:$0xff]
        %v4425 = vld [vmem:[%s7 + $0x10] sm:$0xff]
        %v4426 = vld [vmem:[%s7 + $0x18] sm:$0xff]
        %v4427 = vld [vmem:[%s7 + $0x20] sm:$0xff]
        %v4428 = vld [vmem:[%s7 + $0x28] sm:$0xff]
        %v4429 = vld [vmem:[%s7 + $0x30] sm:$0xff]
        %v4430 = vld [vmem:[%s7 + $0x38] sm:$0xff]
        %v4431 = vld [vmem:[%s7 + $0x40] sm:$0xff]
        %v4432 = vld [vmem:[%s7 + $0x48] sm:$0xff]
        %v4433 = vld [vmem:[%s7 + $0x50] sm:$0xff]
        %v4434 = vld [vmem:[%s7 + $0x58] sm:$0xff]
        %v4435 = vld [vmem:[%s7 + $0x60] sm:$0xff]
        %v4436 = vld [vmem:[%s7 + $0x68] sm:$0xff]
        %v4437 = vld [vmem:[%s7 + $0x70] sm:$0xff]
        %v4438 = vld [vmem:[%s7 + $0x78] sm:$0xff]
        %v4439 = vld [vmem:[%s8] sm:$0x1]
        %4440 = vmatprep.subr.mxu0 0.0
        %4441 = vmatpush1.msra.mxu0 %v4423
        %4442 = vmatprep.subr.mxu0 0.0
        %4443 = vmatpush1.msra.mxu0 %v4424
        %4444 = vmatprep.subr.mxu0 0.0
        %4445 = vmatpush1.msra.mxu0 %v4425
        %4446 = vmatprep.subr.mxu0 0.0
        %4447 = vmatpush1.msra.mxu0 %v4426
        %4448 = vmatprep.subr.mxu0 0.0
        %4449 = vmatpush1.msra.mxu0 %v4427
        %4450 = vmatprep.subr.mxu0 0.0
        %4451 = vmatpush1.msra.mxu0 %v4428
        %4452 = vmatprep.subr.mxu0 0.0
        %4453 = vmatpush1.msra.mxu0 %v4429
        %4454 = vmatprep.subr.mxu0 0.0
        %4455 = vmatpush1.msra.mxu0 %v4430
        %4456 = vmatprep.subr.mxu0 0.0
        %4457 = vmatpush1.msra.mxu0 %v4431
        %4458 = vmatprep.subr.mxu0 0.0
        %4459 = vmatpush1.msra.mxu0 %v4432
        %4460 = vmatprep.subr.mxu0 0.0
        %4461 = vmatpush1.msra.mxu0 %v4433
        %4462 = vmatprep.subr.mxu0 0.0
        %4463 = vmatpush1.msra.mxu0 %v4434
        %4464 = vmatprep.subr.mxu0 0.0
        %4465 = vmatpush1.msra.mxu0 %v4435
        %4466 = vmatprep.subr.mxu0 0.0
        %4467 = vmatpush1.msra.mxu0 %v4436
        %4468 = vmatprep.subr.mxu0 0.0
        %4469 = vmatpush1.msra.mxu0 %v4437
        %4470 = vmatprep.subr.mxu0 0.0
        %4471 = vmatpush1.msra.mxu0 %v4438
        %4472 = vmatprep.subr.mxu0 0.0
        %4473 = vmatpush1.msra.mxu0 0.0
        %4474 = vmatprep.subr.mxu0 0.0
        %4475 = vmatpush1.msra.mxu0 0.0
        %4476 = vmatprep.subr.mxu0 0.0
        %4477 = vmatpush1.msra.mxu0 0.0
        %4478 = vmatprep.subr.mxu0 0.0
        %4479 = vmatpush1.msra.mxu0 0.0
        %4480 = vmatprep.subr.mxu0 0.0
        %4481 = vmatpush1.msra.mxu0 0.0
        %4482 = vmatprep.subr.mxu0 0.0
        %4483 = vmatpush1.msra.mxu0 0.0
        %4484 = vmatprep.subr.mxu0 0.0
        %4485 = vmatpush1.msra.mxu0 0.0
        %4486 = vmatprep.subr.mxu0 0.0
        %4487 = vmatpush1.msra.mxu0 0.0
        %4488 = vmatprep.subr.mxu0 0.0
        %4489 = vmatpush1.msra.mxu0 0.0
        %4490 = vmatprep.subr.mxu0 0.0
        %4491 = vmatpush1.msra.mxu0 0.0
        %4492 = vmatprep.subr.mxu0 0.0
        %4493 = vmatpush1.msra.mxu0 0.0
        %4494 = vmatprep.subr.mxu0 0.0
        %4495 = vmatpush1.msra.mxu0 0.0
        %4496 = vmatprep.subr.mxu0 0.0
        %4497 = vmatpush1.msra.mxu0 0.0
        %4498 = vmatprep.subr.mxu0 0.0
        %4499 = vmatpush1.msra.mxu0 0.0
        %4500 = vmatprep.subr.mxu0 0.0
        %4501 = vmatpush1.msra.mxu0 0.0
        %4502 = vmatprep.subr.mxu0 0.0
        %4503 = vmatpush1.msra.mxu0 0.0
        %4504 = vmatprep.mubr.f32.mxu0 0.0
        %4505 = vmatmul.mubr.f32.gmra.mrb[0].mxu0 %v4422
        %v4506 = vpop.f32.mrb[0].mxu0
        %v4507 = vadd.f32 %v4439, %v4506
        %v4508 = vpop.f32.mrb[0].mxu0
        %4509 = vdwg.mxu0
        %v4510 = vmax.f32 %v4507, 0.0
        %v4511 = vld [vmem:[%s9] sm:$0xff]
        %v4512 = vld [vmem:[%s9 + $0x8] sm:$0xff]
        %v4513 = vld [vmem:[%s9 + $0x10] sm:$0xff]
        %v4514 = vld [vmem:[%s9 + $0x18] sm:$0xff]
        %v4515 = vld [vmem:[%s9 + $0x20] sm:$0xff]
        %v4516 = vld [vmem:[%s9 + $0x28] sm:$0xff]
        %v4517 = vld [vmem:[%s9 + $0x30] sm:$0xff]
        %v4518 = vld [vmem:[%s9 + $0x38] sm:$0xff]
        %v4519 = vld [vmem:[%s9 + $0x40] sm:$0xff]
        %v4520 = vld [vmem:[%s9 + $0x48] sm:$0xff]
        %v4521 = vld [vmem:[%s9 + $0x50] sm:$0xff]
        %v4522 = vld [vmem:[%s9 + $0x58] sm:$0xff]
        %v4523 = vld [vmem:[%s9 + $0x60] sm:$0xff]
        %v4524 = vld [vmem:[%s9 + $0x68] sm:$0xff]
        %v4525 = vld [vmem:[%s9 + $0x70] sm:$0xff]
        %v4526 = vld [vmem:[%s9 + $0x78] sm:$0xff]
        %v4527 = vld [vmem:[%s10] sm:$0x1]
        %4528 = vmatprep.subr.mxu0 0.0
        %4529 = vmatpush1.msra.mxu0 %v4511
        %4530 = vmatprep.subr.mxu0 0.0
        %4531 = vmatpush1.msra.mxu0 %v4512
        %4532 = vmatprep.subr.mxu0 0.0
        %4533 = vmatpush1.msra.mxu0 %v4513
        %4534 = vmatprep.subr.mxu0 0.0
        %4535 = vmatpush1.msra.mxu0 %v4514
        %4536 = vmatprep.subr.mxu0 0.0
        %4537 = vmatpush1.msra.mxu0 %v4515
        %4538 = vmatprep.subr.mxu0 0.0
        %4539 = vmatpush1.msra.mxu0 %v4516
        %4540 = vmatprep.subr.mxu0 0.0
        %4541 = vmatpush1.msra.mxu0 %v4517
        %4542 = vmatprep.subr.mxu0 0.0
        %4543 = vmatpush1.msra.mxu0 %v4518
        %4544 = vmatprep.subr.mxu0 0.0
        %4545 = vmatpush1.msra.mxu0 %v4519
        %4546 = vmatprep.subr.mxu0 0.0
        %4547 = vmatpush1.msra.mxu0 %v4520
        %4548 = vmatprep.subr.mxu0 0.0
        %4549 = vmatpush1.msra.mxu0 %v4521
        %4550 = vmatprep.subr.mxu0 0.0
        %4551 = vmatpush1.msra.mxu0 %v4522
        %4552 = vmatprep.subr.mxu0 0.0
        %4553 = vmatpush1.msra.mxu0 %v4523
        %4554 = vmatprep.subr.mxu0 0.0
        %4555 = vmatpush1.msra.mxu0 %v4524
        %4556 = vmatprep.subr.mxu0 0.0
        %4557 = vmatpush1.msra.mxu0 %v4525
        %4558 = vmatprep.subr.mxu0 0.0
        %4559 = vmatpush1.msra.mxu0 %v4526
        %4560 = vmatprep.subr.mxu0 0.0
        %4561 = vmatpush1.msra.mxu0 0.0
        %4562 = vmatprep.subr.mxu0 0.0
        %4563 = vmatpush1.msra.mxu0 0.0
        %4564 = vmatprep.subr.mxu0 0.0
        %4565 = vmatpush1.msra.mxu0 0.0
        %4566 = vmatprep.subr.mxu0 0.0
        %4567 = vmatpush1.msra.mxu0 0.0
        %4568 = vmatprep.subr.mxu0 0.0
        %4569 = vmatpush1.msra.mxu0 0.0
        %4570 = vmatprep.subr.mxu0 0.0
        %4571 = vmatpush1.msra.mxu0 0.0
        %4572 = vmatprep.subr.mxu0 0.0
        %4573 = vmatpush1.msra.mxu0 0.0
        %4574 = vmatprep.subr.mxu0 0.0
        %4575 = vmatpush1.msra.mxu0 0.0
        %4576 = vmatprep.subr.mxu0 0.0
        %4577 = vmatpush1.msra.mxu0 0.0
        %4578 = vmatprep.subr.mxu0 0.0
        %4579 = vmatpush1.msra.mxu0 0.0
        %4580 = vmatprep.subr.mxu0 0.0
        %4581 = vmatpush1.msra.mxu0 0.0
        %4582 = vmatprep.subr.mxu0 0.0
        %4583 = vmatpush1.msra.mxu0 0.0
        %4584 = vmatprep.subr.mxu0 0.0
        %4585 = vmatpush1.msra.mxu0 0.0
        %4586 = vmatprep.subr.mxu0 0.0
        %4587 = vmatpush1.msra.mxu0 0.0
        %4588 = vmatprep.subr.mxu0 0.0
        %4589 = vmatpush1.msra.mxu0 0.0
        %4590 = vmatprep.subr.mxu0 0.0
        %4591 = vmatpush1.msra.mxu0 0.0
        %4592 = vmatprep.mubr.f32.mxu0 0.0
        %4593 = vmatmul.mubr.f32.gmra.mrb[0].mxu0 %v4510
        %v4594 = vpop.f32.mrb[0].mxu0
        %v4595 = vadd.f32 %v4527, %v4594
        %v4596 = vpop.f32.mrb[0].mxu0
        %4597 = vdwg.mxu0
        %4598 = vst [vmem:[%s485] sm:$0x1] %v4595
        %p4599 = scmp.lt.s32.totalorder %s32, 1
        %s4600 = scalar_select %p4599, %s32, 1
        %s4601 = smul.addr %s4600, 32
        %s4602 = smul.addr %s4601, 8
        %s4603 = scalar_lea.vmem %s11, %s4602
        %s4604 = sand.u32 %s302, 1
        %s4605 = scalar_lea.sflag [#allocation7], %s4604
        %s4606 = sand.u32 %s302, 1
        %s4607 = smul.addr %s4606, 64
        %s4608 = scalar_lea.vmem [#allocation6], %s4607
        %s4609 = sand.u32 %s32, 1
        %s4610 = scalar_lea.sflag [#allocation9], %s4609
        %s4611 = sand.u32 %s328, 1
        %s4612 = smul.addr %s4611, 64
        %s4613 = scalar_lea.vmem [#allocation8], %s4612
        %s4614 = sand.u32 %s32, 1
        %s4615 = scalar_lea.sflag [#allocation9], %s4614
        %s4616 = sand.u32 %s354, 1
        %s4617 = scalar_lea.vmem [#allocation10], %s4616
        // Predicated region
        $region65: #{vgg_forward.1} parent=63 // pred_check
          %p4618 = pneg %p286
        $region66: #{vgg_forward.1} parent=63 // pred_check_branch
          %4620 = sbr.rel (%p4618) target = $region68
        $region67: #{vgg_forward.1} parent=63 // pred_region
          _
        $region68: #{vgg_forward.1} parent=63 // pred_fallthru
          _
        // Predicated region
        $region69: #{vgg_forward.1} parent=63 // pred_check
          %p4621 = pneg %p312
        $region70: #{vgg_forward.1} parent=63 // pred_check_branch
          %4623 = sbr.rel (%p4621) target = $region72
        $region71: #{vgg_forward.1} parent=63 // pred_region
          %s4625 = ssub.s32 1024, 1024
          %4626 = vsyncadd %s4605, %s4625
          %s4627 = smul.addr %s32, 8
          %s4628 = smul.addr %s4627, 128
          %s4629 = scalar_lea.hbm %s12, %s4628
          %s4630 = sshll.u32 %s4608, 4
          %s4631 = int_to_ptr.vmem [resolvable:$true] %s4630
          %4636 = dma.vmem_to_hbm [thread:$0]  %s4631, 1024, %s4629, %s4605, 128, 128, 8
        $region72: #{vgg_forward.1} parent=63 // pred_fallthru
          _
        // Predicated region
        $region73: #{vgg_forward.1} parent=63 // pred_check
          %p4637 = pneg %p338
        $region74: #{vgg_forward.1} parent=63 // pred_check_branch
          %4639 = sbr.rel (%p4637) target = $region76
        $region75: #{vgg_forward.1} parent=63 // pred_region
          %s4641 = ssub.s32 1024, 1024
          %4642 = vsyncadd %s4610, %s4641
          %s4643 = smul.addr %s32, 8
          %s4644 = smul.addr %s4643, 128
          %s4645 = scalar_lea.hbm %s13, %s4644
          %s4646 = sshll.u32 %s4613, 4
          %s4647 = int_to_ptr.vmem [resolvable:$true] %s4646
          %4652 = dma.vmem_to_hbm [thread:$0]  %s4647, 1024, %s4645, %s4610, 128, 128, 8
        $region76: #{vgg_forward.1} parent=63 // pred_fallthru
          _
        // Predicated region
        $region77: #{vgg_forward.1} parent=63 // pred_check
          %p4653 = pneg %p364
        $region78: #{vgg_forward.1} parent=63 // pred_check_branch
          %4655 = sbr.rel (%p4653) target = $region80
        $region79: #{vgg_forward.1} parent=63 // pred_region
          %s4657 = ssub.s32 16, 16
          %4658 = vsyncadd %s4615, %s4657
          %s4659 = smul.addr %s32, 16
          %s4660 = scalar_lea.hbm %s14, %s4659
          %s4662 = sshll.u32 %s4617, 4
          %s4663 = int_to_ptr.vmem [resolvable:$true] %s4662
          %4665 = dma.vmem_to_hbm [thread:$0]  %s4663, 16, %s4660, %s4615
        $region80: #{vgg_forward.1} parent=63 // pred_fallthru
          _
      $region64: #{vgg_forward.1} parent=5 // pred_fallthru
        _
      %p4666 = scmp.le.s32.totalorder 2, %s27
      // Predicated region
      $region81: #{vgg_forward.1} parent=5 // pred_check
        %p4667 = pneg %p4666
      $region82: #{vgg_forward.1} parent=5 // pred_check_branch
        %4669 = sbr.rel (%p4667) target = $region84
      $region83: #{vgg_forward.1} parent=5 // pred_region
        %s4670 = ssub.s32 %s27, 2
        // Predicated region
        $region85: #{vgg_forward.1} parent=83 // pred_check
          %p4671 = pneg %p292
        $region86: #{vgg_forward.1} parent=83 // pred_check_branch
          %4673 = sbr.rel (%p4671) target = $region88
        $region87: #{vgg_forward.1} parent=83 // pred_region
          %p4674 = scmp.lt.s32.totalorder %s33, 1
          %s4675 = scalar_select %p4674, %s33, 1
          %s4676 = smul.addr %s4675, 32
          %s4677 = smul.addr %s4676, 8
          %s4678 = scalar_lea.vmem %s11, %s4677
        $region88: #{vgg_forward.1} parent=83 // pred_fallthru
          _
        // Predicated region
        $region89: #{vgg_forward.1} parent=83 // pred_check
          %p4679 = pneg %p318
        $region90: #{vgg_forward.1} parent=83 // pred_check_branch
          %4681 = sbr.rel (%p4679) target = $region92
        $region91: #{vgg_forward.1} parent=83 // pred_region
          %s4682 = sand.u32 %s303, 1
          %s4683 = scalar_lea.sflag [#allocation7], %s4682
          %s4684 = sand.u32 %s303, 1
          %s4685 = smul.addr %s4684, 64
          %s4686 = scalar_lea.vmem [#allocation6], %s4685
          %4687 = dma.done %s4683, 1024
        $region92: #{vgg_forward.1} parent=83 // pred_fallthru
          _
        // Predicated region
        $region93: #{vgg_forward.1} parent=83 // pred_check
          %p4688 = pneg %p344
        $region94: #{vgg_forward.1} parent=83 // pred_check_branch
          %4690 = sbr.rel (%p4688) target = $region96
        $region95: #{vgg_forward.1} parent=83 // pred_region
          %s4691 = sand.u32 %s33, 1
          %s4692 = scalar_lea.sflag [#allocation9], %s4691
          %s4693 = sand.u32 %s329, 1
          %s4694 = smul.addr %s4693, 64
          %s4695 = scalar_lea.vmem [#allocation8], %s4694
          %4696 = dma.done %s4692, 1024
        $region96: #{vgg_forward.1} parent=83 // pred_fallthru
          _
        // Predicated region
        $region97: #{vgg_forward.1} parent=83 // pred_check
          %p4697 = pneg %p370
        $region98: #{vgg_forward.1} parent=83 // pred_check_branch
          %4699 = sbr.rel (%p4697) target = $region100
        $region99: #{vgg_forward.1} parent=83 // pred_region
          %s4700 = sand.u32 %s33, 1
          %s4701 = scalar_lea.sflag [#allocation9], %s4700
          %s4702 = sand.u32 %s355, 1
          %s4703 = scalar_lea.vmem [#allocation10], %s4702
          %4704 = dma.done %s4701, 16
        $region100: #{vgg_forward.1} parent=83 // pred_fallthru
          _
      $region84: #{vgg_forward.1} parent=5 // pred_fallthru
        _
    $region6: #{vgg_forward.1} parent=1 // loop_footer
      %s31 = sadd.s32 1, %s27
    $region7: #{vgg_forward.1} parent=1 // loop_footer_branch
      %26 = sbr.rel target = $region3
    $region8: #{vgg_forward.1} parent=1 // loop_exit
      _
    %4705 = vsyncpa [#allocation7], 1
    %s4706 = scalar_lea.sflag [#allocation7], 1
    %4707 = vsyncpa %s4706, 1
    %4708 = vsyncpa [#allocation9], 1
    %s4709 = scalar_lea.sflag [#allocation9], 1
    %4710 = vsyncpa %s4709, 1

</llo_original>
